<compile_context>
chip_gen: v7x
topology: tpu7x:2x2x1
jax: 0.10.0
libtpu: 0.0.40
codegen_flags: <defaults>
</compile_context>

<pallas_src>
import functools

import jax
import jax.numpy as jnp
from jax.experimental import pallas as pl
from jax.experimental.pallas import tpu as pltpu


# --------------------------------------------------------------------------- #
# In-kernel helpers
# --------------------------------------------------------------------------- #
def _layernorm_f32(x, w, b, eps=1e-5):
    """LayerNorm with statistics in f32 (x may be bf16); returns f32."""
    xf = x.astype(jnp.float32)
    mu = jnp.mean(xf, axis=-1, keepdims=True)
    var = jnp.mean(jnp.square(xf - mu), axis=-1, keepdims=True)
    y = (xf - mu) * jax.lax.rsqrt(var + eps)
    return y * w.astype(jnp.float32) + b.astype(jnp.float32)


def _vmem_budget_bytes():
    """Generation-aware usable-VMEM budget (leave compiler headroom)."""
    cap = 64 * 2 ** 20
    try:
        cap = int(pltpu.get_tpu_info().vmem_capacity_bytes)
    except Exception:
        pass
    return max(32 * 2 ** 20, (cap * 3) // 4)   # ~48 MiB on v7x, ~96 MiB on v5e/v6e


# --------------------------------------------------------------------------- #
# Fused transformer stack + final LayerNorm
#   grid = (B // Bt, depth); residual stream persists in an f32 VMEM scratch
#   across the depth axis; bf16 output written only at the last layer.
# --------------------------------------------------------------------------- #
def stack_block_kernel(h_ref, mask_ref, ln1w_ref, ln1b_ref, wqkv_ref, bqkv_ref,
                       wproj_ref, bproj_ref, ln2w_ref, ln2b_ref,
                       wfc_ref, bfc_ref, wfc2_ref, bfc2_ref,
                       lnfw_ref, lnfb_ref,
                       o_ref, res_ref, *, n_head):
    layer = pl.program_id(1)
    n_layer = pl.num_programs(1)
    Bt, S, D = h_ref.shape
    M = Bt * S
    hd = D // n_head

    @pl.when(layer == 0)
    def _():
        # Load the residual stream once per batch block, keep it f32 in VMEM.
        res_ref[...] = h_ref[...].reshape(M, D).astype(jnp.float32)

    h = res_ref[...]                                      # (M, D) f32

    # ---- causal self-attention ----------------------------------------------
    x1 = _layernorm_f32(h, ln1w_ref[0], ln1b_ref[0]).astype(jnp.bfloat16)
    qkv = (jnp.dot(x1, wqkv_ref[0], preferred_element_type=jnp.float32)
           + bqkv_ref[0].astype(jnp.float32)).astype(jnp.bfloat16)   # (M, 3D)
    qkv3 = qkv.reshape(Bt, S, 3 * D)                      # row-dim split only

    def heads(off):   # -> (Bt*n_head, S, hd), sample-major then head
        return jnp.stack(
            [qkv3[b, :, off + i * hd: off + (i + 1) * hd]
             for b in range(Bt) for i in range(n_head)], axis=0)

    q = heads(0) * (hd ** -0.5)          # softmax scale applied in-kernel
    k = heads(D)
    v = heads(2 * D)

    att = jnp.einsum('hqd,hkd->hqk', q, k,
                     preferred_element_type=jnp.float32)  # (Bt*nh, S, S)
    att = att + mask_ref[...][None]      # hoisted additive causal bias
    att = att - jnp.max(att, axis=-1, keepdims=True)
    p = jnp.exp(att)                                      # unnormalized probs
    inv_denom = pl.reciprocal(jnp.sum(p, axis=-1, keepdims=True), approx=False)
    ctx = jnp.einsum('hqk,hkd->hqd', p.astype(jnp.bfloat16), v,
                     preferred_element_type=jnp.float32)  # (Bt*nh, S, hd)
    ctx = ctx * inv_denom                # deferred softmax normalization

    y = jnp.stack(
        [jnp.concatenate([ctx[b * n_head + i] for i in range(n_head)], axis=-1)
         for b in range(Bt)], axis=0).reshape(M, D)       # (M, D) f32
    y = (jnp.dot(y.astype(jnp.bfloat16), wproj_ref[0],
                 preferred_element_type=jnp.float32)
         + bproj_ref[0].astype(jnp.float32))
    h = h + y

    # ---- MLP -----------------------------------------------------------------
    x2 = _layernorm_f32(h, ln2w_ref[0], ln2b_ref[0]).astype(jnp.bfloat16)
    m = (jnp.dot(x2, wfc_ref[0], preferred_element_type=jnp.float32)
         + bfc_ref[0].astype(jnp.float32))
    # TODO(synk): PyTorch nn.GELU() default is exact erf; Block impl not given
    # in the spec, so the tanh approximation is used here.
    m = jax.nn.gelu(m, approximate=True).astype(jnp.bfloat16)
    m = (jnp.dot(m, wfc2_ref[0], preferred_element_type=jnp.float32)
         + bfc2_ref[0].astype(jnp.float32))
    h = h + m

    res_ref[...] = h                     # residual stays f32 across layers

    @pl.when(layer == n_layer - 1)
    def _():
        # Final decoder LayerNorm fused into the last-layer writeback.
        y_out = _layernorm_f32(h, lnfw_ref[...], lnfb_ref[...])
        o_ref[...] = y_out.reshape(Bt, S, D).astype(o_ref.dtype)


# --------------------------------------------------------------------------- #
# Tied lm_head: hidden (B*T, D) resident, grid only over vocab tiles
# --------------------------------------------------------------------------- #
def head_kernel(h_ref, wte_ref, o_ref):
    # x: (M, D) @ wte_tile^T: (tile_v, D) -> (M, tile_v).  Contracting both on
    # the last dim is the trans_b MXU feed; no transpose of the tied embedding.
    o_ref[...] = jax.lax.dot_general(
        h_ref[...], wte_ref[...], (((1,), (1,)), ((), ())),
        preferred_element_type=jnp.float32)


# --------------------------------------------------------------------------- #
# VMEM estimates and block-size heuristics
# --------------------------------------------------------------------------- #
def _stack_vmem_estimate(Bt, S, D, H, n_head):
    bf, f32 = 2, 4
    w_layer = ((D * 3 * D + D * D + D * H + H * D) * bf        # matmul weights
               + (3 * D + D + H + D) * bf                      # biases
               + 4 * D * f32)                                  # LN params
    hid_io = 2 * 2 * (Bt * S * D * bf)                         # in/out, 2-buffered
    resid = Bt * S * D * f32                                   # residual scratch
    act = (Bt * S * 3 * D * (f32 + bf)                         # qkv f32 + bf16
           + 3 * Bt * S * D * bf                               # q/k/v head copies
           + 2 * Bt * n_head * S * S * f32                     # scores + probs
           + Bt * S * D * f32                                  # ctx
           + Bt * S * H * (f32 + bf)                           # mlp hidden
           + 2 * Bt * S * D * f32)                             # LN temps
    return 2 * w_layer + hid_io + resid + int(1.25 * act) + S * S * f32


def _pick_batch_block(B, S, D, H, n_head, budget):
    # Largest divisor of B whose stack working set fits the VMEM budget.
    # (Capped at 8 to bound the unrolled per-sample attention loop.)
    for bt in sorted((d for d in range(1, B + 1) if B % d == 0), reverse=True):
        if bt <= 8 and _stack_vmem_estimate(bt, S, D, H, n_head) <= budget:
            return bt
    return 1


def _pick_vocab_tile(V, M, D, budget):
    bf, f32 = 2, 4
    cands = [c for c in range(2048, 0, -128) if V % c == 0] or [V]
    for c in cands:
        est = 2 * M * D * bf + 2 * c * D * bf + 2 * M * c * f32 + (1 << 20)
        if est <= budget:
            return c
    return cands[-1]


# --------------------------------------------------------------------------- #
# pallas_call wrappers
# --------------------------------------------------------------------------- #
def run_stack(hidden, mask, stacked, lnf_w, lnf_b, *, n_head):
    B, S, D = hidden.shape
    depth = stacked["w_qkv"].shape[0]
    H = stacked["w_fc"].shape[-1]

    budget = _vmem_budget_bytes()
    Bt = _pick_batch_block(B, S, D, H, n_head, budget)
    grid = (B // Bt, depth)

    def wspec(per_layer_shape):
        nd = len(per_layer_shape)
        return pl.BlockSpec((1,) + tuple(per_layer_shape),
                            lambda b, l, _n=nd: (l,) + (0,) * _n)

    hid_spec = pl.BlockSpec((Bt, S, D), lambda b, l: (b, 0, 0))
    const2 = lambda b, l: (0, 0)

    return pl.pallas_call(
        functools.partial(stack_block_kernel, n_head=n_head),
        out_shape=jax.ShapeDtypeStruct((B, S, D), hidden.dtype),
        grid=grid,
        in_specs=[
            hid_spec,                                   # hidden (per batch block)
            pl.BlockSpec((S, S), const2),               # hoisted causal bias
            wspec((1, D)), wspec((1, D)),               # ln1 w, b
            wspec((D, 3 * D)), wspec((1, 3 * D)),       # qkv
            wspec((D, D)), wspec((1, D)),               # attn proj
            wspec((1, D)), wspec((1, D)),               # ln2 w, b
            wspec((D, H)), wspec((1, H)),               # mlp fc
            wspec((H, D)), wspec((1, D)),               # mlp proj
            pl.BlockSpec((1, D), const2),               # ln_f w
            pl.BlockSpec((1, D), const2),               # ln_f b
        ],
        out_specs=hid_spec,                             # written at last layer only
        scratch_shapes=[pltpu.VMEM((Bt * S, D), jnp.float32)],   # f32 residual
        compiler_params=pltpu.CompilerParams(
            dimension_semantics=("parallel", "arbitrary"),
            vmem_limit_bytes=budget,
        ),
    )(hidden, mask,
      stacked["ln1_w"], stacked["ln1_b"],
      stacked["w_qkv"], stacked["b_qkv"],
      stacked["w_proj"], stacked["b_proj"],
      stacked["ln2_w"], stacked["ln2_b"],
      stacked["w_fc"], stacked["b_fc"],
      stacked["w_fc2"], stacked["b_fc2"],
      lnf_w, lnf_b)


def run_head(h_flat, wte):
    M, D = h_flat.shape
    V = wte.shape[0]
    budget = _vmem_budget_bytes()
    tile_v = _pick_vocab_tile(V, M, D, budget)
    return pl.pallas_call(
        head_kernel,
        out_shape=jax.ShapeDtypeStruct((M, V), jnp.float32),
        grid=(V // tile_v,),
        in_specs=[
            pl.BlockSpec((M, D), lambda j: (0, 0)),        # hidden resident
            pl.BlockSpec((tile_v, D), lambda j: (j, 0)),   # stream wte tiles once
        ],
        out_specs=pl.BlockSpec((M, tile_v), lambda j: (0, j)),
        compiler_params=pltpu.CompilerParams(
            dimension_semantics=("parallel",),
            vmem_limit_bytes=budget,
        ),
    )(h_flat, wte)


# --------------------------------------------------------------------------- #
# Parameter init (mimics the PyTorch _init_weights; weights stored bf16)
# --------------------------------------------------------------------------- #
def init_params(key, *, vocab_size, block_size, input_dim, D, depth, mlp_ratio,
                n_head, dtype=jnp.bfloat16):
    H = int(mlp_ratio * D)
    std = 0.02
    std_scaled = std * (2 * depth) ** (-0.5)
    ks = jax.random.split(key, 7)

    def nrm(k, shape, s):
        return (s * jax.random.normal(k, shape, jnp.float32)).astype(dtype)

    return {
        # tied embedding / lm_head weight: (V, D) — consumed untransposed.
        "wte": nrm(ks[0], (vocab_size, D), std),
        "wpe": nrm(ks[1], (block_size + 1, D), std),
        # idea_proj: Linear(input_dim, D, bias=False), SCALE_INIT (Identity if equal dims)
        "w_idea": nrm(ks[2], (input_dim, D), std_scaled) if input_dim != D else None,
        "ln_f_w": jnp.ones((1, D), jnp.float32),
        "ln_f_b": jnp.zeros((1, D), jnp.float32),
        # per-layer weights stacked along a leading depth axis (streamed by BlockSpec)
        "stack": {
            "ln1_w": jnp.ones((depth, 1, D), jnp.float32),
            "ln1_b": jnp.zeros((depth, 1, D), jnp.float32),
            "w_qkv": nrm(ks[3], (depth, D, 3 * D), std),
            "b_qkv": jnp.zeros((depth, 1, 3 * D), dtype),
            "w_proj": nrm(ks[4], (depth, D, D), std_scaled),
            "b_proj": jnp.zeros((depth, 1, D), dtype),
            "ln2_w": jnp.ones((depth, 1, D), jnp.float32),
            "ln2_b": jnp.zeros((depth, 1, D), jnp.float32),
            "w_fc": nrm(ks[5], (depth, D, H), std),
            "b_fc": jnp.zeros((depth, 1, H), dtype),
            "w_fc2": nrm(ks[6], (depth, H, D), std_scaled),
            "b_fc2": jnp.zeros((depth, 1, D), dtype),
        },
    }


# --------------------------------------------------------------------------- #
# Forward (glue in plain JAX, heavy compute in Pallas)
# --------------------------------------------------------------------------- #
def idea_decoder_forward(params, x, idea_vec, *, n_head):
    B, T = x.shape
    cdtype = params["wte"].dtype
    D = params["wte"].shape[1]

    # idea_proj: tiny (B, in) @ (in, D) — plain JAX (Identity when dims match).
    if params["w_idea"] is not None:
        idea = jnp.dot(idea_vec.astype(cdtype), params["w_idea"],
                       preferred_element_type=jnp.float32).astype(cdtype)
    else:
        idea = idea_vec.astype(cdtype)

    tok_emb = jnp.take(params["wte"], x, axis=0)                           # (B, T, D)
    pos_emb = params["wpe"][:T]                                            # (T, D)
    # idea token gets no positional embedding, matching the reference forward.
    hidden = jnp.concatenate(
        [idea[:, None, :], tok_emb + pos_emb[None]], axis=1)               # (B, T+1, D)
    S = T + 1

    # Hoisted additive causal bias (built once; constant index_map in the stack).
    row = jax.lax.broadcasted_iota(jnp.int32, (S, S), 0)
    col = jax.lax.broadcasted_iota(jnp.int32, (S, S), 1)
    mask = jnp.where(row >= col, 0.0, -1e30).astype(jnp.float32)

    # Transformer stack + fused final LayerNorm.
    hidden = run_stack(hidden, mask, params["stack"],
                       params["ln_f_w"], params["ln_f_b"], n_head=n_head)  # (B, T+1, D)

    # Drop idea token, flatten batch*time so wte is streamed exactly once.
    h_flat = hidden[:, 1:, :].reshape(B * T, D)
    logits = run_head(h_flat, params["wte"])                               # (B*T, V)
    return logits.reshape(B, T, -1)


# --------------------------------------------------------------------------- #
if __name__ == "__main__":
    # Small config consistent with the module (input_dim != D so idea_proj is
    # exercised; D lane-dense at 128, head_dim = 128/4 = 32, S = T+1 = 16).
    BLOCK_SIZE = 15       # T
    VOCAB = 512
    INPUT_DIM = 96
    D = 128
    DEPTH = 2
    N_HEAD = 4
    MLP_RATIO = 4.0
    B = 2

    key = jax.random.PRNGKey(0)
    k_params, k_x, k_idea = jax.random.split(key, 3)

    params = init_params(k_params, vocab_size=VOCAB, block_size=BLOCK_SIZE,
                         input_dim=INPUT_DIM, D=D, depth=DEPTH,
                         mlp_ratio=MLP_RATIO, n_head=N_HEAD)

    x = jax.random.randint(k_x, (B, BLOCK_SIZE), 0, VOCAB, dtype=jnp.int32)
    idea_vec = jax.random.normal(k_idea, (B, INPUT_DIM), jnp.float32)

    fwd = jax.jit(functools.partial(idea_decoder_forward, n_head=N_HEAD))
    logits = fwd(params, x, idea_vec)
    jax.block_until_ready(logits)

    assert logits.shape == (B, BLOCK_SIZE, VOCAB), logits.shape
    assert bool(jnp.all(jnp.isfinite(logits)))
    print("KERNEL_OK")
</pallas_src>

<mosaic_0001>
module attributes {stable_mosaic.version = 11 : i64} {
  func.func @head_kernel(%arg0: i32, %arg1: memref<30x128xbf16, #tpu.memory_space<vmem>>, %arg2: memref<512x128xbf16, #tpu.memory_space<vmem>>, %arg3: memref<30x512xf32, #tpu.memory_space<vmem>>) attributes {dimension_semantics = [#tpu.dimension_semantics<parallel>], iteration_bounds = array<i64: 1>, scalar_prefetch = 0 : i64, scratch_operands = 0 : i64, tpu.core_type = #tpu.core_type<tc>, window_params = [{pipeline_mode = #tpu.pipeline_mode<synchronous>, transform_indices = @transform_0, window_bounds = array<i64: 30, 128>}, {transform_indices = @transform_1, window_bounds = array<i64: 512, 128>}, {transform_indices = @transform_2, window_bounds = array<i64: 30, 512>}]} {
    %c0 = arith.constant 0 : index
    %c0_0 = arith.constant 0 : index
    %0 = vector.load %arg1[%c0, %c0_0] : memref<30x128xbf16, #tpu.memory_space<vmem>>, vector<30x128xbf16>
    %c0_1 = arith.constant 0 : index
    %c0_2 = arith.constant 0 : index
    %1 = vector.load %arg2[%c0_1, %c0_2] : memref<512x128xbf16, #tpu.memory_space<vmem>>, vector<512x128xbf16>
    %cst = arith.constant dense<0.000000e+00> : vector<30x512xf32>
    %2 = tpu.matmul %0, %1, %cst {dimension_numbers = #tpu.dot_dimension_numbers<[1], [1], [0], [0], [0, 0, 1, 0], [], []>} : vector<30x128xbf16>, vector<512x128xbf16>, vector<30x512xf32> -> vector<30x512xf32>
    %c0_3 = arith.constant 0 : index
    %c0_4 = arith.constant 0 : index
    %3 = vector.load %arg3[%c0_3, %c0_4] : memref<30x512xf32, #tpu.memory_space<vmem>>, vector<30x512xf32>
    tpu.vector_store %arg3[%c0_3, %c0_4], %2 {strides = array<i32>} : memref<30x512xf32, #tpu.memory_space<vmem>>, vector<30x512xf32>,
    return
  }
  func.func @transform_0(%arg0: i32) -> (i32, i32) {
    %c0_i32 = arith.constant 0 : i32
    %c0_i32_0 = arith.constant 0 : i32
    %c0_i32_1 = arith.constant 0 : i32
    return %c0_i32, %c0_i32_0 : i32, i32
  }
  func.func @transform_1(%arg0: i32) -> (i32, i32) {
    %c0_i32 = arith.constant 0 : i32
    %c0_i32_0 = arith.constant 0 : i32
    return %arg0, %c0_i32 : i32, i32
  }
  func.func @transform_2(%arg0: i32) -> (i32, i32) {
    %c0_i32 = arith.constant 0 : i32
    %c0_i32_0 = arith.constant 0 : i32
    return %c0_i32, %arg0 : i32, i32
  }
}

module attributes {stable_mosaic.version = 11 : i64} {
  func.func @stack_block_kernel(%arg0: i32, %arg1: i32, %arg2: memref<2x16x128xbf16, #tpu.memory_space<vmem>>, %arg3: memref<16x16xf32, #tpu.memory_space<vmem>>, %arg4: memref<1x1x128xf32, #tpu.memory_space<vmem>>, %arg5: memref<1x1x128xf32, #tpu.memory_space<vmem>>, %arg6: memref<1x128x384xbf16, #tpu.memory_space<vmem>>, %arg7: memref<1x1x384xbf16, #tpu.memory_space<vmem>>, %arg8: memref<1x128x128xbf16, #tpu.memory_space<vmem>>, %arg9: memref<1x1x128xbf16, #tpu.memory_space<vmem>>, %arg10: memref<1x1x128xf32, #tpu.memory_space<vmem>>, %arg11: memref<1x1x128xf32, #tpu.memory_space<vmem>>, %arg12: memref<1x128x512xbf16, #tpu.memory_space<vmem>>, %arg13: memref<1x1x512xbf16, #tpu.memory_space<vmem>>, %arg14: memref<1x512x128xbf16, #tpu.memory_space<vmem>>, %arg15: memref<1x1x128xbf16, #tpu.memory_space<vmem>>, %arg16: memref<1x128xf32, #tpu.memory_space<vmem>>, %arg17: memref<1x128xf32, #tpu.memory_space<vmem>>, %arg18: memref<2x16x128xbf16, #tpu.memory_space<vmem>>, %arg19: memref<32x128xf32, #tpu.memory_space<vmem>>) attributes {dimension_semantics = [#tpu.dimension_semantics<parallel>, #tpu.dimension_semantics<arbitrary>], iteration_bounds = array<i64: 1, 2>, scalar_prefetch = 0 : i64, scratch_operands = 1 : i64, tpu.core_type = #tpu.core_type<tc>, window_params = [{transform_indices = @transform_0, window_bounds = array<i64: 2, 16, 128>}, {pipeline_mode = #tpu.pipeline_mode<synchronous>, transform_indices = @transform_1, window_bounds = array<i64: 16, 16>}, {transform_indices = @transform_2, window_bounds = array<i64: 1, 1, 128>}, {transform_indices = @transform_3, window_bounds = array<i64: 1, 1, 128>}, {transform_indices = @transform_4, window_bounds = array<i64: 1, 128, 384>}, {transform_indices = @transform_5, window_bounds = array<i64: 1, 1, 384>}, {transform_indices = @transform_6, window_bounds = array<i64: 1, 128, 128>}, {transform_indices = @transform_7, window_bounds = array<i64: 1, 1, 128>}, {transform_indices = @transform_8, window_bounds = array<i64: 1, 1, 128>}, {transform_indices = @transform_9, window_bounds = array<i64: 1, 1, 128>}, {transform_indices = @transform_10, window_bounds = array<i64: 1, 128, 512>}, {transform_indices = @transform_11, window_bounds = array<i64: 1, 1, 512>}, {transform_indices = @transform_12, window_bounds = array<i64: 1, 512, 128>}, {transform_indices = @transform_13, window_bounds = array<i64: 1, 1, 128>}, {pipeline_mode = #tpu.pipeline_mode<synchronous>, transform_indices = @transform_14, window_bounds = array<i64: 1, 128>}, {pipeline_mode = #tpu.pipeline_mode<synchronous>, transform_indices = @transform_15, window_bounds = array<i64: 1, 128>}, {transform_indices = @transform_16, window_bounds = array<i64: 2, 16, 128>}]} {
    %c0_i32 = arith.constant 0 : i32
    %0 = arith.cmpi eq, %arg1, %c0_i32 : i32
    %1 = arith.extui %0 : i1 to i32
    %c0_i32_0 = arith.constant 0 : i32
    %2 = arith.cmpi ne, %1, %c0_i32_0 : i32
    scf.if %2 {
      %c0_65 = arith.constant 0 : index
      %c0_66 = arith.constant 0 : index
      %c0_67 = arith.constant 0 : index
      %229 = vector.load %arg2[%c0_65, %c0_66, %c0_67] : memref<2x16x128xbf16, #tpu.memory_space<vmem>>, vector<2x16x128xbf16>
      %230 = vector.shape_cast %229 : vector<2x16x128xbf16> to vector<32x128xbf16>
      %231 = arith.extf %230 : vector<32x128xbf16> to vector<32x128xf32>
      %c0_68 = arith.constant 0 : index
      %c0_69 = arith.constant 0 : index
      %232 = vector.load %arg19[%c0_68, %c0_69] : memref<32x128xf32, #tpu.memory_space<vmem>>, vector<32x128xf32>
      tpu.vector_store %arg19[%c0_68, %c0_69], %231 {strides = array<i32>} : memref<32x128xf32, #tpu.memory_space<vmem>>, vector<32x128xf32>,
    } else {
    }
    %c0 = arith.constant 0 : index
    %c0_1 = arith.constant 0 : index
    %3 = vector.load %arg19[%c0, %c0_1] : memref<32x128xf32, #tpu.memory_space<vmem>>, vector<32x128xf32>
    %c0_2 = arith.constant 0 : index
    %c0_3 = arith.constant 0 : index
    %c0_4 = arith.constant 0 : index
    %4 = vector.load %arg4[%c0_2, %c0_3, %c0_4] : memref<1x1x128xf32, #tpu.memory_space<vmem>>, vector<1x1x128xf32>
    %5 = vector.shape_cast %4 : vector<1x1x128xf32> to vector<1x128xf32>
    %c0_5 = arith.constant 0 : index
    %c0_6 = arith.constant 0 : index
    %c0_7 = arith.constant 0 : index
    %6 = vector.load %arg5[%c0_5, %c0_6, %c0_7] : memref<1x1x128xf32, #tpu.memory_space<vmem>>, vector<1x1x128xf32>
    %7 = vector.shape_cast %6 : vector<1x1x128xf32> to vector<1x128xf32>
    %cst = arith.constant dense<0.000000e+00> : vector<32xf32>
    %8 = vector.multi_reduction <add>, %3, %cst [1] : vector<32x128xf32> to vector<32xf32>
    %9 = vector.shape_cast %8 : vector<32xf32> to vector<32x1xf32>
    %cst_8 = arith.constant 1.280000e+02 : f32
    %10 = vector.broadcast %cst_8 : f32 to vector<32x1xf32>
    %11 = arith.divf %9, %10 : vector<32x1xf32>
    %12 = vector.broadcast %11 : vector<32x1xf32> to vector<32x128xf32>
    %13 = arith.subf %3, %12 : vector<32x128xf32>
    %14 = arith.mulf %13, %13 : vector<32x128xf32>
    %cst_9 = arith.constant dense<0.000000e+00> : vector<32xf32>
    %15 = vector.multi_reduction <add>, %14, %cst_9 [1] : vector<32x128xf32> to vector<32xf32>
    %16 = vector.shape_cast %15 : vector<32xf32> to vector<32x1xf32>
    %cst_10 = arith.constant 1.280000e+02 : f32
    %17 = vector.broadcast %cst_10 : f32 to vector<32x1xf32>
    %18 = arith.divf %16, %17 : vector<32x1xf32>
    %19 = vector.broadcast %11 : vector<32x1xf32> to vector<32x128xf32>
    %20 = arith.subf %3, %19 : vector<32x128xf32>
    %cst_11 = arith.constant 9.99999974E-6 : f32
    %21 = vector.broadcast %cst_11 : f32 to vector<32x1xf32>
    %22 = arith.addf %18, %21 : vector<32x1xf32>
    %23 = math.rsqrt %22 : vector<32x1xf32>
    %24 = vector.broadcast %23 : vector<32x1xf32> to vector<32x128xf32>
    %25 = arith.mulf %20, %24 : vector<32x128xf32>
    %26 = vector.broadcast %5 : vector<1x128xf32> to vector<32x128xf32>
    %27 = arith.mulf %25, %26 : vector<32x128xf32>
    %28 = vector.broadcast %7 : vector<1x128xf32> to vector<32x128xf32>
    %29 = arith.addf %27, %28 : vector<32x128xf32>
    %30 = arith.truncf %29 : vector<32x128xf32> to vector<32x128xbf16>
    %c0_12 = arith.constant 0 : index
    %c0_13 = arith.constant 0 : index
    %c0_14 = arith.constant 0 : index
    %31 = vector.load %arg6[%c0_12, %c0_13, %c0_14] : memref<1x128x384xbf16, #tpu.memory_space<vmem>>, vector<1x128x384xbf16>
    %32 = vector.shape_cast %31 : vector<1x128x384xbf16> to vector<128x384xbf16>
    %cst_15 = arith.constant dense<0.000000e+00> : vector<32x384xf32>
    %33 = tpu.matmul %30, %32, %cst_15 {dimension_numbers = #tpu.dot_dimension_numbers<[1], [0], [0], [1], [0, 0, 1, 1], [], []>} : vector<32x128xbf16>, vector<128x384xbf16>, vector<32x384xf32> -> vector<32x384xf32>
    %c0_16 = arith.constant 0 : index
    %c0_17 = arith.constant 0 : index
    %c0_18 = arith.constant 0 : index
    %34 = vector.load %arg7[%c0_16, %c0_17, %c0_18] : memref<1x1x384xbf16, #tpu.memory_space<vmem>>, vector<1x1x384xbf16>
    %35 = vector.shape_cast %34 : vector<1x1x384xbf16> to vector<1x384xbf16>
    %36 = arith.extf %35 : vector<1x384xbf16> to vector<1x384xf32>
    %37 = vector.broadcast %36 : vector<1x384xf32> to vector<32x384xf32>
    %38 = arith.addf %33, %37 : vector<32x384xf32>
    %39 = arith.truncf %38 : vector<32x384xf32> to vector<32x384xbf16>
    %40 = vector.shape_cast %39 : vector<32x384xbf16> to vector<2x16x384xbf16>
    %41 = vector.extract_strided_slice %40 {offsets = [0, 0, 0], sizes = [1, 16, 32], strides = [1, 1, 1]} : vector<2x16x384xbf16> to vector<1x16x32xbf16>
    %42 = vector.shape_cast %41 : vector<1x16x32xbf16> to vector<16x32xbf16>
    %43 = vector.extract_strided_slice %40 {offsets = [0, 0, 32], sizes = [1, 16, 32], strides = [1, 1, 1]} : vector<2x16x384xbf16> to vector<1x16x32xbf16>
    %44 = vector.shape_cast %43 : vector<1x16x32xbf16> to vector<16x32xbf16>
    %45 = vector.extract_strided_slice %40 {offsets = [0, 0, 64], sizes = [1, 16, 32], strides = [1, 1, 1]} : vector<2x16x384xbf16> to vector<1x16x32xbf16>
    %46 = vector.shape_cast %45 : vector<1x16x32xbf16> to vector<16x32xbf16>
    %47 = vector.extract_strided_slice %40 {offsets = [0, 0, 96], sizes = [1, 16, 32], strides = [1, 1, 1]} : vector<2x16x384xbf16> to vector<1x16x32xbf16>
    %48 = vector.shape_cast %47 : vector<1x16x32xbf16> to vector<16x32xbf16>
    %49 = vector.extract_strided_slice %40 {offsets = [1, 0, 0], sizes = [1, 16, 32], strides = [1, 1, 1]} : vector<2x16x384xbf16> to vector<1x16x32xbf16>
    %50 = vector.shape_cast %49 : vector<1x16x32xbf16> to vector<16x32xbf16>
    %51 = vector.extract_strided_slice %40 {offsets = [1, 0, 32], sizes = [1, 16, 32], strides = [1, 1, 1]} : vector<2x16x384xbf16> to vector<1x16x32xbf16>
    %52 = vector.shape_cast %51 : vector<1x16x32xbf16> to vector<16x32xbf16>
    %53 = vector.extract_strided_slice %40 {offsets = [1, 0, 64], sizes = [1, 16, 32], strides = [1, 1, 1]} : vector<2x16x384xbf16> to vector<1x16x32xbf16>
    %54 = vector.shape_cast %53 : vector<1x16x32xbf16> to vector<16x32xbf16>
    %55 = vector.extract_strided_slice %40 {offsets = [1, 0, 96], sizes = [1, 16, 32], strides = [1, 1, 1]} : vector<2x16x384xbf16> to vector<1x16x32xbf16>
    %56 = vector.shape_cast %55 : vector<1x16x32xbf16> to vector<16x32xbf16>
    %57 = vector.shape_cast %42 : vector<16x32xbf16> to vector<1x16x32xbf16>
    %58 = vector.shape_cast %44 : vector<16x32xbf16> to vector<1x16x32xbf16>
    %59 = vector.shape_cast %46 : vector<16x32xbf16> to vector<1x16x32xbf16>
    %60 = vector.shape_cast %48 : vector<16x32xbf16> to vector<1x16x32xbf16>
    %61 = vector.shape_cast %50 : vector<16x32xbf16> to vector<1x16x32xbf16>
    %62 = vector.shape_cast %52 : vector<16x32xbf16> to vector<1x16x32xbf16>
    %63 = vector.shape_cast %54 : vector<16x32xbf16> to vector<1x16x32xbf16>
    %64 = vector.shape_cast %56 : vector<16x32xbf16> to vector<1x16x32xbf16>
    %65 = tpu.concatenate %57, %58, %59, %60, %61, %62, %63, %64 in 0 : vector<1x16x32xbf16>, vector<1x16x32xbf16>, vector<1x16x32xbf16>, vector<1x16x32xbf16>, vector<1x16x32xbf16>, vector<1x16x32xbf16>, vector<1x16x32xbf16>, vector<1x16x32xbf16> -> vector<8x16x32xbf16>
    %cst_19 = arith.constant 1.767580e-01 : bf16
    %66 = vector.broadcast %cst_19 : bf16 to vector<8x16x32xbf16>
    %67 = arith.mulf %65, %66 : vector<8x16x32xbf16>
    %68 = vector.extract_strided_slice %40 {offsets = [0, 0, 128], sizes = [1, 16, 32], strides = [1, 1, 1]} : vector<2x16x384xbf16> to vector<1x16x32xbf16>
    %69 = vector.shape_cast %68 : vector<1x16x32xbf16> to vector<16x32xbf16>
    %70 = vector.extract_strided_slice %40 {offsets = [0, 0, 160], sizes = [1, 16, 32], strides = [1, 1, 1]} : vector<2x16x384xbf16> to vector<1x16x32xbf16>
    %71 = vector.shape_cast %70 : vector<1x16x32xbf16> to vector<16x32xbf16>
    %72 = vector.extract_strided_slice %40 {offsets = [0, 0, 192], sizes = [1, 16, 32], strides = [1, 1, 1]} : vector<2x16x384xbf16> to vector<1x16x32xbf16>
    %73 = vector.shape_cast %72 : vector<1x16x32xbf16> to vector<16x32xbf16>
    %74 = vector.extract_strided_slice %40 {offsets = [0, 0, 224], sizes = [1, 16, 32], strides = [1, 1, 1]} : vector<2x16x384xbf16> to vector<1x16x32xbf16>
    %75 = vector.shape_cast %74 : vector<1x16x32xbf16> to vector<16x32xbf16>
    %76 = vector.extract_strided_slice %40 {offsets = [1, 0, 128], sizes = [1, 16, 32], strides = [1, 1, 1]} : vector<2x16x384xbf16> to vector<1x16x32xbf16>
    %77 = vector.shape_cast %76 : vector<1x16x32xbf16> to vector<16x32xbf16>
    %78 = vector.extract_strided_slice %40 {offsets = [1, 0, 160], sizes = [1, 16, 32], strides = [1, 1, 1]} : vector<2x16x384xbf16> to vector<1x16x32xbf16>
    %79 = vector.shape_cast %78 : vector<1x16x32xbf16> to vector<16x32xbf16>
    %80 = vector.extract_strided_slice %40 {offsets = [1, 0, 192], sizes = [1, 16, 32], strides = [1, 1, 1]} : vector<2x16x384xbf16> to vector<1x16x32xbf16>
    %81 = vector.shape_cast %80 : vector<1x16x32xbf16> to vector<16x32xbf16>
    %82 = vector.extract_strided_slice %40 {offsets = [1, 0, 224], sizes = [1, 16, 32], strides = [1, 1, 1]} : vector<2x16x384xbf16> to vector<1x16x32xbf16>
    %83 = vector.shape_cast %82 : vector<1x16x32xbf16> to vector<16x32xbf16>
    %84 = vector.shape_cast %69 : vector<16x32xbf16> to vector<1x16x32xbf16>
    %85 = vector.shape_cast %71 : vector<16x32xbf16> to vector<1x16x32xbf16>
    %86 = vector.shape_cast %73 : vector<16x32xbf16> to vector<1x16x32xbf16>
    %87 = vector.shape_cast %75 : vector<16x32xbf16> to vector<1x16x32xbf16>
    %88 = vector.shape_cast %77 : vector<16x32xbf16> to vector<1x16x32xbf16>
    %89 = vector.shape_cast %79 : vector<16x32xbf16> to vector<1x16x32xbf16>
    %90 = vector.shape_cast %81 : vector<16x32xbf16> to vector<1x16x32xbf16>
    %91 = vector.shape_cast %83 : vector<16x32xbf16> to vector<1x16x32xbf16>
    %92 = tpu.concatenate %84, %85, %86, %87, %88, %89, %90, %91 in 0 : vector<1x16x32xbf16>, vector<1x16x32xbf16>, vector<1x16x32xbf16>, vector<1x16x32xbf16>, vector<1x16x32xbf16>, vector<1x16x32xbf16>, vector<1x16x32xbf16>, vector<1x16x32xbf16> -> vector<8x16x32xbf16>
    %93 = vector.extract_strided_slice %40 {offsets = [0, 0, 256], sizes = [1, 16, 32], strides = [1, 1, 1]} : vector<2x16x384xbf16> to vector<1x16x32xbf16>
    %94 = vector.shape_cast %93 : vector<1x16x32xbf16> to vector<16x32xbf16>
    %95 = vector.extract_strided_slice %40 {offsets = [0, 0, 288], sizes = [1, 16, 32], strides = [1, 1, 1]} : vector<2x16x384xbf16> to vector<1x16x32xbf16>
    %96 = vector.shape_cast %95 : vector<1x16x32xbf16> to vector<16x32xbf16>
    %97 = vector.extract_strided_slice %40 {offsets = [0, 0, 320], sizes = [1, 16, 32], strides = [1, 1, 1]} : vector<2x16x384xbf16> to vector<1x16x32xbf16>
    %98 = vector.shape_cast %97 : vector<1x16x32xbf16> to vector<16x32xbf16>
    %99 = vector.extract_strided_slice %40 {offsets = [0, 0, 352], sizes = [1, 16, 32], strides = [1, 1, 1]} : vector<2x16x384xbf16> to vector<1x16x32xbf16>
    %100 = vector.shape_cast %99 : vector<1x16x32xbf16> to vector<16x32xbf16>
    %101 = vector.extract_strided_slice %40 {offsets = [1, 0, 256], sizes = [1, 16, 32], strides = [1, 1, 1]} : vector<2x16x384xbf16> to vector<1x16x32xbf16>
    %102 = vector.shape_cast %101 : vector<1x16x32xbf16> to vector<16x32xbf16>
    %103 = vector.extract_strided_slice %40 {offsets = [1, 0, 288], sizes = [1, 16, 32], strides = [1, 1, 1]} : vector<2x16x384xbf16> to vector<1x16x32xbf16>
    %104 = vector.shape_cast %103 : vector<1x16x32xbf16> to vector<16x32xbf16>
    %105 = vector.extract_strided_slice %40 {offsets = [1, 0, 320], sizes = [1, 16, 32], strides = [1, 1, 1]} : vector<2x16x384xbf16> to vector<1x16x32xbf16>
    %106 = vector.shape_cast %105 : vector<1x16x32xbf16> to vector<16x32xbf16>
    %107 = vector.extract_strided_slice %40 {offsets = [1, 0, 352], sizes = [1, 16, 32], strides = [1, 1, 1]} : vector<2x16x384xbf16> to vector<1x16x32xbf16>
    %108 = vector.shape_cast %107 : vector<1x16x32xbf16> to vector<16x32xbf16>
    %109 = vector.shape_cast %94 : vector<16x32xbf16> to vector<1x16x32xbf16>
    %110 = vector.shape_cast %96 : vector<16x32xbf16> to vector<1x16x32xbf16>
    %111 = vector.shape_cast %98 : vector<16x32xbf16> to vector<1x16x32xbf16>
    %112 = vector.shape_cast %100 : vector<16x32xbf16> to vector<1x16x32xbf16>
    %113 = vector.shape_cast %102 : vector<16x32xbf16> to vector<1x16x32xbf16>
    %114 = vector.shape_cast %104 : vector<16x32xbf16> to vector<1x16x32xbf16>
    %115 = vector.shape_cast %106 : vector<16x32xbf16> to vector<1x16x32xbf16>
    %116 = vector.shape_cast %108 : vector<16x32xbf16> to vector<1x16x32xbf16>
    %117 = tpu.concatenate %109, %110, %111, %112, %113, %114, %115, %116 in 0 : vector<1x16x32xbf16>, vector<1x16x32xbf16>, vector<1x16x32xbf16>, vector<1x16x32xbf16>, vector<1x16x32xbf16>, vector<1x16x32xbf16>, vector<1x16x32xbf16>, vector<1x16x32xbf16> -> vector<8x16x32xbf16>
    "tpu.trace_start"() <{level = 10 : i32, message = "hqd,hkd->hqk"}> : () -> ()
    %cst_20 = arith.constant dense<0.000000e+00> : vector<8x16x16xf32>
    %118 = tpu.matmul %67, %92, %cst_20 {dimension_numbers = #tpu.dot_dimension_numbers<[2], [2], [1], [1], [0, 0, 0, 1, 1, 1], [0], [0]>} : vector<8x16x32xbf16>, vector<8x16x32xbf16>, vector<8x16x16xf32> -> vector<8x16x16xf32>
    "tpu.trace_stop"() : () -> ()
    %c0_21 = arith.constant 0 : index
    %c0_22 = arith.constant 0 : index
    %119 = vector.load %arg3[%c0_21, %c0_22] : memref<16x16xf32, #tpu.memory_space<vmem>>, vector<16x16xf32>
    %120 = vector.shape_cast %119 : vector<16x16xf32> to vector<1x16x16xf32>
    %121 = vector.broadcast %120 : vector<1x16x16xf32> to vector<8x16x16xf32>
    %122 = arith.addf %118, %121 : vector<8x16x16xf32>
    %cst_23 = arith.constant dense<0xFF800000> : vector<8x16xf32>
    %123 = vector.multi_reduction <maximumf>, %122, %cst_23 [2] : vector<8x16x16xf32> to vector<8x16xf32>
    %124 = vector.shape_cast %123 : vector<8x16xf32> to vector<8x16x1xf32>
    %125 = vector.broadcast %124 : vector<8x16x1xf32> to vector<8x16x16xf32>
    %126 = arith.subf %122, %125 : vector<8x16x16xf32>
    %127 = math.exp %126 : vector<8x16x16xf32>
    %cst_24 = arith.constant dense<0.000000e+00> : vector<8x16xf32>
    %128 = vector.multi_reduction <add>, %127, %cst_24 [2] : vector<8x16x16xf32> to vector<8x16xf32>
    %129 = vector.shape_cast %128 : vector<8x16xf32> to vector<8x16x1xf32>
    %130 = tpu.reciprocal %129 : vector<8x16x1xf32> -> vector<8x16x1xf32>
    %131 = arith.truncf %127 : vector<8x16x16xf32> to vector<8x16x16xbf16>
    "tpu.trace_start"() <{level = 10 : i32, message = "hqk,hkd->hqd"}> : () -> ()
    %cst_25 = arith.constant dense<0.000000e+00> : vector<8x16x32xf32>
    %132 = tpu.matmul %131, %117, %cst_25 {dimension_numbers = #tpu.dot_dimension_numbers<[2], [1], [1], [2], [0, 0, 0, 1, 1, 2], [0], [0]>} : vector<8x16x16xbf16>, vector<8x16x32xbf16>, vector<8x16x32xf32> -> vector<8x16x32xf32>
    "tpu.trace_stop"() : () -> ()
    %133 = vector.broadcast %130 : vector<8x16x1xf32> to vector<8x16x32xf32>
    %134 = arith.mulf %132, %133 : vector<8x16x32xf32>
    %135 = vector.extract_strided_slice %134 {offsets = [0, 0, 0], sizes = [1, 16, 32], strides = [1, 1, 1]} : vector<8x16x32xf32> to vector<1x16x32xf32>
    %136 = vector.shape_cast %135 : vector<1x16x32xf32> to vector<16x32xf32>
    %137 = vector.extract_strided_slice %134 {offsets = [1, 0, 0], sizes = [1, 16, 32], strides = [1, 1, 1]} : vector<8x16x32xf32> to vector<1x16x32xf32>
    %138 = vector.shape_cast %137 : vector<1x16x32xf32> to vector<16x32xf32>
    %139 = vector.extract_strided_slice %134 {offsets = [2, 0, 0], sizes = [1, 16, 32], strides = [1, 1, 1]} : vector<8x16x32xf32> to vector<1x16x32xf32>
    %140 = vector.shape_cast %139 : vector<1x16x32xf32> to vector<16x32xf32>
    %141 = vector.extract_strided_slice %134 {offsets = [3, 0, 0], sizes = [1, 16, 32], strides = [1, 1, 1]} : vector<8x16x32xf32> to vector<1x16x32xf32>
    %142 = vector.shape_cast %141 : vector<1x16x32xf32> to vector<16x32xf32>
    %143 = tpu.concatenate %136, %138, %140, %142 in 1 : vector<16x32xf32>, vector<16x32xf32>, vector<16x32xf32>, vector<16x32xf32> -> vector<16x128xf32>
    %144 = vector.extract_strided_slice %134 {offsets = [4, 0, 0], sizes = [1, 16, 32], strides = [1, 1, 1]} : vector<8x16x32xf32> to vector<1x16x32xf32>
    %145 = vector.shape_cast %144 : vector<1x16x32xf32> to vector<16x32xf32>
    %146 = vector.extract_strided_slice %134 {offsets = [5, 0, 0], sizes = [1, 16, 32], strides = [1, 1, 1]} : vector<8x16x32xf32> to vector<1x16x32xf32>
    %147 = vector.shape_cast %146 : vector<1x16x32xf32> to vector<16x32xf32>
    %148 = vector.extract_strided_slice %134 {offsets = [6, 0, 0], sizes = [1, 16, 32], strides = [1, 1, 1]} : vector<8x16x32xf32> to vector<1x16x32xf32>
    %149 = vector.shape_cast %148 : vector<1x16x32xf32> to vector<16x32xf32>
    %150 = vector.extract_strided_slice %134 {offsets = [7, 0, 0], sizes = [1, 16, 32], strides = [1, 1, 1]} : vector<8x16x32xf32> to vector<1x16x32xf32>
    %151 = vector.shape_cast %150 : vector<1x16x32xf32> to vector<16x32xf32>
    %152 = tpu.concatenate %145, %147, %149, %151 in 1 : vector<16x32xf32>, vector<16x32xf32>, vector<16x32xf32>, vector<16x32xf32> -> vector<16x128xf32>
    %153 = vector.shape_cast %143 : vector<16x128xf32> to vector<1x16x128xf32>
    %154 = vector.shape_cast %152 : vector<16x128xf32> to vector<1x16x128xf32>
    %155 = tpu.concatenate %153, %154 in 0 : vector<1x16x128xf32>, vector<1x16x128xf32> -> vector<2x16x128xf32>
    %156 = vector.shape_cast %155 : vector<2x16x128xf32> to vector<32x128xf32>
    %157 = arith.truncf %156 : vector<32x128xf32> to vector<32x128xbf16>
    %c0_26 = arith.constant 0 : index
    %c0_27 = arith.constant 0 : index
    %c0_28 = arith.constant 0 : index
    %158 = vector.load %arg8[%c0_26, %c0_27, %c0_28] : memref<1x128x128xbf16, #tpu.memory_space<vmem>>, vector<1x128x128xbf16>
    %159 = vector.shape_cast %158 : vector<1x128x128xbf16> to vector<128x128xbf16>
    %cst_29 = arith.constant dense<0.000000e+00> : vector<32x128xf32>
    %160 = tpu.matmul %157, %159, %cst_29 {dimension_numbers = #tpu.dot_dimension_numbers<[1], [0], [0], [1], [0, 0, 1, 1], [], []>} : vector<32x128xbf16>, vector<128x128xbf16>, vector<32x128xf32> -> vector<32x128xf32>
    %c0_30 = arith.constant 0 : index
    %c0_31 = arith.constant 0 : index
    %c0_32 = arith.constant 0 : index
    %161 = vector.load %arg9[%c0_30, %c0_31, %c0_32] : memref<1x1x128xbf16, #tpu.memory_space<vmem>>, vector<1x1x128xbf16>
    %162 = vector.shape_cast %161 : vector<1x1x128xbf16> to vector<1x128xbf16>
    %163 = arith.extf %162 : vector<1x128xbf16> to vector<1x128xf32>
    %164 = vector.broadcast %163 : vector<1x128xf32> to vector<32x128xf32>
    %165 = arith.addf %160, %164 : vector<32x128xf32>
    %166 = arith.addf %3, %165 : vector<32x128xf32>
    %c0_33 = arith.constant 0 : index
    %c0_34 = arith.constant 0 : index
    %c0_35 = arith.constant 0 : index
    %167 = vector.load %arg10[%c0_33, %c0_34, %c0_35] : memref<1x1x128xf32, #tpu.memory_space<vmem>>, vector<1x1x128xf32>
    %168 = vector.shape_cast %167 : vector<1x1x128xf32> to vector<1x128xf32>
    %c0_36 = arith.constant 0 : index
    %c0_37 = arith.constant 0 : index
    %c0_38 = arith.constant 0 : index
    %169 = vector.load %arg11[%c0_36, %c0_37, %c0_38] : memref<1x1x128xf32, #tpu.memory_space<vmem>>, vector<1x1x128xf32>
    %170 = vector.shape_cast %169 : vector<1x1x128xf32> to vector<1x128xf32>
    %cst_39 = arith.constant dense<0.000000e+00> : vector<32xf32>
    %171 = vector.multi_reduction <add>, %166, %cst_39 [1] : vector<32x128xf32> to vector<32xf32>
    %172 = vector.shape_cast %171 : vector<32xf32> to vector<32x1xf32>
    %cst_40 = arith.constant 1.280000e+02 : f32
    %173 = vector.broadcast %cst_40 : f32 to vector<32x1xf32>
    %174 = arith.divf %172, %173 : vector<32x1xf32>
    %175 = vector.broadcast %174 : vector<32x1xf32> to vector<32x128xf32>
    %176 = arith.subf %166, %175 : vector<32x128xf32>
    %177 = arith.mulf %176, %176 : vector<32x128xf32>
    %cst_41 = arith.constant dense<0.000000e+00> : vector<32xf32>
    %178 = vector.multi_reduction <add>, %177, %cst_41 [1] : vector<32x128xf32> to vector<32xf32>
    %179 = vector.shape_cast %178 : vector<32xf32> to vector<32x1xf32>
    %cst_42 = arith.constant 1.280000e+02 : f32
    %180 = vector.broadcast %cst_42 : f32 to vector<32x1xf32>
    %181 = arith.divf %179, %180 : vector<32x1xf32>
    %182 = vector.broadcast %174 : vector<32x1xf32> to vector<32x128xf32>
    %183 = arith.subf %166, %182 : vector<32x128xf32>
    %cst_43 = arith.constant 9.99999974E-6 : f32
    %184 = vector.broadcast %cst_43 : f32 to vector<32x1xf32>
    %185 = arith.addf %181, %184 : vector<32x1xf32>
    %186 = math.rsqrt %185 : vector<32x1xf32>
    %187 = vector.broadcast %186 : vector<32x1xf32> to vector<32x128xf32>
    %188 = arith.mulf %183, %187 : vector<32x128xf32>
    %189 = vector.broadcast %168 : vector<1x128xf32> to vector<32x128xf32>
    %190 = arith.mulf %188, %189 : vector<32x128xf32>
    %191 = vector.broadcast %170 : vector<1x128xf32> to vector<32x128xf32>
    %192 = arith.addf %190, %191 : vector<32x128xf32>
    %193 = arith.truncf %192 : vector<32x128xf32> to vector<32x128xbf16>
    %c0_44 = arith.constant 0 : index
    %c0_45 = arith.constant 0 : index
    %c0_46 = arith.constant 0 : index
    %194 = vector.load %arg12[%c0_44, %c0_45, %c0_46] : memref<1x128x512xbf16, #tpu.memory_space<vmem>>, vector<1x128x512xbf16>
    %195 = vector.shape_cast %194 : vector<1x128x512xbf16> to vector<128x512xbf16>
    %cst_47 = arith.constant dense<0.000000e+00> : vector<32x512xf32>
    %196 = tpu.matmul %193, %195, %cst_47 {dimension_numbers = #tpu.dot_dimension_numbers<[1], [0], [0], [1], [0, 0, 1, 1], [], []>} : vector<32x128xbf16>, vector<128x512xbf16>, vector<32x512xf32> -> vector<32x512xf32>
    %c0_48 = arith.constant 0 : index
    %c0_49 = arith.constant 0 : index
    %c0_50 = arith.constant 0 : index
    %197 = vector.load %arg13[%c0_48, %c0_49, %c0_50] : memref<1x1x512xbf16, #tpu.memory_space<vmem>>, vector<1x1x512xbf16>
    %198 = vector.shape_cast %197 : vector<1x1x512xbf16> to vector<1x512xbf16>
    %199 = arith.extf %198 : vector<1x512xbf16> to vector<1x512xf32>
    %200 = vector.broadcast %199 : vector<1x512xf32> to vector<32x512xf32>
    %201 = arith.addf %196, %200 : vector<32x512xf32>
    %202 = arith.mulf %201, %201 : vector<32x512xf32>
    %203 = arith.mulf %201, %202 : vector<32x512xf32>
    %cst_51 = arith.constant 4.471500e-02 : f32
    %204 = vector.broadcast %cst_51 : f32 to vector<32x512xf32>
    %205 = arith.mulf %204, %203 : vector<32x512xf32>
    %206 = arith.addf %201, %205 : vector<32x512xf32>
    %cst_52 = arith.constant 0.797884583 : f32
    %207 = vector.broadcast %cst_52 : f32 to vector<32x512xf32>
    %208 = arith.mulf %207, %206 : vector<32x512xf32>
    %209 = math.tanh %208 : vector<32x512xf32>
    %cst_53 = arith.constant 1.000000e+00 : f32
    %210 = vector.broadcast %cst_53 : f32 to vector<32x512xf32>
    %211 = arith.addf %210, %209 : vector<32x512xf32>
    %cst_54 = arith.constant 5.000000e-01 : f32
    %212 = vector.broadcast %cst_54 : f32 to vector<32x512xf32>
    %213 = arith.mulf %212, %211 : vector<32x512xf32>
    %214 = arith.mulf %201, %213 : vector<32x512xf32>
    %215 = arith.truncf %214 : vector<32x512xf32> to vector<32x512xbf16>
    %c0_55 = arith.constant 0 : index
    %c0_56 = arith.constant 0 : index
    %c0_57 = arith.constant 0 : index
    %216 = vector.load %arg14[%c0_55, %c0_56, %c0_57] : memref<1x512x128xbf16, #tpu.memory_space<vmem>>, vector<1x512x128xbf16>
    %217 = vector.shape_cast %216 : vector<1x512x128xbf16> to vector<512x128xbf16>
    %cst_58 = arith.constant dense<0.000000e+00> : vector<32x128xf32>
    %218 = tpu.matmul %215, %217, %cst_58 {dimension_numbers = #tpu.dot_dimension_numbers<[1], [0], [0], [1], [0, 0, 1, 1], [], []>} : vector<32x512xbf16>, vector<512x128xbf16>, vector<32x128xf32> -> vector<32x128xf32>
    %c0_59 = arith.constant 0 : index
    %c0_60 = arith.constant 0 : index
    %c0_61 = arith.constant 0 : index
    %219 = vector.load %arg15[%c0_59, %c0_60, %c0_61] : memref<1x1x128xbf16, #tpu.memory_space<vmem>>, vector<1x1x128xbf16>
    %220 = vector.shape_cast %219 : vector<1x1x128xbf16> to vector<1x128xbf16>
    %221 = arith.extf %220 : vector<1x128xbf16> to vector<1x128xf32>
    %222 = vector.broadcast %221 : vector<1x128xf32> to vector<32x128xf32>
    %223 = arith.addf %218, %222 : vector<32x128xf32>
    %224 = arith.addf %166, %223 : vector<32x128xf32>
    %c0_62 = arith.constant 0 : index
    %c0_63 = arith.constant 0 : index
    %225 = vector.load %arg19[%c0_62, %c0_63] : memref<32x128xf32, #tpu.memory_space<vmem>>, vector<32x128xf32>
    tpu.vector_store %arg19[%c0_62, %c0_63], %224 {strides = array<i32>} : memref<32x128xf32, #tpu.memory_space<vmem>>, vector<32x128xf32>,
    %c1_i32 = arith.constant 1 : i32
    %226 = arith.cmpi eq, %arg1, %c1_i32 : i32
    %227 = arith.extui %226 : i1 to i32
    %c0_i32_64 = arith.constant 0 : i32
    %228 = arith.cmpi ne, %227, %c0_i32_64 : i32
    scf.if %228 {
      %c0_65 = arith.constant 0 : index
      %c0_66 = arith.constant 0 : index
      %229 = vector.load %arg16[%c0_65, %c0_66] : memref<1x128xf32, #tpu.memory_space<vmem>>, vector<1x128xf32>
      %c0_67 = arith.constant 0 : index
      %c0_68 = arith.constant 0 : index
      %230 = vector.load %arg17[%c0_67, %c0_68] : memref<1x128xf32, #tpu.memory_space<vmem>>, vector<1x128xf32>
      %cst_69 = arith.constant dense<0.000000e+00> : vector<32xf32>
      %231 = vector.multi_reduction <add>, %224, %cst_69 [1] : vector<32x128xf32> to vector<32xf32>
      %232 = vector.shape_cast %231 : vector<32xf32> to vector<32x1xf32>
      %cst_70 = arith.constant 1.280000e+02 : f32
      %233 = vector.broadcast %cst_70 : f32 to vector<32x1xf32>
      %234 = arith.divf %232, %233 : vector<32x1xf32>
      %235 = vector.broadcast %234 : vector<32x1xf32> to vector<32x128xf32>
      %236 = arith.subf %224, %235 : vector<32x128xf32>
      %237 = arith.mulf %236, %236 : vector<32x128xf32>
      %cst_71 = arith.constant dense<0.000000e+00> : vector<32xf32>
      %238 = vector.multi_reduction <add>, %237, %cst_71 [1] : vector<32x128xf32> to vector<32xf32>
      %239 = vector.shape_cast %238 : vector<32xf32> to vector<32x1xf32>
      %cst_72 = arith.constant 1.280000e+02 : f32
      %240 = vector.broadcast %cst_72 : f32 to vector<32x1xf32>
      %241 = arith.divf %239, %240 : vector<32x1xf32>
      %242 = vector.broadcast %234 : vector<32x1xf32> to vector<32x128xf32>
      %243 = arith.subf %224, %242 : vector<32x128xf32>
      %cst_73 = arith.constant 9.99999974E-6 : f32
      %244 = vector.broadcast %cst_73 : f32 to vector<32x1xf32>
      %245 = arith.addf %241, %244 : vector<32x1xf32>
      %246 = math.rsqrt %245 : vector<32x1xf32>
      %247 = vector.broadcast %246 : vector<32x1xf32> to vector<32x128xf32>
      %248 = arith.mulf %243, %247 : vector<32x128xf32>
      %249 = vector.broadcast %229 : vector<1x128xf32> to vector<32x128xf32>
      %250 = arith.mulf %248, %249 : vector<32x128xf32>
      %251 = vector.broadcast %230 : vector<1x128xf32> to vector<32x128xf32>
      %252 = arith.addf %250, %251 : vector<32x128xf32>
      %253 = vector.shape_cast %252 : vector<32x128xf32> to vector<2x16x128xf32>
      %254 = arith.truncf %253 : vector<2x16x128xf32> to vector<2x16x128xbf16>
      %c0_74 = arith.constant 0 : index
      %c0_75 = arith.constant 0 : index
      %c0_76 = arith.constant 0 : index
      %255 = vector.load %arg18[%c0_74, %c0_75, %c0_76] : memref<2x16x128xbf16, #tpu.memory_space<vmem>>, vector<2x16x128xbf16>
      tpu.vector_store %arg18[%c0_74, %c0_75, %c0_76], %254 {strides = array<i32>} : memref<2x16x128xbf16, #tpu.memory_space<vmem>>, vector<2x16x128xbf16>,
    } else {
    }
    return
  }
  func.func @transform_0(%arg0: i32, %arg1: i32) -> (i32, i32, i32) {
    %c0_i32 = arith.constant 0 : i32
    %c0_i32_0 = arith.constant 0 : i32
    %c0_i32_1 = arith.constant 0 : i32
    return %arg0, %c0_i32, %c0_i32_0 : i32, i32, i32
  }
  func.func @transform_1(%arg0: i32, %arg1: i32) -> (i32, i32) {
    %c0_i32 = arith.constant 0 : i32
    %c0_i32_0 = arith.constant 0 : i32
    %c0_i32_1 = arith.constant 0 : i32
    return %c0_i32, %c0_i32_0 : i32, i32
  }
  func.func @transform_2(%arg0: i32, %arg1: i32) -> (i32, i32, i32) {
    %c0_i32 = arith.constant 0 : i32
    %c0_i32_0 = arith.constant 0 : i32
    %c0_i32_1 = arith.constant 0 : i32
    return %arg1, %c0_i32, %c0_i32_0 : i32, i32, i32
  }
  func.func @transform_3(%arg0: i32, %arg1: i32) -> (i32, i32, i32) {
    %c0_i32 = arith.constant 0 : i32
    %c0_i32_0 = arith.constant 0 : i32
    %c0_i32_1 = arith.constant 0 : i32
    return %arg1, %c0_i32, %c0_i32_0 : i32, i32, i32
  }
  func.func @transform_4(%arg0: i32, %arg1: i32) -> (i32, i32, i32) {
    %c0_i32 = arith.constant 0 : i32
    %c0_i32_0 = arith.constant 0 : i32
    %c0_i32_1 = arith.constant 0 : i32
    return %arg1, %c0_i32, %c0_i32_0 : i32, i32, i32
  }
  func.func @transform_5(%arg0: i32, %arg1: i32) -> (i32, i32, i32) {
    %c0_i32 = arith.constant 0 : i32
    %c0_i32_0 = arith.constant 0 : i32
    %c0_i32_1 = arith.constant 0 : i32
    return %arg1, %c0_i32, %c0_i32_0 : i32, i32, i32
  }
  func.func @transform_6(%arg0: i32, %arg1: i32) -> (i32, i32, i32) {
    %c0_i32 = arith.constant 0 : i32
    %c0_i32_0 = arith.constant 0 : i32
    %c0_i32_1 = arith.constant 0 : i32
    return %arg1, %c0_i32, %c0_i32_0 : i32, i32, i32
  }
  func.func @transform_7(%arg0: i32, %arg1: i32) -> (i32, i32, i32) {
    %c0_i32 = arith.constant 0 : i32
    %c0_i32_0 = arith.constant 0 : i32
    %c0_i32_1 = arith.constant 0 : i32
    return %arg1, %c0_i32, %c0_i32_0 : i32, i32, i32
  }
  func.func @transform_8(%arg0: i32, %arg1: i32) -> (i32, i32, i32) {
    %c0_i32 = arith.constant 0 : i32
    %c0_i32_0 = arith.constant 0 : i32
    %c0_i32_1 = arith.constant 0 : i32
    return %arg1, %c0_i32, %c0_i32_0 : i32, i32, i32
  }
  func.func @transform_9(%arg0: i32, %arg1: i32) -> (i32, i32, i32) {
    %c0_i32 = arith.constant 0 : i32
    %c0_i32_0 = arith.constant 0 : i32
    %c0_i32_1 = arith.constant 0 : i32
    return %arg1, %c0_i32, %c0_i32_0 : i32, i32, i32
  }
  func.func @transform_10(%arg0: i32, %arg1: i32) -> (i32, i32, i32) {
    %c0_i32 = arith.constant 0 : i32
    %c0_i32_0 = arith.constant 0 : i32
    %c0_i32_1 = arith.constant 0 : i32
    return %arg1, %c0_i32, %c0_i32_0 : i32, i32, i32
  }
  func.func @transform_11(%arg0: i32, %arg1: i32) -> (i32, i32, i32) {
    %c0_i32 = arith.constant 0 : i32
    %c0_i32_0 = arith.constant 0 : i32
    %c0_i32_1 = arith.constant 0 : i32
    return %arg1, %c0_i32, %c0_i32_0 : i32, i32, i32
  }
  func.func @transform_12(%arg0: i32, %arg1: i32) -> (i32, i32, i32) {
    %c0_i32 = arith.constant 0 : i32
    %c0_i32_0 = arith.constant 0 : i32
    %c0_i32_1 = arith.constant 0 : i32
    return %arg1, %c0_i32, %c0_i32_0 : i32, i32, i32
  }
  func.func @transform_13(%arg0: i32, %arg1: i32) -> (i32, i32, i32) {
    %c0_i32 = arith.constant 0 : i32
    %c0_i32_0 = arith.constant 0 : i32
    %c0_i32_1 = arith.constant 0 : i32
    return %arg1, %c0_i32, %c0_i32_0 : i32, i32, i32
  }
  func.func @transform_14(%arg0: i32, %arg1: i32) -> (i32, i32) {
    %c0_i32 = arith.constant 0 : i32
    %c0_i32_0 = arith.constant 0 : i32
    %c0_i32_1 = arith.constant 0 : i32
    return %c0_i32, %c0_i32_0 : i32, i32
  }
  func.func @transform_15(%arg0: i32, %arg1: i32) -> (i32, i32) {
    %c0_i32 = arith.constant 0 : i32
    %c0_i32_0 = arith.constant 0 : i32
    %c0_i32_1 = arith.constant 0 : i32
    return %c0_i32, %c0_i32_0 : i32, i32
  }
  func.func @transform_16(%arg0: i32, %arg1: i32) -> (i32, i32, i32) {
    %c0_i32 = arith.constant 0 : i32
    %c0_i32_0 = arith.constant 0 : i32
    %c0_i32_1 = arith.constant 0 : i32
    return %arg0, %c0_i32, %c0_i32_0 : i32, i32, i32
  }
}

</mosaic_0001>

<llo_original>
// kernel: idea_decoder_forward.3
$region0: #{idea_decoder_forward.3}
  #allocation0 [shape = 'u32[]', space=smem, size = 0x4, offset = 0x4, fixed_abs, tag = 'smem constant byte address 0x4 - core index']
  #allocation1 [shape = 'u32[144,128]{1,0:T(1,128)}', space=vmem, size = 0x12000, scoped, tag = 'internal scratch']
  %s0 = inlined_call_operand.vmem [shape: bf16[30,128], index: 0, kind: input, shape index: {}]
  %s1 = inlined_call_operand.vmem [shape: bf16[512,128], index: 1, kind: input, shape index: {}]
  %s2 = inlined_call_operand.vmem [shape: f32[30,512], index: 2, kind: output, shape index: {}]
  %s3 = sld [smem:[#allocation0]]
  $region18: #{idea_decoder_forward.3} parent=0
    _
  %s5 = ssub.s32 1, %s3
  %s6 = scalar_select 0, %s5, %s3
  // Predicated region
  $region2: #{idea_decoder_forward.3} parent=0 // pred_check
    _
  $region3: #{idea_decoder_forward.3} parent=0 // pred_check_branch
    %8 = sbr.rel (0) target = $region5
  $region4: #{idea_decoder_forward.3} parent=0 // pred_region
    _
  $region5: #{idea_decoder_forward.3} parent=0 // pred_fallthru
    _
  // Predicated region
  $region6: #{idea_decoder_forward.3} parent=0 // pred_check
    _
  $region7: #{idea_decoder_forward.3} parent=0 // pred_check_branch
    %10 = sbr.rel (0) target = $region9
  $region8: #{idea_decoder_forward.3} parent=0 // pred_region
    _
  $region9: #{idea_decoder_forward.3} parent=0 // pred_fallthru
    _
  %v12 = vld [vmem:[%s0] sm:$0xf]
  %v13 = vld [vmem:[%s0 + $0x4] sm:$0xf]
  %v14 = vld [vmem:[%s0 + $0x8] sm:$0xf]
  %v15 = vld [vmem:[%s0 + $0xc] sm:$0x7]
  %v16 = vld [vmem:[%s1] sm:$0xf]
  %v17 = vld [vmem:[%s1 + $0x4] sm:$0xf]
  %v18 = vld [vmem:[%s1 + $0x8] sm:$0xf]
  %v19 = vld [vmem:[%s1 + $0xc] sm:$0xf]
  %v20 = vld [vmem:[%s1 + $0x10] sm:$0xf]
  %v21 = vld [vmem:[%s1 + $0x14] sm:$0xf]
  %v22 = vld [vmem:[%s1 + $0x18] sm:$0xf]
  %v23 = vld [vmem:[%s1 + $0x1c] sm:$0xf]
  %v24 = vld [vmem:[%s1 + $0x20] sm:$0xf]
  %v25 = vld [vmem:[%s1 + $0x24] sm:$0xf]
  %v26 = vld [vmem:[%s1 + $0x28] sm:$0xf]
  %v27 = vld [vmem:[%s1 + $0x2c] sm:$0xf]
  %v28 = vld [vmem:[%s1 + $0x30] sm:$0xf]
  %v29 = vld [vmem:[%s1 + $0x34] sm:$0xf]
  %v30 = vld [vmem:[%s1 + $0x38] sm:$0xf]
  %v31 = vld [vmem:[%s1 + $0x3c] sm:$0xf]
  %v32 = vld [vmem:[%s1 + $0x40] sm:$0xf]
  %v33 = vld [vmem:[%s1 + $0x44] sm:$0xf]
  %v34 = vld [vmem:[%s1 + $0x48] sm:$0xf]
  %v35 = vld [vmem:[%s1 + $0x4c] sm:$0xf]
  %v36 = vld [vmem:[%s1 + $0x50] sm:$0xf]
  %v37 = vld [vmem:[%s1 + $0x54] sm:$0xf]
  %v38 = vld [vmem:[%s1 + $0x58] sm:$0xf]
  %v39 = vld [vmem:[%s1 + $0x5c] sm:$0xf]
  %v40 = vld [vmem:[%s1 + $0x60] sm:$0xf]
  %v41 = vld [vmem:[%s1 + $0x64] sm:$0xf]
  %v42 = vld [vmem:[%s1 + $0x68] sm:$0xf]
  %v43 = vld [vmem:[%s1 + $0x6c] sm:$0xf]
  %v44 = vld [vmem:[%s1 + $0x70] sm:$0xf]
  %v45 = vld [vmem:[%s1 + $0x74] sm:$0xf]
  %v46 = vld [vmem:[%s1 + $0x78] sm:$0xf]
  %v47 = vld [vmem:[%s1 + $0x7c] sm:$0xf]
  %v48 = vld [vmem:[%s1 + $0x80] sm:$0xf]
  %v49 = vld [vmem:[%s1 + $0x84] sm:$0xf]
  %v50 = vld [vmem:[%s1 + $0x88] sm:$0xf]
  %v51 = vld [vmem:[%s1 + $0x8c] sm:$0xf]
  %v52 = vld [vmem:[%s1 + $0x90] sm:$0xf]
  %v53 = vld [vmem:[%s1 + $0x94] sm:$0xf]
  %v54 = vld [vmem:[%s1 + $0x98] sm:$0xf]
  %v55 = vld [vmem:[%s1 + $0x9c] sm:$0xf]
  %v56 = vld [vmem:[%s1 + $0xa0] sm:$0xf]
  %v57 = vld [vmem:[%s1 + $0xa4] sm:$0xf]
  %v58 = vld [vmem:[%s1 + $0xa8] sm:$0xf]
  %v59 = vld [vmem:[%s1 + $0xac] sm:$0xf]
  %v60 = vld [vmem:[%s1 + $0xb0] sm:$0xf]
  %v61 = vld [vmem:[%s1 + $0xb4] sm:$0xf]
  %v62 = vld [vmem:[%s1 + $0xb8] sm:$0xf]
  %v63 = vld [vmem:[%s1 + $0xbc] sm:$0xf]
  %v64 = vld [vmem:[%s1 + $0xc0] sm:$0xf]
  %v65 = vld [vmem:[%s1 + $0xc4] sm:$0xf]
  %v66 = vld [vmem:[%s1 + $0xc8] sm:$0xf]
  %v67 = vld [vmem:[%s1 + $0xcc] sm:$0xf]
  %v68 = vld [vmem:[%s1 + $0xd0] sm:$0xf]
  %v69 = vld [vmem:[%s1 + $0xd4] sm:$0xf]
  %v70 = vld [vmem:[%s1 + $0xd8] sm:$0xf]
  %v71 = vld [vmem:[%s1 + $0xdc] sm:$0xf]
  %v72 = vld [vmem:[%s1 + $0xe0] sm:$0xf]
  %v73 = vld [vmem:[%s1 + $0xe4] sm:$0xf]
  %v74 = vld [vmem:[%s1 + $0xe8] sm:$0xf]
  %v75 = vld [vmem:[%s1 + $0xec] sm:$0xf]
  %v76 = vld [vmem:[%s1 + $0xf0] sm:$0xf]
  %v77 = vld [vmem:[%s1 + $0xf4] sm:$0xf]
  %v78 = vld [vmem:[%s1 + $0xf8] sm:$0xf]
  %v79 = vld [vmem:[%s1 + $0xfc] sm:$0xf]
  %v84 = vunpack.c.l.b16 %v12
  %v85 = vunpack.c.l.b16 %v13
  %v86 = vunpack.c.l.b16 %v14
  %v87 = vunpack.c.l.b16 %v15
  %v88 = vpack.c.b16 %v85, %v84
  %v89 = vpack.c.b16 %v87, %v86
  %v156 = vunpack.c.l.b16 %v16
  %v157 = vunpack.c.l.b16 %v17
  %v158 = vunpack.c.l.b16 %v18
  %v159 = vunpack.c.l.b16 %v19
  %v160 = vunpack.c.l.b16 %v20
  %v161 = vunpack.c.l.b16 %v21
  %v162 = vunpack.c.l.b16 %v22
  %v163 = vunpack.c.l.b16 %v23
  %v164 = vunpack.c.l.b16 %v24
  %v165 = vunpack.c.l.b16 %v25
  %v166 = vunpack.c.l.b16 %v26
  %v167 = vunpack.c.l.b16 %v27
  %v168 = vunpack.c.l.b16 %v28
  %v169 = vunpack.c.l.b16 %v29
  %v170 = vunpack.c.l.b16 %v30
  %v171 = vunpack.c.l.b16 %v31
  %v172 = vunpack.c.l.b16 %v32
  %v173 = vunpack.c.l.b16 %v33
  %v174 = vunpack.c.l.b16 %v34
  %v175 = vunpack.c.l.b16 %v35
  %v176 = vunpack.c.l.b16 %v36
  %v177 = vunpack.c.l.b16 %v37
  %v178 = vunpack.c.l.b16 %v38
  %v179 = vunpack.c.l.b16 %v39
  %v180 = vunpack.c.l.b16 %v40
  %v181 = vunpack.c.l.b16 %v41
  %v182 = vunpack.c.l.b16 %v42
  %v183 = vunpack.c.l.b16 %v43
  %v184 = vunpack.c.l.b16 %v44
  %v185 = vunpack.c.l.b16 %v45
  %v186 = vunpack.c.l.b16 %v46
  %v187 = vunpack.c.l.b16 %v47
  %v188 = vunpack.c.l.b16 %v48
  %v189 = vunpack.c.l.b16 %v49
  %v190 = vunpack.c.l.b16 %v50
  %v191 = vunpack.c.l.b16 %v51
  %v192 = vunpack.c.l.b16 %v52
  %v193 = vunpack.c.l.b16 %v53
  %v194 = vunpack.c.l.b16 %v54
  %v195 = vunpack.c.l.b16 %v55
  %v196 = vunpack.c.l.b16 %v56
  %v197 = vunpack.c.l.b16 %v57
  %v198 = vunpack.c.l.b16 %v58
  %v199 = vunpack.c.l.b16 %v59
  %v200 = vunpack.c.l.b16 %v60
  %v201 = vunpack.c.l.b16 %v61
  %v202 = vunpack.c.l.b16 %v62
  %v203 = vunpack.c.l.b16 %v63
  %v204 = vunpack.c.l.b16 %v64
  %v205 = vunpack.c.l.b16 %v65
  %v206 = vunpack.c.l.b16 %v66
  %v207 = vunpack.c.l.b16 %v67
  %v208 = vunpack.c.l.b16 %v68
  %v209 = vunpack.c.l.b16 %v69
  %v210 = vunpack.c.l.b16 %v70
  %v211 = vunpack.c.l.b16 %v71
  %v212 = vunpack.c.l.b16 %v72
  %v213 = vunpack.c.l.b16 %v73
  %v214 = vunpack.c.l.b16 %v74
  %v215 = vunpack.c.l.b16 %v75
  %v216 = vunpack.c.l.b16 %v76
  %v217 = vunpack.c.l.b16 %v77
  %v218 = vunpack.c.l.b16 %v78
  %v219 = vunpack.c.l.b16 %v79
  %v220 = vpack.c.b16 %v157, %v156
  %v221 = vpack.c.b16 %v159, %v158
  %v222 = vpack.c.b16 %v161, %v160
  %v223 = vpack.c.b16 %v163, %v162
  %v224 = vpack.c.b16 %v165, %v164
  %v225 = vpack.c.b16 %v167, %v166
  %v226 = vpack.c.b16 %v169, %v168
  %v227 = vpack.c.b16 %v171, %v170
  %v228 = vpack.c.b16 %v173, %v172
  %v229 = vpack.c.b16 %v175, %v174
  %v230 = vpack.c.b16 %v177, %v176
  %v231 = vpack.c.b16 %v179, %v178
  %v232 = vpack.c.b16 %v181, %v180
  %v233 = vpack.c.b16 %v183, %v182
  %v234 = vpack.c.b16 %v185, %v184
  %v235 = vpack.c.b16 %v187, %v186
  %v236 = vpack.c.b16 %v189, %v188
  %v237 = vpack.c.b16 %v191, %v190
  %v238 = vpack.c.b16 %v193, %v192
  %v239 = vpack.c.b16 %v195, %v194
  %v240 = vpack.c.b16 %v197, %v196
  %v241 = vpack.c.b16 %v199, %v198
  %v242 = vpack.c.b16 %v201, %v200
  %v243 = vpack.c.b16 %v203, %v202
  %v244 = vpack.c.b16 %v205, %v204
  %v245 = vpack.c.b16 %v207, %v206
  %v246 = vpack.c.b16 %v209, %v208
  %v247 = vpack.c.b16 %v211, %v210
  %v248 = vpack.c.b16 %v213, %v212
  %v249 = vpack.c.b16 %v215, %v214
  %v250 = vpack.c.b16 %v217, %v216
  %v251 = vpack.c.b16 %v219, %v218
  %284 = vmatprep.subr.bf16.mxu0 0
  %285 = vmatpush1.bf16.xpose.msra.mxu0 %v220
  %286 = vmatprep.subr.bf16.mxu0 0
  %287 = vmatpush1.bf16.xpose.msra.mxu0 %v221
  %288 = vmatprep.subr.bf16.mxu0 0
  %289 = vmatpush1.bf16.xpose.msra.mxu0 %v222
  %290 = vmatprep.subr.bf16.mxu0 0
  %291 = vmatpush1.bf16.xpose.msra.mxu0 %v223
  %292 = vmatprep.subr.bf16.mxu0 0
  %293 = vmatpush1.bf16.xpose.msra.mxu0 %v224
  %294 = vmatprep.subr.bf16.mxu0 0
  %295 = vmatpush1.bf16.xpose.msra.mxu0 %v225
  %296 = vmatprep.subr.bf16.mxu0 0
  %297 = vmatpush1.bf16.xpose.msra.mxu0 %v226
  %298 = vmatprep.subr.bf16.mxu0 0
  %299 = vmatpush1.bf16.xpose.msra.mxu0 %v227
  %300 = vmatprep.subr.bf16.mxu0 0
  %301 = vmatpush1.bf16.xpose.msra.mxu0 %v228
  %302 = vmatprep.subr.bf16.mxu0 0
  %303 = vmatpush1.bf16.xpose.msra.mxu0 %v229
  %304 = vmatprep.subr.bf16.mxu0 0
  %305 = vmatpush1.bf16.xpose.msra.mxu0 %v230
  %306 = vmatprep.subr.bf16.mxu0 0
  %307 = vmatpush1.bf16.xpose.msra.mxu0 %v231
  %308 = vmatprep.subr.bf16.mxu0 0
  %309 = vmatpush1.bf16.xpose.msra.mxu0 %v232
  %310 = vmatprep.subr.bf16.mxu0 0
  %311 = vmatpush1.bf16.xpose.msra.mxu0 %v233
  %312 = vmatprep.subr.bf16.mxu0 0
  %313 = vmatpush1.bf16.xpose.msra.mxu0 %v234
  %314 = vmatprep.subr.bf16.mxu0 0
  %315 = vmatpush1.bf16.xpose.msra.mxu0 %v235
  %316 = vmatprep.mubr.bf16.mxu0 0
  %317 = vmatmul.mubr.bf16.gmra.mrb[0].mxu0 %v88
  %v318 = vpop.f32.mrb[0].mxu0
  %v319 = vadd.f32 0.0, %v318
  %v320 = vpop.f32.mrb[0].mxu0
  %v321 = vadd.f32 0.0, %v320
  %v322 = vpop.f32.mrb[0].mxu0
  %v323 = vadd.f32 0.0, %v322
  %v324 = vpop.f32.mrb[0].mxu0
  %v325 = vadd.f32 0.0, %v324
  %326 = vmatprep.mubr.bf16.mxu0 0
  %327 = vmatmul.mubr.bf16.gmra.mrb[0].mxu0 %v89
  %v328 = vpop.f32.mrb[0].mxu0
  %v329 = vadd.f32 0.0, %v328
  %v330 = vpop.f32.mrb[0].mxu0
  %v331 = vadd.f32 0.0, %v330
  %v332 = vpop.f32.mrb[0].mxu0
  %v333 = vadd.f32 0.0, %v332
  %v334 = vpop.f32.mrb[0].mxu0
  %v335 = vadd.f32 0.0, %v334
  %336 = vdwg.mxu0
  %337 = vmatprep.subr.bf16.mxu0 0
  %338 = vmatpush1.bf16.xpose.msra.mxu0 %v236
  %339 = vmatprep.subr.bf16.mxu0 0
  %340 = vmatpush1.bf16.xpose.msra.mxu0 %v237
  %341 = vmatprep.subr.bf16.mxu0 0
  %342 = vmatpush1.bf16.xpose.msra.mxu0 %v238
  %343 = vmatprep.subr.bf16.mxu0 0
  %344 = vmatpush1.bf16.xpose.msra.mxu0 %v239
  %345 = vmatprep.subr.bf16.mxu0 0
  %346 = vmatpush1.bf16.xpose.msra.mxu0 %v240
  %347 = vmatprep.subr.bf16.mxu0 0
  %348 = vmatpush1.bf16.xpose.msra.mxu0 %v241
  %349 = vmatprep.subr.bf16.mxu0 0
  %350 = vmatpush1.bf16.xpose.msra.mxu0 %v242
  %351 = vmatprep.subr.bf16.mxu0 0
  %352 = vmatpush1.bf16.xpose.msra.mxu0 %v243
  %353 = vmatprep.subr.bf16.mxu0 0
  %354 = vmatpush1.bf16.xpose.msra.mxu0 %v244
  %355 = vmatprep.subr.bf16.mxu0 0
  %356 = vmatpush1.bf16.xpose.msra.mxu0 %v245
  %357 = vmatprep.subr.bf16.mxu0 0
  %358 = vmatpush1.bf16.xpose.msra.mxu0 %v246
  %359 = vmatprep.subr.bf16.mxu0 0
  %360 = vmatpush1.bf16.xpose.msra.mxu0 %v247
  %361 = vmatprep.subr.bf16.mxu0 0
  %362 = vmatpush1.bf16.xpose.msra.mxu0 %v248
  %363 = vmatprep.subr.bf16.mxu0 0
  %364 = vmatpush1.bf16.xpose.msra.mxu0 %v249
  %365 = vmatprep.subr.bf16.mxu0 0
  %366 = vmatpush1.bf16.xpose.msra.mxu0 %v250
  %367 = vmatprep.subr.bf16.mxu0 0
  %368 = vmatpush1.bf16.xpose.msra.mxu0 %v251
  %369 = vmatprep.mubr.bf16.mxu0 0
  %370 = vmatmul.mubr.bf16.gmra.mrb[0].mxu0 %v88
  %v371 = vpop.f32.mrb[0].mxu0
  %v372 = vadd.f32 0.0, %v371
  %v373 = vpop.f32.mrb[0].mxu0
  %v374 = vadd.f32 0.0, %v373
  %v375 = vpop.f32.mrb[0].mxu0
  %v376 = vadd.f32 0.0, %v375
  %v377 = vpop.f32.mrb[0].mxu0
  %v378 = vadd.f32 0.0, %v377
  %379 = vmatprep.mubr.bf16.mxu0 0
  %380 = vmatmul.mubr.bf16.gmra.mrb[0].mxu0 %v89
  %v381 = vpop.f32.mrb[0].mxu0
  %v382 = vadd.f32 0.0, %v381
  %v383 = vpop.f32.mrb[0].mxu0
  %v384 = vadd.f32 0.0, %v383
  %v385 = vpop.f32.mrb[0].mxu0
  %v386 = vadd.f32 0.0, %v385
  %v387 = vpop.f32.mrb[0].mxu0
  %v388 = vadd.f32 0.0, %v387
  %389 = vdwg.mxu0
  %390 = vst [vmem:[%s2] sm:$0xff] %v319
  %391 = vst [vmem:[%s2 + $0x8] sm:$0xff] %v321
  %392 = vst [vmem:[%s2 + $0x10] sm:$0xff] %v372
  %393 = vst [vmem:[%s2 + $0x18] sm:$0xff] %v374
  %394 = vst [vmem:[%s2 + $0x20] sm:$0xff] %v323
  %395 = vst [vmem:[%s2 + $0x28] sm:$0xff] %v325
  %396 = vst [vmem:[%s2 + $0x30] sm:$0xff] %v376
  %397 = vst [vmem:[%s2 + $0x38] sm:$0xff] %v378
  %398 = vst [vmem:[%s2 + $0x40] sm:$0xff] %v329
  %399 = vst [vmem:[%s2 + $0x48] sm:$0xff] %v331
  %400 = vst [vmem:[%s2 + $0x50] sm:$0xff] %v382
  %401 = vst [vmem:[%s2 + $0x58] sm:$0xff] %v384
  %402 = vst [vmem:[%s2 + $0x60] sm:$0x3f] %v333
  %403 = vst [vmem:[%s2 + $0x68] sm:$0x3f] %v335
  %404 = vst [vmem:[%s2 + $0x70] sm:$0x3f] %v386
  %405 = vst [vmem:[%s2 + $0x78] sm:$0x3f] %v388
  // Predicated region
  $region10: #{idea_decoder_forward.3} parent=0 // pred_check
    _
  $region11: #{idea_decoder_forward.3} parent=0 // pred_check_branch
    %407 = sbr.rel (0) target = $region13
  $region12: #{idea_decoder_forward.3} parent=0 // pred_region
    _
  $region13: #{idea_decoder_forward.3} parent=0 // pred_fallthru
    _
  // Predicated region
  $region14: #{idea_decoder_forward.3} parent=0 // pred_check
    _
  $region15: #{idea_decoder_forward.3} parent=0 // pred_check_branch
    %409 = sbr.rel (0) target = $region17
  $region16: #{idea_decoder_forward.3} parent=0 // pred_region
    _
  $region17: #{idea_decoder_forward.3} parent=0 // pred_fallthru
    _

// kernel: idea_decoder_forward.2
$region0: #{idea_decoder_forward.2}
  #allocation0 [shape = 'u32[]', space=smem, size = 0x4, offset = 0x4, fixed_abs, tag = 'smem constant byte address 0x4 - core index']
  #allocation1 [shape = 'u32[144,128]{1,0:T(1,128)}', space=vmem, size = 0x12000, scoped, tag = 'internal scratch']
  #allocation2 [shape = 'f32[32,128]{1,0:T(8,128)}', space=vmem, size = 0x4000, scoped, tag = 'scratch operand']
  %s0 = inlined_call_operand.vmem [shape: bf16[2,16,128], index: 0, kind: input, shape index: {}]
  %s1 = inlined_call_operand.vmem [shape: f32[16,16], index: 1, kind: input, shape index: {}]
  %s2 = inlined_call_operand.vmem [shape: f32[2,1,128], index: 2, kind: input, shape index: {}]
  %s3 = inlined_call_operand.vmem [shape: f32[2,1,128], index: 3, kind: input, shape index: {}]
  %s4 = inlined_call_operand.vmem [shape: bf16[2,128,384], index: 4, kind: input, shape index: {}]
  %s5 = inlined_call_operand.vmem [shape: bf16[2,1,384], index: 5, kind: input, shape index: {}]
  %s6 = inlined_call_operand.hbm [shape: bf16[2,128,128], index: 6, kind: input, shape index: {}]
  %s7 = inlined_call_operand.vmem [shape: bf16[2,1,128], index: 7, kind: input, shape index: {}]
  %s8 = inlined_call_operand.vmem [shape: f32[2,1,128], index: 8, kind: input, shape index: {}]
  %s9 = inlined_call_operand.vmem [shape: f32[2,1,128], index: 9, kind: input, shape index: {}]
  %s10 = inlined_call_operand.hbm [shape: bf16[2,128,512], index: 10, kind: input, shape index: {}]
  %s11 = inlined_call_operand.vmem [shape: bf16[2,1,512], index: 11, kind: input, shape index: {}]
  %s12 = inlined_call_operand.hbm [shape: bf16[2,512,128], index: 12, kind: input, shape index: {}]
  %s13 = inlined_call_operand.vmem [shape: bf16[2,1,128], index: 13, kind: input, shape index: {}]
  %s14 = inlined_call_operand.vmem [shape: f32[1,128], index: 14, kind: input, shape index: {}]
  %s15 = inlined_call_operand.vmem [shape: f32[1,128], index: 15, kind: input, shape index: {}]
  %s16 = inlined_call_operand.vmem [shape: bf16[2,16,128], index: 16, kind: output, shape index: {}]
  %s17 = sld [smem:[#allocation0]]
  $region117: #{idea_decoder_forward.2} parent=0
    _
  %s19 = ssub.s32 1, %s17
  %s20 = scalar_select 0, %s19, %s17
  $region1: #{idea_decoder_forward.2} parent=0
    #allocation3 [shape = 'u8[65536]{0}', space=vmem, size = 0x10000, scoped, tag = 'input window, operand 6']
    #allocation4 [shape = 's32[2]{0}', space=sflag, size = 0x8, scoped, tag = 'scoped memory for idea_decoder_forward.2']
    #allocation5 [shape = 'u8[262144]{0}', space=vmem, size = 0x40000, scoped, tag = 'input window, operand 10']
    #allocation6 [shape = 's32[2]{0}', space=sflag, size = 0x8, scoped, tag = 'scoped memory for idea_decoder_forward.2']
    #allocation7 [shape = 'u8[262144]{0}', space=vmem, size = 0x40000, scoped, tag = 'input window, operand 12']
    %21 = vsyncpa [#allocation4], 0
    %s22 = scalar_lea.sflag [#allocation4], 1
    %23 = vsyncpa %s22, 0
    %24 = vsyncpa [#allocation6], 0
    %s25 = scalar_lea.sflag [#allocation6], 1
    %26 = vsyncpa %s25, 0
    loop: start=0, step=1, limit=4
    $region2: #{idea_decoder_forward.2} parent=1 // loop_pre_header
      _
    $region3: #{idea_decoder_forward.2} parent=1 // loop_header
      %s28 = sphi 0, %s32
      %p29 = scmp.ge.s32.totalorder %s28, 4
      %s35 = sphi 0, %s47
      %s36 = sphi 0, %s43
      %s37 = sphi 0, %s35
      %s38 = sphi 0, %s36
      %s39 = sphi 0, %s37
      %s40 = sphi 0, %s38
      %s50 = sphi 0, %s52
      %s53 = sphi 0, %s50
      %s54 = sphi 0, %s53
      %s70 = sphi 0, %s54
      %s74 = sphi 0, %s74
      %s76 = sphi 0, %s74
      %s77 = sphi 0, %s76
      %s91 = sphi 0, %s77
      %s97 = sphi 0, %s99
      %s100 = sphi 0, %s97
      %s101 = sphi 0, %s100
      %s117 = sphi 0, %s101
      %s123 = sphi 0, %s125
      %s126 = sphi 0, %s123
      %s127 = sphi 0, %s126
      %s143 = sphi 0, %s127
      %s149 = sphi 0, %s151
      %s152 = sphi 0, %s149
      %s153 = sphi 0, %s152
      %s169 = sphi 0, %s153
      %s175 = sphi 0, %s177
      %s178 = sphi 0, %s175
      %s179 = sphi 0, %s178
      %s195 = sphi 0, %s179
      %s201 = sphi 0, %s203
      %s204 = sphi 0, %s201
      %s205 = sphi 0, %s204
      %s221 = sphi 0, %s205
      %s227 = sphi 0, %s229
      %s230 = sphi 0, %s227
      %s231 = sphi 0, %s230
      %s247 = sphi 0, %s231
      %s253 = sphi 0, %s255
      %s256 = sphi 0, %s253
      %s257 = sphi 0, %s256
      %s273 = sphi 0, %s257
      %s279 = sphi 0, %s281
      %s282 = sphi 0, %s279
      %s283 = sphi 0, %s282
      %s299 = sphi 0, %s283
      %s305 = sphi 0, %s307
      %s308 = sphi 0, %s305
      %s309 = sphi 0, %s308
      %s325 = sphi 0, %s309
      %s331 = sphi 0, %s333
      %s334 = sphi 0, %s331
      %s335 = sphi 0, %s334
      %s351 = sphi 0, %s335
      %s357 = sphi 0, %s359
      %s360 = sphi 0, %s357
      %s361 = sphi 0, %s360
      %s377 = sphi 0, %s361
      %s383 = sphi 0, %s385
      %s386 = sphi 0, %s383
      %s387 = sphi 0, %s386
      %s403 = sphi 0, %s387
      %s407 = sphi 0, %s407
      %s409 = sphi 0, %s407
      %s410 = sphi 0, %s409
      %s424 = sphi 0, %s410
      %s428 = sphi 0, %s428
      %s430 = sphi 0, %s428
      %s431 = sphi 0, %s430
      %s445 = sphi 0, %s431
      %s451 = sphi 0, %s453
      %s454 = sphi 0, %s451
      %s455 = sphi 0, %s454
      %s471 = sphi 0, %s455
    $region4: #{idea_decoder_forward.2} parent=1 // loop_header_branch
      %31 = sbr.rel (%p29) target = $region8
    $region5: #{idea_decoder_forward.2} parent=1 // loop_body
      %s33 = ssub.s32 %s28, 1
      %s34 = ssub.s32 %s28, 2
      %s41 = sadd.s32 1, %s36
      %p42 = scmp.ge.s32.totalorder %s41, 2
      %s43 = scalar_select %p42, 0, %s41
      %s44 = sadd.s32 1, %s35
      %s45 = scalar_select %p42, %s44, %s35
      %p46 = scmp.ge.s32.totalorder %s45, 1
      %s47 = scalar_select %p46, 0, %s45
      %s48 = ssub.s32 %s35, %s47
      %p49 = scmp.eq.s32.totalorder %s48, 0
      %s51 = sadd.s32 %s50, 1
      %s52 = scalar_select %p49, %s50, %s51
      %p55 = pneg %p49
      %p56 = scmp.eq.s32.totalorder %s28, 1
      %p57 = por %p55, %p56
      %p58 = scmp.ne.s32.totalorder %s50, %s53
      %p59 = scmp.eq.s32.totalorder %s28, 0
      %p60 = por %p58, %p59
      %p61 = scmp.ne.s32.totalorder %s50, %s53
      %p62 = scmp.eq.s32.totalorder %s33, 1
      %p63 = por %p61, %p62
      %p64 = scmp.ne.s32.totalorder %s53, %s54
      %p65 = scmp.eq.s32.totalorder %s33, 0
      %p66 = por %p64, %p65
      %p67 = scmp.ne.s32.totalorder %s53, %s54
      %p68 = scmp.eq.s32.totalorder %s34, 1
      %p69 = por %p67, %p68
      %p71 = scmp.ne.s32.totalorder %s54, %s70
      %p72 = scmp.eq.s32.totalorder %s34, 0
      %p73 = por %p71, %p72
      %s75 = sadd.s32 %s74, 1
      %p78 = scmp.eq.s32.totalorder %s28, 1
      %p79 = scmp.ne.s32.totalorder %s74, %s76
      %p80 = scmp.eq.s32.totalorder %s28, 0
      %p81 = por %p79, %p80
      %p82 = scmp.ne.s32.totalorder %s74, %s76
      %p83 = scmp.eq.s32.totalorder %s33, 1
      %p84 = por %p82, %p83
      %p85 = scmp.ne.s32.totalorder %s76, %s77
      %p86 = scmp.eq.s32.totalorder %s33, 0
      %p87 = por %p85, %p86
      %p88 = scmp.ne.s32.totalorder %s76, %s77
      %p89 = scmp.eq.s32.totalorder %s34, 1
      %p90 = por %p88, %p89
      %p92 = scmp.ne.s32.totalorder %s77, %s91
      %p93 = scmp.eq.s32.totalorder %s34, 0
      %p94 = por %p92, %p93
      %s95 = ssub.s32 %s36, %s43
      %p96 = scmp.eq.s32.totalorder %s95, 0
      %s98 = sadd.s32 %s97, 1
      %s99 = scalar_select %p96, %s97, %s98
      %p102 = pneg %p96
      %p103 = scmp.eq.s32.totalorder %s28, 1
      %p104 = por %p102, %p103
      %p105 = scmp.ne.s32.totalorder %s97, %s100
      %p106 = scmp.eq.s32.totalorder %s28, 0
      %p107 = por %p105, %p106
      %p108 = scmp.ne.s32.totalorder %s97, %s100
      %p109 = scmp.eq.s32.totalorder %s33, 1
      %p110 = por %p108, %p109
      %p111 = scmp.ne.s32.totalorder %s100, %s101
      %p112 = scmp.eq.s32.totalorder %s33, 0
      %p113 = por %p111, %p112
      %p114 = scmp.ne.s32.totalorder %s100, %s101
      %p115 = scmp.eq.s32.totalorder %s34, 1
      %p116 = por %p114, %p115
      %p118 = scmp.ne.s32.totalorder %s101, %s117
      %p119 = scmp.eq.s32.totalorder %s34, 0
      %p120 = por %p118, %p119
      %s121 = ssub.s32 %s36, %s43
      %p122 = scmp.eq.s32.totalorder %s121, 0
      %s124 = sadd.s32 %s123, 1
      %s125 = scalar_select %p122, %s123, %s124
      %p128 = pneg %p122
      %p129 = scmp.eq.s32.totalorder %s28, 1
      %p130 = por %p128, %p129
      %p131 = scmp.ne.s32.totalorder %s123, %s126
      %p132 = scmp.eq.s32.totalorder %s28, 0
      %p133 = por %p131, %p132
      %p134 = scmp.ne.s32.totalorder %s123, %s126
      %p135 = scmp.eq.s32.totalorder %s33, 1
      %p136 = por %p134, %p135
      %p137 = scmp.ne.s32.totalorder %s126, %s127
      %p138 = scmp.eq.s32.totalorder %s33, 0
      %p139 = por %p137, %p138
      %p140 = scmp.ne.s32.totalorder %s126, %s127
      %p141 = scmp.eq.s32.totalorder %s34, 1
      %p142 = por %p140, %p141
      %p144 = scmp.ne.s32.totalorder %s127, %s143
      %p145 = scmp.eq.s32.totalorder %s34, 0
      %p146 = por %p144, %p145
      %s147 = ssub.s32 %s36, %s43
      %p148 = scmp.eq.s32.totalorder %s147, 0
      %s150 = sadd.s32 %s149, 1
      %s151 = scalar_select %p148, %s149, %s150
      %p154 = pneg %p148
      %p155 = scmp.eq.s32.totalorder %s28, 1
      %p156 = por %p154, %p155
      %p157 = scmp.ne.s32.totalorder %s149, %s152
      %p158 = scmp.eq.s32.totalorder %s28, 0
      %p159 = por %p157, %p158
      %p160 = scmp.ne.s32.totalorder %s149, %s152
      %p161 = scmp.eq.s32.totalorder %s33, 1
      %p162 = por %p160, %p161
      %p163 = scmp.ne.s32.totalorder %s152, %s153
      %p164 = scmp.eq.s32.totalorder %s33, 0
      %p165 = por %p163, %p164
      %p166 = scmp.ne.s32.totalorder %s152, %s153
      %p167 = scmp.eq.s32.totalorder %s34, 1
      %p168 = por %p166, %p167
      %p170 = scmp.ne.s32.totalorder %s153, %s169
      %p171 = scmp.eq.s32.totalorder %s34, 0
      %p172 = por %p170, %p171
      %s173 = ssub.s32 %s36, %s43
      %p174 = scmp.eq.s32.totalorder %s173, 0
      %s176 = sadd.s32 %s175, 1
      %s177 = scalar_select %p174, %s175, %s176
      %p180 = pneg %p174
      %p181 = scmp.eq.s32.totalorder %s28, 1
      %p182 = por %p180, %p181
      %p183 = scmp.ne.s32.totalorder %s175, %s178
      %p184 = scmp.eq.s32.totalorder %s28, 0
      %p185 = por %p183, %p184
      %p186 = scmp.ne.s32.totalorder %s175, %s178
      %p187 = scmp.eq.s32.totalorder %s33, 1
      %p188 = por %p186, %p187
      %p189 = scmp.ne.s32.totalorder %s178, %s179
      %p190 = scmp.eq.s32.totalorder %s33, 0
      %p191 = por %p189, %p190
      %p192 = scmp.ne.s32.totalorder %s178, %s179
      %p193 = scmp.eq.s32.totalorder %s34, 1
      %p194 = por %p192, %p193
      %p196 = scmp.ne.s32.totalorder %s179, %s195
      %p197 = scmp.eq.s32.totalorder %s34, 0
      %p198 = por %p196, %p197
      %s199 = ssub.s32 %s36, %s43
      %p200 = scmp.eq.s32.totalorder %s199, 0
      %s202 = sadd.s32 %s201, 1
      %s203 = scalar_select %p200, %s201, %s202
      %p206 = pneg %p200
      %p207 = scmp.eq.s32.totalorder %s28, 1
      %p208 = por %p206, %p207
      %p209 = scmp.ne.s32.totalorder %s201, %s204
      %p210 = scmp.eq.s32.totalorder %s28, 0
      %p211 = por %p209, %p210
      %p212 = scmp.ne.s32.totalorder %s201, %s204
      %p213 = scmp.eq.s32.totalorder %s33, 1
      %p214 = por %p212, %p213
      %p215 = scmp.ne.s32.totalorder %s204, %s205
      %p216 = scmp.eq.s32.totalorder %s33, 0
      %p217 = por %p215, %p216
      %p218 = scmp.ne.s32.totalorder %s204, %s205
      %p219 = scmp.eq.s32.totalorder %s34, 1
      %p220 = por %p218, %p219
      %p222 = scmp.ne.s32.totalorder %s205, %s221
      %p223 = scmp.eq.s32.totalorder %s34, 0
      %p224 = por %p222, %p223
      %s225 = ssub.s32 %s36, %s43
      %p226 = scmp.eq.s32.totalorder %s225, 0
      %s228 = sadd.s32 %s227, 1
      %s229 = scalar_select %p226, %s227, %s228
      %p232 = pneg %p226
      %p233 = scmp.eq.s32.totalorder %s28, 1
      %p234 = por %p232, %p233
      %p235 = scmp.ne.s32.totalorder %s227, %s230
      %p236 = scmp.eq.s32.totalorder %s28, 0
      %p237 = por %p235, %p236
      %p238 = scmp.ne.s32.totalorder %s227, %s230
      %p239 = scmp.eq.s32.totalorder %s33, 1
      %p240 = por %p238, %p239
      %p241 = scmp.ne.s32.totalorder %s230, %s231
      %p242 = scmp.eq.s32.totalorder %s33, 0
      %p243 = por %p241, %p242
      %p244 = scmp.ne.s32.totalorder %s230, %s231
      %p245 = scmp.eq.s32.totalorder %s34, 1
      %p246 = por %p244, %p245
      %p248 = scmp.ne.s32.totalorder %s231, %s247
      %p249 = scmp.eq.s32.totalorder %s34, 0
      %p250 = por %p248, %p249
      %s251 = ssub.s32 %s36, %s43
      %p252 = scmp.eq.s32.totalorder %s251, 0
      %s254 = sadd.s32 %s253, 1
      %s255 = scalar_select %p252, %s253, %s254
      %p258 = pneg %p252
      %p259 = scmp.eq.s32.totalorder %s28, 1
      %p260 = por %p258, %p259
      %p261 = scmp.ne.s32.totalorder %s253, %s256
      %p262 = scmp.eq.s32.totalorder %s28, 0
      %p263 = por %p261, %p262
      %p264 = scmp.ne.s32.totalorder %s253, %s256
      %p265 = scmp.eq.s32.totalorder %s33, 1
      %p266 = por %p264, %p265
      %p267 = scmp.ne.s32.totalorder %s256, %s257
      %p268 = scmp.eq.s32.totalorder %s33, 0
      %p269 = por %p267, %p268
      %p270 = scmp.ne.s32.totalorder %s256, %s257
      %p271 = scmp.eq.s32.totalorder %s34, 1
      %p272 = por %p270, %p271
      %p274 = scmp.ne.s32.totalorder %s257, %s273
      %p275 = scmp.eq.s32.totalorder %s34, 0
      %p276 = por %p274, %p275
      %s277 = ssub.s32 %s36, %s43
      %p278 = scmp.eq.s32.totalorder %s277, 0
      %s280 = sadd.s32 %s279, 1
      %s281 = scalar_select %p278, %s279, %s280
      %p284 = pneg %p278
      %p285 = scmp.eq.s32.totalorder %s28, 1
      %p286 = por %p284, %p285
      %p287 = scmp.ne.s32.totalorder %s279, %s282
      %p288 = scmp.eq.s32.totalorder %s28, 0
      %p289 = por %p287, %p288
      %p290 = scmp.ne.s32.totalorder %s279, %s282
      %p291 = scmp.eq.s32.totalorder %s33, 1
      %p292 = por %p290, %p291
      %p293 = scmp.ne.s32.totalorder %s282, %s283
      %p294 = scmp.eq.s32.totalorder %s33, 0
      %p295 = por %p293, %p294
      %p296 = scmp.ne.s32.totalorder %s282, %s283
      %p297 = scmp.eq.s32.totalorder %s34, 1
      %p298 = por %p296, %p297
      %p300 = scmp.ne.s32.totalorder %s283, %s299
      %p301 = scmp.eq.s32.totalorder %s34, 0
      %p302 = por %p300, %p301
      %s303 = ssub.s32 %s36, %s43
      %p304 = scmp.eq.s32.totalorder %s303, 0
      %s306 = sadd.s32 %s305, 1
      %s307 = scalar_select %p304, %s305, %s306
      %p310 = pneg %p304
      %p311 = scmp.eq.s32.totalorder %s28, 1
      %p312 = por %p310, %p311
      %p313 = scmp.ne.s32.totalorder %s305, %s308
      %p314 = scmp.eq.s32.totalorder %s28, 0
      %p315 = por %p313, %p314
      %p316 = scmp.ne.s32.totalorder %s305, %s308
      %p317 = scmp.eq.s32.totalorder %s33, 1
      %p318 = por %p316, %p317
      %p319 = scmp.ne.s32.totalorder %s308, %s309
      %p320 = scmp.eq.s32.totalorder %s33, 0
      %p321 = por %p319, %p320
      %p322 = scmp.ne.s32.totalorder %s308, %s309
      %p323 = scmp.eq.s32.totalorder %s34, 1
      %p324 = por %p322, %p323
      %p326 = scmp.ne.s32.totalorder %s309, %s325
      %p327 = scmp.eq.s32.totalorder %s34, 0
      %p328 = por %p326, %p327
      %s329 = ssub.s32 %s36, %s43
      %p330 = scmp.eq.s32.totalorder %s329, 0
      %s332 = sadd.s32 %s331, 1
      %s333 = scalar_select %p330, %s331, %s332
      %p336 = pneg %p330
      %p337 = scmp.eq.s32.totalorder %s28, 1
      %p338 = por %p336, %p337
      %p339 = scmp.ne.s32.totalorder %s331, %s334
      %p340 = scmp.eq.s32.totalorder %s28, 0
      %p341 = por %p339, %p340
      %p342 = scmp.ne.s32.totalorder %s331, %s334
      %p343 = scmp.eq.s32.totalorder %s33, 1
      %p344 = por %p342, %p343
      %p345 = scmp.ne.s32.totalorder %s334, %s335
      %p346 = scmp.eq.s32.totalorder %s33, 0
      %p347 = por %p345, %p346
      %p348 = scmp.ne.s32.totalorder %s334, %s335
      %p349 = scmp.eq.s32.totalorder %s34, 1
      %p350 = por %p348, %p349
      %p352 = scmp.ne.s32.totalorder %s335, %s351
      %p353 = scmp.eq.s32.totalorder %s34, 0
      %p354 = por %p352, %p353
      %s355 = ssub.s32 %s36, %s43
      %p356 = scmp.eq.s32.totalorder %s355, 0
      %s358 = sadd.s32 %s357, 1
      %s359 = scalar_select %p356, %s357, %s358
      %p362 = pneg %p356
      %p363 = scmp.eq.s32.totalorder %s28, 1
      %p364 = por %p362, %p363
      %p365 = scmp.ne.s32.totalorder %s357, %s360
      %p366 = scmp.eq.s32.totalorder %s28, 0
      %p367 = por %p365, %p366
      %p368 = scmp.ne.s32.totalorder %s357, %s360
      %p369 = scmp.eq.s32.totalorder %s33, 1
      %p370 = por %p368, %p369
      %p371 = scmp.ne.s32.totalorder %s360, %s361
      %p372 = scmp.eq.s32.totalorder %s33, 0
      %p373 = por %p371, %p372
      %p374 = scmp.ne.s32.totalorder %s360, %s361
      %p375 = scmp.eq.s32.totalorder %s34, 1
      %p376 = por %p374, %p375
      %p378 = scmp.ne.s32.totalorder %s361, %s377
      %p379 = scmp.eq.s32.totalorder %s34, 0
      %p380 = por %p378, %p379
      %s381 = ssub.s32 %s36, %s43
      %p382 = scmp.eq.s32.totalorder %s381, 0
      %s384 = sadd.s32 %s383, 1
      %s385 = scalar_select %p382, %s383, %s384
      %p388 = pneg %p382
      %p389 = scmp.eq.s32.totalorder %s28, 1
      %p390 = por %p388, %p389
      %p391 = scmp.ne.s32.totalorder %s383, %s386
      %p392 = scmp.eq.s32.totalorder %s28, 0
      %p393 = por %p391, %p392
      %p394 = scmp.ne.s32.totalorder %s383, %s386
      %p395 = scmp.eq.s32.totalorder %s33, 1
      %p396 = por %p394, %p395
      %p397 = scmp.ne.s32.totalorder %s386, %s387
      %p398 = scmp.eq.s32.totalorder %s33, 0
      %p399 = por %p397, %p398
      %p400 = scmp.ne.s32.totalorder %s386, %s387
      %p401 = scmp.eq.s32.totalorder %s34, 1
      %p402 = por %p400, %p401
      %p404 = scmp.ne.s32.totalorder %s387, %s403
      %p405 = scmp.eq.s32.totalorder %s34, 0
      %p406 = por %p404, %p405
      %s408 = sadd.s32 %s407, 1
      %p411 = scmp.eq.s32.totalorder %s28, 1
      %p412 = scmp.ne.s32.totalorder %s407, %s409
      %p413 = scmp.eq.s32.totalorder %s28, 0
      %p414 = por %p412, %p413
      %p415 = scmp.ne.s32.totalorder %s407, %s409
      %p416 = scmp.eq.s32.totalorder %s33, 1
      %p417 = por %p415, %p416
      %p418 = scmp.ne.s32.totalorder %s409, %s410
      %p419 = scmp.eq.s32.totalorder %s33, 0
      %p420 = por %p418, %p419
      %p421 = scmp.ne.s32.totalorder %s409, %s410
      %p422 = scmp.eq.s32.totalorder %s34, 1
      %p423 = por %p421, %p422
      %p425 = scmp.ne.s32.totalorder %s410, %s424
      %p426 = scmp.eq.s32.totalorder %s34, 0
      %p427 = por %p425, %p426
      %s429 = sadd.s32 %s428, 1
      %p432 = scmp.eq.s32.totalorder %s28, 1
      %p433 = scmp.ne.s32.totalorder %s428, %s430
      %p434 = scmp.eq.s32.totalorder %s28, 0
      %p435 = por %p433, %p434
      %p436 = scmp.ne.s32.totalorder %s428, %s430
      %p437 = scmp.eq.s32.totalorder %s33, 1
      %p438 = por %p436, %p437
      %p439 = scmp.ne.s32.totalorder %s430, %s431
      %p440 = scmp.eq.s32.totalorder %s33, 0
      %p441 = por %p439, %p440
      %p442 = scmp.ne.s32.totalorder %s430, %s431
      %p443 = scmp.eq.s32.totalorder %s34, 1
      %p444 = por %p442, %p443
      %p446 = scmp.ne.s32.totalorder %s431, %s445
      %p447 = scmp.eq.s32.totalorder %s34, 0
      %p448 = por %p446, %p447
      %s449 = ssub.s32 %s35, %s47
      %p450 = scmp.eq.s32.totalorder %s449, 0
      %s452 = sadd.s32 %s451, 1
      %s453 = scalar_select %p450, %s451, %s452
      %p456 = pneg %p450
      %p457 = scmp.eq.s32.totalorder %s28, 1
      %p458 = por %p456, %p457
      %p459 = scmp.ne.s32.totalorder %s451, %s454
      %p460 = scmp.eq.s32.totalorder %s28, 0
      %p461 = por %p459, %p460
      %p462 = scmp.ne.s32.totalorder %s451, %s454
      %p463 = scmp.eq.s32.totalorder %s33, 1
      %p464 = por %p462, %p463
      %p465 = scmp.ne.s32.totalorder %s454, %s455
      %p466 = scmp.eq.s32.totalorder %s33, 0
      %p467 = por %p465, %p466
      %p468 = scmp.ne.s32.totalorder %s454, %s455
      %p469 = scmp.eq.s32.totalorder %s34, 1
      %p470 = por %p468, %p469
      %p472 = scmp.ne.s32.totalorder %s455, %s471
      %p473 = scmp.eq.s32.totalorder %s34, 0
      %p474 = por %p472, %p473
      %p475 = scmp.le.s32.totalorder 1, %s28
      %p476 = scmp.lt.s32.totalorder %s28, 3
      %p477 = pnand %p475, %p476
      %p478 = pneg %p477
      // Predicated region
      $region9: #{idea_decoder_forward.2} parent=5 // pred_check
        _
      $region10: #{idea_decoder_forward.2} parent=5 // pred_check_branch
        %480 = sbr.rel (%p477) target = $region12
      $region11: #{idea_decoder_forward.2} parent=5 // pred_region
        %s481 = ssub.s32 %s28, 1
        // Predicated region
        $region13: #{idea_decoder_forward.2} parent=11 // pred_check
          %p482 = pneg %p66
        $region14: #{idea_decoder_forward.2} parent=11 // pred_check_branch
          %484 = sbr.rel (%p482) target = $region16
        $region15: #{idea_decoder_forward.2} parent=11 // pred_region
          %s485 = smul.u32 2, %s37
          %p486 = scmp.lt.s32.totalorder %s485, 1
          %s487 = scalar_select %p486, %s485, 1
          %s488 = smul.addr %s487, 2
          %s489 = smul.addr %s488, 4
          %s490 = scalar_lea.vmem %s0, %s489
          %s491 = smul.u32 2, %s37
        $region16: #{idea_decoder_forward.2} parent=11 // pred_fallthru
          _
        // Predicated region
        $region17: #{idea_decoder_forward.2} parent=11 // pred_check
          %p492 = pneg %p87
        $region18: #{idea_decoder_forward.2} parent=11 // pred_check_branch
          %494 = sbr.rel (%p492) target = $region20
        $region19: #{idea_decoder_forward.2} parent=11 // pred_region
          _
        $region20: #{idea_decoder_forward.2} parent=11 // pred_fallthru
          _
        // Predicated region
        $region21: #{idea_decoder_forward.2} parent=11 // pred_check
          %p495 = pneg %p420
        $region22: #{idea_decoder_forward.2} parent=11 // pred_check_branch
          %497 = sbr.rel (%p495) target = $region24
        $region23: #{idea_decoder_forward.2} parent=11 // pred_region
          _
        $region24: #{idea_decoder_forward.2} parent=11 // pred_fallthru
          _
        // Predicated region
        $region25: #{idea_decoder_forward.2} parent=11 // pred_check
          %p498 = pneg %p441
        $region26: #{idea_decoder_forward.2} parent=11 // pred_check_branch
          %500 = sbr.rel (%p498) target = $region28
        $region27: #{idea_decoder_forward.2} parent=11 // pred_region
          _
        $region28: #{idea_decoder_forward.2} parent=11 // pred_fallthru
          _
      $region12: #{idea_decoder_forward.2} parent=5 // pred_fallthru
        _
      %p501 = scmp.lt.s32.totalorder %s28, 2
      // Predicated region
      $region29: #{idea_decoder_forward.2} parent=5 // pred_check
        %p502 = pneg %p501
      $region30: #{idea_decoder_forward.2} parent=5 // pred_check_branch
        %504 = sbr.rel (%p502) target = $region32
      $region31: #{idea_decoder_forward.2} parent=5 // pred_region
        // Predicated region
        $region33: #{idea_decoder_forward.2} parent=31 // pred_check
          %p505 = pneg %p107
        $region34: #{idea_decoder_forward.2} parent=31 // pred_check_branch
          %507 = sbr.rel (%p505) target = $region36
        $region35: #{idea_decoder_forward.2} parent=31 // pred_region
          %p508 = scmp.lt.s32.totalorder %s36, 1
          %s509 = scalar_select %p508, %s36, 1
          %s510 = scalar_lea.vmem %s2, %s509
        $region36: #{idea_decoder_forward.2} parent=31 // pred_fallthru
          _
        // Predicated region
        $region37: #{idea_decoder_forward.2} parent=31 // pred_check
          %p511 = pneg %p133
        $region38: #{idea_decoder_forward.2} parent=31 // pred_check_branch
          %513 = sbr.rel (%p511) target = $region40
        $region39: #{idea_decoder_forward.2} parent=31 // pred_region
          %p514 = scmp.lt.s32.totalorder %s36, 1
          %s515 = scalar_select %p514, %s36, 1
          %s516 = scalar_lea.vmem %s3, %s515
        $region40: #{idea_decoder_forward.2} parent=31 // pred_fallthru
          _
        // Predicated region
        $region41: #{idea_decoder_forward.2} parent=31 // pred_check
          %p517 = pneg %p159
        $region42: #{idea_decoder_forward.2} parent=31 // pred_check_branch
          %519 = sbr.rel (%p517) target = $region44
        $region43: #{idea_decoder_forward.2} parent=31 // pred_region
          %p520 = scmp.lt.s32.totalorder %s36, 1
          %s521 = scalar_select %p520, %s36, 1
          %s522 = smul.addr %s521, 48
          %s523 = smul.addr %s522, 4
          %s524 = scalar_lea.vmem %s4, %s523
        $region44: #{idea_decoder_forward.2} parent=31 // pred_fallthru
          _
        // Predicated region
        $region45: #{idea_decoder_forward.2} parent=31 // pred_check
          %p525 = pneg %p185
        $region46: #{idea_decoder_forward.2} parent=31 // pred_check_branch
          %527 = sbr.rel (%p525) target = $region48
        $region47: #{idea_decoder_forward.2} parent=31 // pred_region
          %p528 = scmp.lt.s32.totalorder %s36, 1
          %s529 = scalar_select %p528, %s36, 1
          %s530 = smul.addr %s529, 3
          %s531 = scalar_lea.vmem %s5, %s530
        $region48: #{idea_decoder_forward.2} parent=31 // pred_fallthru
          _
        // Predicated region
        $region49: #{idea_decoder_forward.2} parent=31 // pred_check
          %p532 = pneg %p211
        $region50: #{idea_decoder_forward.2} parent=31 // pred_check_branch
          %534 = sbr.rel (%p532) target = $region52
        $region51: #{idea_decoder_forward.2} parent=31 // pred_region
          %s535 = sand.u32 %s201, 1
          %s536 = scalar_lea.sflag [#allocation4], %s535
          %s537 = sand.u32 %s201, 1
          %s538 = smul.addr %s537, 64
          %s539 = scalar_lea.vmem [#allocation3], %s538
          %s541 = ssub.s32 1024, 1024
          %542 = vsyncadd %s536, %s541
          %s543 = smul.addr %s36, 16
          %s544 = smul.addr %s543, 64
          %s545 = scalar_lea.hbm %s6, %s544
          %s546 = sshll.u32 %s539, 4
          %s547 = int_to_ptr.vmem [resolvable:$true] %s546
          %552 = dma.hbm_to_vmem [thread:$0]  %s545, 1024, %s547, %s536, 64, 64, 4
        $region52: #{idea_decoder_forward.2} parent=31 // pred_fallthru
          _
        // Predicated region
        $region53: #{idea_decoder_forward.2} parent=31 // pred_check
          %p553 = pneg %p237
        $region54: #{idea_decoder_forward.2} parent=31 // pred_check_branch
          %555 = sbr.rel (%p553) target = $region56
        $region55: #{idea_decoder_forward.2} parent=31 // pred_region
          %p556 = scmp.lt.s32.totalorder %s36, 1
          %s557 = scalar_select %p556, %s36, 1
          %s558 = scalar_lea.vmem %s7, %s557
        $region56: #{idea_decoder_forward.2} parent=31 // pred_fallthru
          _
        // Predicated region
        $region57: #{idea_decoder_forward.2} parent=31 // pred_check
          %p559 = pneg %p263
        $region58: #{idea_decoder_forward.2} parent=31 // pred_check_branch
          %561 = sbr.rel (%p559) target = $region60
        $region59: #{idea_decoder_forward.2} parent=31 // pred_region
          %p562 = scmp.lt.s32.totalorder %s36, 1
          %s563 = scalar_select %p562, %s36, 1
          %s564 = scalar_lea.vmem %s8, %s563
        $region60: #{idea_decoder_forward.2} parent=31 // pred_fallthru
          _
        // Predicated region
        $region61: #{idea_decoder_forward.2} parent=31 // pred_check
          %p565 = pneg %p289
        $region62: #{idea_decoder_forward.2} parent=31 // pred_check_branch
          %567 = sbr.rel (%p565) target = $region64
        $region63: #{idea_decoder_forward.2} parent=31 // pred_region
          %p568 = scmp.lt.s32.totalorder %s36, 1
          %s569 = scalar_select %p568, %s36, 1
          %s570 = scalar_lea.vmem %s9, %s569
        $region64: #{idea_decoder_forward.2} parent=31 // pred_fallthru
          _
        // Predicated region
        $region65: #{idea_decoder_forward.2} parent=31 // pred_check
          %p571 = pneg %p315
        $region66: #{idea_decoder_forward.2} parent=31 // pred_check_branch
          %573 = sbr.rel (%p571) target = $region68
        $region67: #{idea_decoder_forward.2} parent=31 // pred_region
          %s574 = sand.u32 %s28, 1
          %s575 = scalar_lea.sflag [#allocation6], %s574
          %s576 = sand.u32 %s305, 1
          %s577 = smul.addr %s576, 256
          %s578 = scalar_lea.vmem [#allocation5], %s577
          %s580 = ssub.s32 4096, 4096
          %581 = vsyncadd %s575, %s580
          %s582 = smul.addr %s36, 64
          %s583 = smul.addr %s582, 64
          %s584 = scalar_lea.hbm %s10, %s583
          %s585 = sshll.u32 %s578, 4
          %s586 = int_to_ptr.vmem [resolvable:$true] %s585
          %591 = dma.hbm_to_vmem [thread:$0]  %s584, 4096, %s586, %s575, 256, 256, 16
        $region68: #{idea_decoder_forward.2} parent=31 // pred_fallthru
          _
        // Predicated region
        $region69: #{idea_decoder_forward.2} parent=31 // pred_check
          %p592 = pneg %p341
        $region70: #{idea_decoder_forward.2} parent=31 // pred_check_branch
          %594 = sbr.rel (%p592) target = $region72
        $region71: #{idea_decoder_forward.2} parent=31 // pred_region
          %p595 = scmp.lt.s32.totalorder %s36, 1
          %s596 = scalar_select %p595, %s36, 1
          %s597 = smul.addr %s596, 4
          %s598 = scalar_lea.vmem %s11, %s597
        $region72: #{idea_decoder_forward.2} parent=31 // pred_fallthru
          _
        // Predicated region
        $region73: #{idea_decoder_forward.2} parent=31 // pred_check
          %p599 = pneg %p367
        $region74: #{idea_decoder_forward.2} parent=31 // pred_check_branch
          %601 = sbr.rel (%p599) target = $region76
        $region75: #{idea_decoder_forward.2} parent=31 // pred_region
          %s602 = sand.u32 %s28, 1
          %s603 = scalar_lea.sflag [#allocation6], %s602
          %s604 = sand.u32 %s357, 1
          %s605 = smul.addr %s604, 256
          %s606 = scalar_lea.vmem [#allocation7], %s605
          %s608 = ssub.s32 4096, 4096
          %609 = vsyncadd %s603, %s608
          %s610 = smul.addr %s36, 64
          %s611 = smul.addr %s610, 64
          %s612 = scalar_lea.hbm %s12, %s611
          %s613 = sshll.u32 %s606, 4
          %s614 = int_to_ptr.vmem [resolvable:$true] %s613
          %619 = dma.hbm_to_vmem [thread:$0]  %s612, 4096, %s614, %s603, 64, 64, 4
        $region76: #{idea_decoder_forward.2} parent=31 // pred_fallthru
          _
        // Predicated region
        $region77: #{idea_decoder_forward.2} parent=31 // pred_check
          %p620 = pneg %p393
        $region78: #{idea_decoder_forward.2} parent=31 // pred_check_branch
          %622 = sbr.rel (%p620) target = $region80
        $region79: #{idea_decoder_forward.2} parent=31 // pred_region
          %p623 = scmp.lt.s32.totalorder %s36, 1
          %s624 = scalar_select %p623, %s36, 1
          %s625 = scalar_lea.vmem %s13, %s624
        $region80: #{idea_decoder_forward.2} parent=31 // pred_fallthru
          _
      $region32: #{idea_decoder_forward.2} parent=5 // pred_fallthru
        _
      %p626 = scmp.le.s32.totalorder 1, %s28
      %p627 = scmp.lt.s32.totalorder %s28, 3
      %p628 = pnand %p626, %p627
      %p629 = pneg %p628
      // Predicated region
      $region81: #{idea_decoder_forward.2} parent=5 // pred_check
        _
      $region82: #{idea_decoder_forward.2} parent=5 // pred_check_branch
        %631 = sbr.rel (%p628) target = $region84
      $region83: #{idea_decoder_forward.2} parent=5 // pred_region
        %s632 = ssub.s32 %s28, 1
        %s633 = sand.u32 %s204, 1
        %s634 = scalar_lea.sflag [#allocation4], %s633
        %s635 = sand.u32 %s204, 1
        %s636 = smul.addr %s635, 64
        %s637 = scalar_lea.vmem [#allocation3], %s636
        // Predicated region
        $region85: #{idea_decoder_forward.2} parent=83 // pred_check
          %p638 = pneg %p217
        $region86: #{idea_decoder_forward.2} parent=83 // pred_check_branch
          %640 = sbr.rel (%p638) target = $region88
        $region87: #{idea_decoder_forward.2} parent=83 // pred_region
          %641 = dma.done %s634, 1024
        $region88: #{idea_decoder_forward.2} parent=83 // pred_fallthru
          _
        %s642 = sand.u32 %s33, 1
        %s643 = scalar_lea.sflag [#allocation6], %s642
        %s644 = sand.u32 %s308, 1
        %s645 = smul.addr %s644, 256
        %s646 = scalar_lea.vmem [#allocation5], %s645
        // Predicated region
        $region89: #{idea_decoder_forward.2} parent=83 // pred_check
          %p647 = pneg %p321
        $region90: #{idea_decoder_forward.2} parent=83 // pred_check_branch
          %649 = sbr.rel (%p647) target = $region92
        $region91: #{idea_decoder_forward.2} parent=83 // pred_region
          %650 = dma.done %s643, 4096
        $region92: #{idea_decoder_forward.2} parent=83 // pred_fallthru
          _
        %s651 = sand.u32 %s33, 1
        %s652 = scalar_lea.sflag [#allocation6], %s651
        %s653 = sand.u32 %s360, 1
        %s654 = smul.addr %s653, 256
        %s655 = scalar_lea.vmem [#allocation7], %s654
        // Predicated region
        $region93: #{idea_decoder_forward.2} parent=83 // pred_check
          %p656 = pneg %p373
        $region94: #{idea_decoder_forward.2} parent=83 // pred_check_branch
          %658 = sbr.rel (%p656) target = $region96
        $region95: #{idea_decoder_forward.2} parent=83 // pred_region
          %659 = dma.done %s652, 4096
        $region96: #{idea_decoder_forward.2} parent=83 // pred_fallthru
          _
        %s660 = smul.u32 2, %s37
        %p661 = scmp.lt.s32.totalorder %s660, 1
        %s662 = scalar_select %p661, %s660, 1
        %s663 = smul.addr %s662, 2
        %s664 = smul.addr %s663, 4
        %s665 = scalar_lea.vmem %s0, %s664
        %p666 = pneg %p66
        %p667 = pneg %p63
        %p668 = pneg %p87
        %p669 = pneg %p84
        %p670 = scmp.lt.s32.totalorder %s38, 1
        %s671 = scalar_select %p670, %s38, 1
        %s672 = scalar_lea.vmem %s2, %s671
        %p673 = pneg %p113
        %p674 = pneg %p110
        %p675 = scmp.lt.s32.totalorder %s38, 1
        %s676 = scalar_select %p675, %s38, 1
        %s677 = scalar_lea.vmem %s3, %s676
        %p678 = pneg %p139
        %p679 = pneg %p136
        %p680 = scmp.lt.s32.totalorder %s38, 1
        %s681 = scalar_select %p680, %s38, 1
        %s682 = smul.addr %s681, 48
        %s683 = smul.addr %s682, 4
        %s684 = scalar_lea.vmem %s4, %s683
        %p685 = pneg %p165
        %p686 = pneg %p162
        %p687 = scmp.lt.s32.totalorder %s38, 1
        %s688 = scalar_select %p687, %s38, 1
        %s689 = smul.addr %s688, 3
        %s690 = scalar_lea.vmem %s5, %s689
        %p691 = pneg %p191
        %p692 = pneg %p188
        %s693 = sand.u32 %s204, 1
        %s694 = scalar_lea.sflag [#allocation4], %s693
        %s695 = sand.u32 %s204, 1
        %s696 = smul.addr %s695, 64
        %s697 = scalar_lea.vmem [#allocation3], %s696
        %p698 = pneg %p217
        %p699 = pneg %p214
        %p700 = scmp.lt.s32.totalorder %s38, 1
        %s701 = scalar_select %p700, %s38, 1
        %s702 = scalar_lea.vmem %s7, %s701
        %p703 = pneg %p243
        %p704 = pneg %p240
        %p705 = scmp.lt.s32.totalorder %s38, 1
        %s706 = scalar_select %p705, %s38, 1
        %s707 = scalar_lea.vmem %s8, %s706
        %p708 = pneg %p269
        %p709 = pneg %p266
        %p710 = scmp.lt.s32.totalorder %s38, 1
        %s711 = scalar_select %p710, %s38, 1
        %s712 = scalar_lea.vmem %s9, %s711
        %p713 = pneg %p295
        %p714 = pneg %p292
        %s715 = sand.u32 %s33, 1
        %s716 = scalar_lea.sflag [#allocation6], %s715
        %s717 = sand.u32 %s308, 1
        %s718 = smul.addr %s717, 256
        %s719 = scalar_lea.vmem [#allocation5], %s718
        %p720 = pneg %p321
        %p721 = pneg %p318
        %p722 = scmp.lt.s32.totalorder %s38, 1
        %s723 = scalar_select %p722, %s38, 1
        %s724 = smul.addr %s723, 4
        %s725 = scalar_lea.vmem %s11, %s724
        %p726 = pneg %p347
        %p727 = pneg %p344
        %s728 = sand.u32 %s33, 1
        %s729 = scalar_lea.sflag [#allocation6], %s728
        %s730 = sand.u32 %s360, 1
        %s731 = smul.addr %s730, 256
        %s732 = scalar_lea.vmem [#allocation7], %s731
        %p733 = pneg %p373
        %p734 = pneg %p370
        %p735 = scmp.lt.s32.totalorder %s38, 1
        %s736 = scalar_select %p735, %s38, 1
        %s737 = scalar_lea.vmem %s13, %s736
        %p738 = pneg %p399
        %p739 = pneg %p396
        %p740 = pneg %p420
        %p741 = pneg %p417
        %p742 = pneg %p441
        %p743 = pneg %p438
        %p744 = pneg %p467
        %p745 = pneg %p464
        %s746 = smul.u32 2, %s37
        %p747 = scmp.lt.s32.totalorder %s746, 1
        %s748 = scalar_select %p747, %s746, 1
        %s749 = smul.addr %s748, 2
        %s750 = smul.addr %s749, 4
        %s751 = scalar_lea.vmem %s16, %s750
        %s752 = smul.u32 2, %s37
        %p753 = scmp.lt.s32.totalorder %s752, 1
        %s754 = scalar_select %p753, %s752, 1
        %s755 = smul.addr %s754, 2
        %s756 = smul.addr %s755, 4
        %s757 = scalar_lea.vmem %s0, %s756
        %s758 = smul.u32 2, %s37
        %p759 = scmp.lt.s32.totalorder %s38, 1
        %s760 = scalar_select %p759, %s38, 1
        %s761 = scalar_lea.vmem %s2, %s760
        %p762 = scmp.lt.s32.totalorder %s38, 1
        %s763 = scalar_select %p762, %s38, 1
        %s764 = scalar_lea.vmem %s3, %s763
        %p765 = scmp.lt.s32.totalorder %s38, 1
        %s766 = scalar_select %p765, %s38, 1
        %s767 = smul.addr %s766, 48
        %s768 = smul.addr %s767, 4
        %s769 = scalar_lea.vmem %s4, %s768
        %p770 = scmp.lt.s32.totalorder %s38, 1
        %s771 = scalar_select %p770, %s38, 1
        %s772 = smul.addr %s771, 3
        %s773 = scalar_lea.vmem %s5, %s772
        %p774 = scmp.lt.s32.totalorder %s38, 1
        %s775 = scalar_select %p774, %s38, 1
        %s776 = scalar_lea.vmem %s7, %s775
        %p777 = scmp.lt.s32.totalorder %s38, 1
        %s778 = scalar_select %p777, %s38, 1
        %s779 = scalar_lea.vmem %s8, %s778
        %p780 = scmp.lt.s32.totalorder %s38, 1
        %s781 = scalar_select %p780, %s38, 1
        %s782 = scalar_lea.vmem %s9, %s781
        %p783 = scmp.lt.s32.totalorder %s38, 1
        %s784 = scalar_select %p783, %s38, 1
        %s785 = smul.addr %s784, 4
        %s786 = scalar_lea.vmem %s11, %s785
        %p787 = scmp.lt.s32.totalorder %s38, 1
        %s788 = scalar_select %p787, %s38, 1
        %s789 = scalar_lea.vmem %s13, %s788
        %s790 = smul.u32 2, %s37
        %p791 = scmp.lt.s32.totalorder %s790, 1
        %s792 = scalar_select %p791, %s790, 1
        %s793 = smul.addr %s792, 2
        %s794 = smul.addr %s793, 4
        %s795 = scalar_lea.vmem %s16, %s794
        %s796 = smul.u32 2, %s37
        %p799 = scmp.eq.s32.totalorder %s38, 0
        // Predicated region
        $region97: #{idea_decoder_forward.2} parent=83 // pred_check
          %p800 = pneg %p799
        $region98: #{idea_decoder_forward.2} parent=83 // pred_check_branch
          %802 = sbr.rel (%p800) target = $region100
        $region99: #{idea_decoder_forward.2} parent=83 // pred_region
          %v803 = vld [vmem:[%s757] sm:$0xf]
          %v804 = vld [vmem:[%s757 + $0x4] sm:$0xf]
          %v805 = vld [vmem:[%s757 + $0x8] sm:$0xf]
          %v806 = vld [vmem:[%s757 + $0xc] sm:$0xf]
          %v807 = vunpack.c.l.bf16 %v803
          %v808 = vunpack.c.l.bf16 %v804
          %v809 = vunpack.c.l.bf16 %v805
          %v810 = vunpack.c.l.bf16 %v806
          %811 = vst [vmem:[#allocation2] sm:$0xff] %v807
          %812 = vst [vmem:[#allocation2 + $0x8] sm:$0xff] %v808
          %813 = vst [vmem:[#allocation2 + $0x10] sm:$0xff] %v809
          %814 = vst [vmem:[#allocation2 + $0x18] sm:$0xff] %v810
        $region100: #{idea_decoder_forward.2} parent=83 // pred_fallthru
          _
        %v815 = vld [vmem:[#allocation2] sm:$0xff]
        %v816 = vld [vmem:[#allocation2 + $0x8] sm:$0xff]
        %v817 = vld [vmem:[#allocation2 + $0x10] sm:$0xff]
        %v818 = vld [vmem:[#allocation2 + $0x18] sm:$0xff]
        %v819 = vld [vmem:[%s761] sm:$0x1]
        %v820 = vld [vmem:[%s764] sm:$0x1]
        %821 = vadd.xlane.f32.xlu0 %v815
        %v822 = vpop.xlane.xlu0 %821
        %823 = vadd.xlane.f32.xlu0 %v816
        %v824 = vpop.xlane.xlu0 %823
        %825 = vadd.xlane.f32.xlu0 %v817
        %v826 = vpop.xlane.xlu0 %825
        %827 = vadd.xlane.f32.xlu0 %v818
        %v828 = vpop.xlane.xlu0 %827
        %v829 = vrcp.pop 128.0
        %v830 = vmul.f32 %v822, %v829
        %v831 = vmul.f32 %v824, %v829
        %v832 = vmul.f32 %v826, %v829
        %v833 = vmul.f32 %v828, %v829
        %v834 = vsub.f32 %v815, %v830
        %v835 = vsub.f32 %v816, %v831
        %v836 = vsub.f32 %v817, %v832
        %v837 = vsub.f32 %v818, %v833
        %v838 = vmul.f32 %v834, %v834
        %v839 = vmul.f32 %v835, %v835
        %v840 = vmul.f32 %v836, %v836
        %v841 = vmul.f32 %v837, %v837
        %842 = vadd.xlane.f32.xlu0 %v838
        %v843 = vpop.xlane.xlu0 %842
        %844 = vadd.xlane.f32.xlu0 %v839
        %v845 = vpop.xlane.xlu0 %844
        %846 = vadd.xlane.f32.xlu0 %v840
        %v847 = vpop.xlane.xlu0 %846
        %848 = vadd.xlane.f32.xlu0 %v841
        %v849 = vpop.xlane.xlu0 %848
        %v850 = vmul.f32 %v843, %v829
        %v851 = vmul.f32 %v845, %v829
        %v852 = vmul.f32 %v847, %v829
        %v853 = vmul.f32 %v849, %v829
        %v854 = vadd.f32 %v850, 1e-05
        %v855 = vadd.f32 %v851, 1e-05
        %v856 = vadd.f32 %v852, 1e-05
        %v857 = vadd.f32 %v853, 1e-05
        %v858 = vrsqrt.pop %v854
        %v859 = vrsqrt.pop %v855
        %v860 = vrsqrt.pop %v856
        %v861 = vrsqrt.pop %v857
        %v862 = vmul.f32 %v834, %v858
        %v863 = vmul.f32 %v835, %v859
        %v864 = vmul.f32 %v836, %v860
        %v865 = vmul.f32 %v837, %v861
        %v867 = vlaneseq
        %v868 = vshrl.u32 %v867, 7
        %v869 = vsub.s32 0, %v868
        %v870 = vrot.slane %v819, %v869
        %v872 = vmul.f32 %v862, %v870
        %v873 = vmul.f32 %v863, %v870
        %v874 = vmul.f32 %v864, %v870
        %v875 = vmul.f32 %v865, %v870
        %v877 = vlaneseq
        %v878 = vshrl.u32 %v877, 7
        %v879 = vsub.s32 0, %v878
        %v880 = vrot.slane %v820, %v879
        %v882 = vadd.f32 %v872, %v880
        %v883 = vadd.f32 %v873, %v880
        %v884 = vadd.f32 %v874, %v880
        %v885 = vadd.f32 %v875, %v880
        %v886 = vpack.c.bf16 %v883, %v882
        %v887 = vpack.c.bf16 %v885, %v884
        %v888 = vld [vmem:[%s769] sm:$0xff]
        %v889 = vld [vmem:[%s769 + $0x8] sm:$0xf]
        %v890 = vld [vmem:[%s769 + $0xc] sm:$0xff]
        %v891 = vld [vmem:[%s769 + $0x14] sm:$0xf]
        %v892 = vld [vmem:[%s769 + $0x18] sm:$0xff]
        %v893 = vld [vmem:[%s769 + $0x20] sm:$0xf]
        %v894 = vld [vmem:[%s769 + $0x24] sm:$0xff]
        %v895 = vld [vmem:[%s769 + $0x2c] sm:$0xf]
        %v896 = vld [vmem:[%s769 + $0x30] sm:$0xff]
        %v897 = vld [vmem:[%s769 + $0x38] sm:$0xf]
        %v898 = vld [vmem:[%s769 + $0x3c] sm:$0xff]
        %v899 = vld [vmem:[%s769 + $0x44] sm:$0xf]
        %v900 = vld [vmem:[%s769 + $0x48] sm:$0xff]
        %v901 = vld [vmem:[%s769 + $0x50] sm:$0xf]
        %v902 = vld [vmem:[%s769 + $0x54] sm:$0xff]
        %v903 = vld [vmem:[%s769 + $0x5c] sm:$0xf]
        %v904 = vld [vmem:[%s769 + $0x60] sm:$0xff]
        %v905 = vld [vmem:[%s769 + $0x68] sm:$0xf]
        %v906 = vld [vmem:[%s769 + $0x6c] sm:$0xff]
        %v907 = vld [vmem:[%s769 + $0x74] sm:$0xf]
        %v908 = vld [vmem:[%s769 + $0x78] sm:$0xff]
        %v909 = vld [vmem:[%s769 + $0x80] sm:$0xf]
        %v910 = vld [vmem:[%s769 + $0x84] sm:$0xff]
        %v911 = vld [vmem:[%s769 + $0x8c] sm:$0xf]
        %v912 = vld [vmem:[%s769 + $0x90] sm:$0xff]
        %v913 = vld [vmem:[%s769 + $0x98] sm:$0xf]
        %v914 = vld [vmem:[%s769 + $0x9c] sm:$0xff]
        %v915 = vld [vmem:[%s769 + $0xa4] sm:$0xf]
        %v916 = vld [vmem:[%s769 + $0xa8] sm:$0xff]
        %v917 = vld [vmem:[%s769 + $0xb0] sm:$0xf]
        %v918 = vld [vmem:[%s769 + $0xb4] sm:$0xff]
        %v919 = vld [vmem:[%s769 + $0xbc] sm:$0xf]
        %v920 = vld [vmem:[%s773] sm:$0x7]
        %v921 = vunpack.c.l.bf16 %v920
        %v923 = vlaneseq
        %v924 = vshrl.u32 %v923, 7
        %v925 = vsub.s32 0, %v924
        %v926 = vrot.slane %v921, %v925
        %v927 = vlaneseq
        %v928 = vshrl.u32 %v927, 7
        %v929 = vsub.s32 2, %v928
        %v930 = vrot.slane %v921, %v929
        %v931 = vlaneseq
        %v932 = vshrl.u32 %v931, 7
        %v933 = vsub.s32 4, %v932
        %v934 = vrot.slane %v921, %v933
        %v938 = vlaneseq
        %v939 = vshrl.u32 %v938, 7
        %v940 = vsub.s32 0, %v939
        %v941 = vrot.slane %v926, %v940
        %v942 = vlaneseq
        %v943 = vshrl.u32 %v942, 7
        %v944 = vsub.s32 0, %v943
        %v945 = vrot.slane %v930, %v944
        %v946 = vlaneseq
        %v947 = vshrl.u32 %v946, 7
        %v948 = vsub.s32 0, %v947
        %v949 = vrot.slane %v934, %v948
        %v982 = vunpack.c.l.b16 %v888
        %v983 = vunpack.c.h.b16 %v888
        %v984 = vunpack.c.l.b16 %v889
        %v985 = vunpack.c.l.b16 %v890
        %v986 = vunpack.c.h.b16 %v890
        %v987 = vunpack.c.l.b16 %v891
        %v988 = vunpack.c.l.b16 %v892
        %v989 = vunpack.c.h.b16 %v892
        %v990 = vunpack.c.l.b16 %v893
        %v991 = vunpack.c.l.b16 %v894
        %v992 = vunpack.c.h.b16 %v894
        %v993 = vunpack.c.l.b16 %v895
        %v994 = vunpack.c.l.b16 %v896
        %v995 = vunpack.c.h.b16 %v896
        %v996 = vunpack.c.l.b16 %v897
        %v997 = vunpack.c.l.b16 %v898
        %v998 = vunpack.c.h.b16 %v898
        %v999 = vunpack.c.l.b16 %v899
        %v1000 = vunpack.c.l.b16 %v900
        %v1001 = vunpack.c.h.b16 %v900
        %v1002 = vunpack.c.l.b16 %v901
        %v1003 = vunpack.c.l.b16 %v902
        %v1004 = vunpack.c.h.b16 %v902
        %v1005 = vunpack.c.l.b16 %v903
        %v1006 = vunpack.c.l.b16 %v904
        %v1007 = vunpack.c.h.b16 %v904
        %v1008 = vunpack.c.l.b16 %v905
        %v1009 = vunpack.c.l.b16 %v906
        %v1010 = vunpack.c.h.b16 %v906
        %v1011 = vunpack.c.l.b16 %v907
        %v1012 = vunpack.c.l.b16 %v908
        %v1013 = vunpack.c.h.b16 %v908
        %v1014 = vunpack.c.l.b16 %v909
        %v1015 = vunpack.c.l.b16 %v910
        %v1016 = vunpack.c.h.b16 %v910
        %v1017 = vunpack.c.l.b16 %v911
        %v1018 = vunpack.c.l.b16 %v912
        %v1019 = vunpack.c.h.b16 %v912
        %v1020 = vunpack.c.l.b16 %v913
        %v1021 = vunpack.c.l.b16 %v914
        %v1022 = vunpack.c.h.b16 %v914
        %v1023 = vunpack.c.l.b16 %v915
        %v1024 = vunpack.c.l.b16 %v916
        %v1025 = vunpack.c.h.b16 %v916
        %v1026 = vunpack.c.l.b16 %v917
        %v1027 = vunpack.c.l.b16 %v918
        %v1028 = vunpack.c.h.b16 %v918
        %v1029 = vunpack.c.l.b16 %v919
        %v1030 = vpack.c.b16 %v985, %v982
        %v1031 = vpack.c.b16 %v986, %v983
        %v1032 = vpack.c.b16 %v987, %v984
        %v1033 = vpack.c.b16 %v991, %v988
        %v1034 = vpack.c.b16 %v992, %v989
        %v1035 = vpack.c.b16 %v993, %v990
        %v1036 = vpack.c.b16 %v997, %v994
        %v1037 = vpack.c.b16 %v998, %v995
        %v1038 = vpack.c.b16 %v999, %v996
        %v1039 = vpack.c.b16 %v1003, %v1000
        %v1040 = vpack.c.b16 %v1004, %v1001
        %v1041 = vpack.c.b16 %v1005, %v1002
        %v1042 = vpack.c.b16 %v1009, %v1006
        %v1043 = vpack.c.b16 %v1010, %v1007
        %v1044 = vpack.c.b16 %v1011, %v1008
        %v1045 = vpack.c.b16 %v1015, %v1012
        %v1046 = vpack.c.b16 %v1016, %v1013
        %v1047 = vpack.c.b16 %v1017, %v1014
        %v1048 = vpack.c.b16 %v1021, %v1018
        %v1049 = vpack.c.b16 %v1022, %v1019
        %v1050 = vpack.c.b16 %v1023, %v1020
        %v1051 = vpack.c.b16 %v1027, %v1024
        %v1052 = vpack.c.b16 %v1028, %v1025
        %v1053 = vpack.c.b16 %v1029, %v1026
        %1078 = vmatprep.subr.bf16.mxu0 %v1031
        %1079 = vmatpush1.bf16.msra.mxu0 %v1030
        %1080 = vmatprep.subr.bf16.mxu0 %v1034
        %1081 = vmatpush1.bf16.msra.mxu0 %v1033
        %1082 = vmatprep.subr.bf16.mxu0 %v1037
        %1083 = vmatpush1.bf16.msra.mxu0 %v1036
        %1084 = vmatprep.subr.bf16.mxu0 %v1040
        %1085 = vmatpush1.bf16.msra.mxu0 %v1039
        %1086 = vmatprep.subr.bf16.mxu0 %v1043
        %1087 = vmatpush1.bf16.msra.mxu0 %v1042
        %1088 = vmatprep.subr.bf16.mxu0 %v1046
        %1089 = vmatpush1.bf16.msra.mxu0 %v1045
        %1090 = vmatprep.subr.bf16.mxu0 %v1049
        %1091 = vmatpush1.bf16.msra.mxu0 %v1048
        %1092 = vmatprep.subr.bf16.mxu0 %v1052
        %1093 = vmatpush1.bf16.msra.mxu0 %v1051
        %1094 = vmatprep.subr.bf16.mxu0 0
        %1095 = vmatpush1.bf16.msra.mxu0 0
        %1096 = vmatprep.subr.bf16.mxu0 0
        %1097 = vmatpush1.bf16.msra.mxu0 0
        %1098 = vmatprep.subr.bf16.mxu0 0
        %1099 = vmatpush1.bf16.msra.mxu0 0
        %1100 = vmatprep.subr.bf16.mxu0 0
        %1101 = vmatpush1.bf16.msra.mxu0 0
        %1102 = vmatprep.subr.bf16.mxu0 0
        %1103 = vmatpush1.bf16.msra.mxu0 0
        %1104 = vmatprep.subr.bf16.mxu0 0
        %1105 = vmatpush1.bf16.msra.mxu0 0
        %1106 = vmatprep.subr.bf16.mxu0 0
        %1107 = vmatpush1.bf16.msra.mxu0 0
        %1108 = vmatprep.subr.bf16.mxu0 0
        %1109 = vmatpush1.bf16.msra.mxu0 0
        %1110 = vmatprep.mubr.bf16.mxu0 0
        %1111 = vmatmul.mubr.bf16.gmra.mrb[0].mxu0 %v886
        %v1112 = vpop.f32.mrb[0].mxu0
        %v1113 = vadd.f32 %v941, %v1112
        %v1114 = vpop.f32.mrb[0].mxu0
        %v1115 = vadd.f32 %v945, %v1114
        %v1116 = vpop.f32.mrb[0].mxu0
        %v1117 = vadd.f32 %v941, %v1116
        %v1118 = vpop.f32.mrb[0].mxu0
        %v1119 = vadd.f32 %v945, %v1118
        %1120 = vmatprep.mubr.bf16.mxu0 0
        %1121 = vmatmul.mubr.bf16.gmra.mrb[0].mxu0 %v887
        %v1122 = vpop.f32.mrb[0].mxu0
        %v1123 = vadd.f32 %v941, %v1122
        %v1124 = vpop.f32.mrb[0].mxu0
        %v1125 = vadd.f32 %v945, %v1124
        %v1126 = vpop.f32.mrb[0].mxu0
        %v1127 = vadd.f32 %v941, %v1126
        %v1128 = vpop.f32.mrb[0].mxu0
        %v1129 = vadd.f32 %v945, %v1128
        %1130 = vdwg.mxu0
        %1131 = vmatprep.subr.bf16.mxu0 0
        %1132 = vmatpush1.bf16.msra.mxu0 %v1032
        %1133 = vmatprep.subr.bf16.mxu0 0
        %1134 = vmatpush1.bf16.msra.mxu0 %v1035
        %1135 = vmatprep.subr.bf16.mxu0 0
        %1136 = vmatpush1.bf16.msra.mxu0 %v1038
        %1137 = vmatprep.subr.bf16.mxu0 0
        %1138 = vmatpush1.bf16.msra.mxu0 %v1041
        %1139 = vmatprep.subr.bf16.mxu0 0
        %1140 = vmatpush1.bf16.msra.mxu0 %v1044
        %1141 = vmatprep.subr.bf16.mxu0 0
        %1142 = vmatpush1.bf16.msra.mxu0 %v1047
        %1143 = vmatprep.subr.bf16.mxu0 0
        %1144 = vmatpush1.bf16.msra.mxu0 %v1050
        %1145 = vmatprep.subr.bf16.mxu0 0
        %1146 = vmatpush1.bf16.msra.mxu0 %v1053
        %1147 = vmatprep.subr.bf16.mxu0 0
        %1148 = vmatpush1.bf16.msra.mxu0 0
        %1149 = vmatprep.subr.bf16.mxu0 0
        %1150 = vmatpush1.bf16.msra.mxu0 0
        %1151 = vmatprep.subr.bf16.mxu0 0
        %1152 = vmatpush1.bf16.msra.mxu0 0
        %1153 = vmatprep.subr.bf16.mxu0 0
        %1154 = vmatpush1.bf16.msra.mxu0 0
        %1155 = vmatprep.subr.bf16.mxu0 0
        %1156 = vmatpush1.bf16.msra.mxu0 0
        %1157 = vmatprep.subr.bf16.mxu0 0
        %1158 = vmatpush1.bf16.msra.mxu0 0
        %1159 = vmatprep.subr.bf16.mxu0 0
        %1160 = vmatpush1.bf16.msra.mxu0 0
        %1161 = vmatprep.subr.bf16.mxu0 0
        %1162 = vmatpush1.bf16.msra.mxu0 0
        %1163 = vmatprep.mubr.bf16.mxu0 0
        %1164 = vmatmul.mubr.bf16.gmra.mrb[0].mxu0 %v886
        %v1165 = vpop.f32.mrb[0].mxu0
        %v1166 = vadd.f32 %v949, %v1165
        %v1167 = vpop.f32.mrb[0].mxu0
        %v1168 = vpop.f32.mrb[0].mxu0
        %v1169 = vadd.f32 %v949, %v1168
        %v1170 = vpop.f32.mrb[0].mxu0
        %1171 = vmatprep.mubr.bf16.mxu0 0
        %1172 = vmatmul.mubr.bf16.gmra.mrb[0].mxu0 %v887
        %v1173 = vpop.f32.mrb[0].mxu0
        %v1174 = vadd.f32 %v949, %v1173
        %v1175 = vpop.f32.mrb[0].mxu0
        %v1176 = vpop.f32.mrb[0].mxu0
        %v1177 = vadd.f32 %v949, %v1176
        %v1178 = vpop.f32.mrb[0].mxu0
        %1179 = vdwg.mxu0
        %v1180 = vpack.c.bf16 %v1117, %v1113
        %v1181 = vpack.c.bf16 %v1119, %v1115
        %v1182 = vpack.c.bf16 %v1169, %v1166
        %v1183 = vpack.c.bf16 %v1127, %v1123
        %v1184 = vpack.c.bf16 %v1129, %v1125
        %v1185 = vpack.c.bf16 %v1177, %v1174
        %1187 = vrot.lane.b32.xlu0 %v1180, 96
        %v1188 = vpop.permute.xlu0 %1187
        %1190 = vrot.lane.b32.xlu0 %v1180, 64
        %v1191 = vpop.permute.xlu0 %1190
        %1193 = vrot.lane.b32.xlu0 %v1180, 32
        %v1194 = vpop.permute.xlu0 %1193
        %1197 = vrot.lane.b32.xlu0 %v1183, 96
        %v1198 = vpop.permute.xlu0 %1197
        %1200 = vrot.lane.b32.xlu0 %v1183, 64
        %v1201 = vpop.permute.xlu0 %1200
        %1203 = vrot.lane.b32.xlu0 %v1183, 32
        %v1204 = vpop.permute.xlu0 %1203
        %v1206 = vmul.bf16 %v1180, 1043676725
        %v1207 = vmul.bf16 %v1188, 1043676725
        %v1208 = vmul.bf16 %v1191, 1043676725
        %v1209 = vmul.bf16 %v1194, 1043676725
        %v1210 = vmul.bf16 %v1183, 1043676725
        %v1211 = vmul.bf16 %v1198, 1043676725
        %v1212 = vmul.bf16 %v1201, 1043676725
        %v1213 = vmul.bf16 %v1204, 1043676725
        %1215 = vrot.lane.b32.xlu0 %v1181, 96
        %v1216 = vpop.permute.xlu0 %1215
        %1217 = vrot.lane.b32.xlu0 %v1181, 64
        %v1218 = vpop.permute.xlu0 %1217
        %1219 = vrot.lane.b32.xlu0 %v1181, 32
        %v1220 = vpop.permute.xlu0 %1219
        %1222 = vrot.lane.b32.xlu0 %v1184, 96
        %v1223 = vpop.permute.xlu0 %1222
        %1224 = vrot.lane.b32.xlu0 %v1184, 64
        %v1225 = vpop.permute.xlu0 %1224
        %1226 = vrot.lane.b32.xlu0 %v1184, 32
        %v1227 = vpop.permute.xlu0 %1226
        %1229 = vrot.lane.b32.xlu0 %v1182, 96
        %v1230 = vpop.permute.xlu0 %1229
        %1232 = vrot.lane.b32.xlu0 %v1182, 64
        %v1233 = vpop.permute.xlu0 %1232
        %1235 = vrot.lane.b32.xlu0 %v1182, 32
        %v1236 = vpop.permute.xlu0 %1235
        %1239 = vrot.lane.b32.xlu0 %v1185, 96
        %v1240 = vpop.permute.xlu0 %1239
        %1242 = vrot.lane.b32.xlu0 %v1185, 64
        %v1243 = vpop.permute.xlu0 %1242
        %1245 = vrot.lane.b32.xlu0 %v1185, 32
        %v1246 = vpop.permute.xlu0 %1245
        %v1248 = vld [vmem:[%s1] sm:$0xff]
        %v1249 = vld [vmem:[%s1 + $0x8] sm:$0xff]
        %vm1250 = vcmask 261120
        %v1252 = vsel %vm1250, %v1206, 0
        %v1255 = vsel %vm1250, %v1181, 0
        %1257 = vmatprep.subr.bf16.mxu0 0
        %1258 = vmatpush1.bf16.xpose.msra.mxu0 %v1255
        %1259 = vmatprep.subr.bf16.mxu0 0
        %1260 = vmatpush1.bf16.xpose.msra.mxu0 0
        %1261 = vmatprep.subr.bf16.mxu0 0
        %1262 = vmatpush1.bf16.xpose.msra.mxu0 0
        %1263 = vmatprep.subr.bf16.mxu0 0
        %1264 = vmatpush1.bf16.xpose.msra.mxu0 0
        %1265 = vmatprep.subr.bf16.mxu0 0
        %1266 = vmatpush1.bf16.xpose.msra.mxu0 0
        %1267 = vmatprep.subr.bf16.mxu0 0
        %1268 = vmatpush1.bf16.xpose.msra.mxu0 0
        %1269 = vmatprep.subr.bf16.mxu0 0
        %1270 = vmatpush1.bf16.xpose.msra.mxu0 0
        %1271 = vmatprep.subr.bf16.mxu0 0
        %1272 = vmatpush1.bf16.xpose.msra.mxu0 0
        %1273 = vmatprep.subr.bf16.mxu0 0
        %1274 = vmatpush1.bf16.xpose.msra.mxu0 0
        %1275 = vmatprep.subr.bf16.mxu0 0
        %1276 = vmatpush1.bf16.xpose.msra.mxu0 0
        %1277 = vmatprep.subr.bf16.mxu0 0
        %1278 = vmatpush1.bf16.xpose.msra.mxu0 0
        %1279 = vmatprep.subr.bf16.mxu0 0
        %1280 = vmatpush1.bf16.xpose.msra.mxu0 0
        %1281 = vmatprep.subr.bf16.mxu0 0
        %1282 = vmatpush1.bf16.xpose.msra.mxu0 0
        %1283 = vmatprep.subr.bf16.mxu0 0
        %1284 = vmatpush1.bf16.xpose.msra.mxu0 0
        %1285 = vmatprep.subr.bf16.mxu0 0
        %1286 = vmatpush1.bf16.xpose.msra.mxu0 0
        %1287 = vmatprep.subr.bf16.mxu0 0
        %1288 = vmatpush1.bf16.xpose.msra.mxu0 0
        %1289 = vmatprep.mubr.bf16.mxu0 0
        %1290 = vmatmul.mubr.bf16.gmra.mrb[0].mxu0 %v1252
        %v1291 = vpop.f32.mrb[0].mxu0
        %v1292 = vadd.f32 %v1248, %v1291
        %v1293 = vpop.f32.mrb[0].mxu0
        %v1294 = vpop.f32.mrb[0].mxu0
        %v1295 = vadd.f32 %v1249, %v1294
        %v1296 = vpop.f32.mrb[0].mxu0
        %1297 = vdwg.mxu0
        %v1299 = vsel %vm1250, %v1207, 0
        %v1302 = vsel %vm1250, %v1216, 0
        %1304 = vmatprep.subr.bf16.mxu0 0
        %1305 = vmatpush1.bf16.xpose.msra.mxu0 %v1302
        %1306 = vmatprep.subr.bf16.mxu0 0
        %1307 = vmatpush1.bf16.xpose.msra.mxu0 0
        %1308 = vmatprep.subr.bf16.mxu0 0
        %1309 = vmatpush1.bf16.xpose.msra.mxu0 0
        %1310 = vmatprep.subr.bf16.mxu0 0
        %1311 = vmatpush1.bf16.xpose.msra.mxu0 0
        %1312 = vmatprep.subr.bf16.mxu0 0
        %1313 = vmatpush1.bf16.xpose.msra.mxu0 0
        %1314 = vmatprep.subr.bf16.mxu0 0
        %1315 = vmatpush1.bf16.xpose.msra.mxu0 0
        %1316 = vmatprep.subr.bf16.mxu0 0
        %1317 = vmatpush1.bf16.xpose.msra.mxu0 0
        %1318 = vmatprep.subr.bf16.mxu0 0
        %1319 = vmatpush1.bf16.xpose.msra.mxu0 0
        %1320 = vmatprep.subr.bf16.mxu0 0
        %1321 = vmatpush1.bf16.xpose.msra.mxu0 0
        %1322 = vmatprep.subr.bf16.mxu0 0
        %1323 = vmatpush1.bf16.xpose.msra.mxu0 0
        %1324 = vmatprep.subr.bf16.mxu0 0
        %1325 = vmatpush1.bf16.xpose.msra.mxu0 0
        %1326 = vmatprep.subr.bf16.mxu0 0
        %1327 = vmatpush1.bf16.xpose.msra.mxu0 0
        %1328 = vmatprep.subr.bf16.mxu0 0
        %1329 = vmatpush1.bf16.xpose.msra.mxu0 0
        %1330 = vmatprep.subr.bf16.mxu0 0
        %1331 = vmatpush1.bf16.xpose.msra.mxu0 0
        %1332 = vmatprep.subr.bf16.mxu0 0
        %1333 = vmatpush1.bf16.xpose.msra.mxu0 0
        %1334 = vmatprep.subr.bf16.mxu0 0
        %1335 = vmatpush1.bf16.xpose.msra.mxu0 0
        %1336 = vmatprep.mubr.bf16.mxu0 0
        %1337 = vmatmul.mubr.bf16.gmra.mrb[0].mxu0 %v1299
        %v1338 = vpop.f32.mrb[0].mxu0
        %v1339 = vadd.f32 %v1248, %v1338
        %v1340 = vpop.f32.mrb[0].mxu0
        %v1341 = vpop.f32.mrb[0].mxu0
        %v1342 = vadd.f32 %v1249, %v1341
        %v1343 = vpop.f32.mrb[0].mxu0
        %1344 = vdwg.mxu0
        %v1346 = vsel %vm1250, %v1208, 0
        %v1349 = vsel %vm1250, %v1218, 0
        %1351 = vmatprep.subr.bf16.mxu0 0
        %1352 = vmatpush1.bf16.xpose.msra.mxu0 %v1349
        %1353 = vmatprep.subr.bf16.mxu0 0
        %1354 = vmatpush1.bf16.xpose.msra.mxu0 0
        %1355 = vmatprep.subr.bf16.mxu0 0
        %1356 = vmatpush1.bf16.xpose.msra.mxu0 0
        %1357 = vmatprep.subr.bf16.mxu0 0
        %1358 = vmatpush1.bf16.xpose.msra.mxu0 0
        %1359 = vmatprep.subr.bf16.mxu0 0
        %1360 = vmatpush1.bf16.xpose.msra.mxu0 0
        %1361 = vmatprep.subr.bf16.mxu0 0
        %1362 = vmatpush1.bf16.xpose.msra.mxu0 0
        %1363 = vmatprep.subr.bf16.mxu0 0
        %1364 = vmatpush1.bf16.xpose.msra.mxu0 0
        %1365 = vmatprep.subr.bf16.mxu0 0
        %1366 = vmatpush1.bf16.xpose.msra.mxu0 0
        %1367 = vmatprep.subr.bf16.mxu0 0
        %1368 = vmatpush1.bf16.xpose.msra.mxu0 0
        %1369 = vmatprep.subr.bf16.mxu0 0
        %1370 = vmatpush1.bf16.xpose.msra.mxu0 0
        %1371 = vmatprep.subr.bf16.mxu0 0
        %1372 = vmatpush1.bf16.xpose.msra.mxu0 0
        %1373 = vmatprep.subr.bf16.mxu0 0
        %1374 = vmatpush1.bf16.xpose.msra.mxu0 0
        %1375 = vmatprep.subr.bf16.mxu0 0
        %1376 = vmatpush1.bf16.xpose.msra.mxu0 0
        %1377 = vmatprep.subr.bf16.mxu0 0
        %1378 = vmatpush1.bf16.xpose.msra.mxu0 0
        %1379 = vmatprep.subr.bf16.mxu0 0
        %1380 = vmatpush1.bf16.xpose.msra.mxu0 0
        %1381 = vmatprep.subr.bf16.mxu0 0
        %1382 = vmatpush1.bf16.xpose.msra.mxu0 0
        %1383 = vmatprep.mubr.bf16.mxu0 0
        %1384 = vmatmul.mubr.bf16.gmra.mrb[0].mxu0 %v1346
        %v1385 = vpop.f32.mrb[0].mxu0
        %v1386 = vadd.f32 %v1248, %v1385
        %v1387 = vpop.f32.mrb[0].mxu0
        %v1388 = vpop.f32.mrb[0].mxu0
        %v1389 = vadd.f32 %v1249, %v1388
        %v1390 = vpop.f32.mrb[0].mxu0
        %1391 = vdwg.mxu0
        %v1393 = vsel %vm1250, %v1209, 0
        %v1396 = vsel %vm1250, %v1220, 0
        %1398 = vmatprep.subr.bf16.mxu0 0
        %1399 = vmatpush1.bf16.xpose.msra.mxu0 %v1396
        %1400 = vmatprep.subr.bf16.mxu0 0
        %1401 = vmatpush1.bf16.xpose.msra.mxu0 0
        %1402 = vmatprep.subr.bf16.mxu0 0
        %1403 = vmatpush1.bf16.xpose.msra.mxu0 0
        %1404 = vmatprep.subr.bf16.mxu0 0
        %1405 = vmatpush1.bf16.xpose.msra.mxu0 0
        %1406 = vmatprep.subr.bf16.mxu0 0
        %1407 = vmatpush1.bf16.xpose.msra.mxu0 0
        %1408 = vmatprep.subr.bf16.mxu0 0
        %1409 = vmatpush1.bf16.xpose.msra.mxu0 0
        %1410 = vmatprep.subr.bf16.mxu0 0
        %1411 = vmatpush1.bf16.xpose.msra.mxu0 0
        %1412 = vmatprep.subr.bf16.mxu0 0
        %1413 = vmatpush1.bf16.xpose.msra.mxu0 0
        %1414 = vmatprep.subr.bf16.mxu0 0
        %1415 = vmatpush1.bf16.xpose.msra.mxu0 0
        %1416 = vmatprep.subr.bf16.mxu0 0
        %1417 = vmatpush1.bf16.xpose.msra.mxu0 0
        %1418 = vmatprep.subr.bf16.mxu0 0
        %1419 = vmatpush1.bf16.xpose.msra.mxu0 0
        %1420 = vmatprep.subr.bf16.mxu0 0
        %1421 = vmatpush1.bf16.xpose.msra.mxu0 0
        %1422 = vmatprep.subr.bf16.mxu0 0
        %1423 = vmatpush1.bf16.xpose.msra.mxu0 0
        %1424 = vmatprep.subr.bf16.mxu0 0
        %1425 = vmatpush1.bf16.xpose.msra.mxu0 0
        %1426 = vmatprep.subr.bf16.mxu0 0
        %1427 = vmatpush1.bf16.xpose.msra.mxu0 0
        %1428 = vmatprep.subr.bf16.mxu0 0
        %1429 = vmatpush1.bf16.xpose.msra.mxu0 0
        %1430 = vmatprep.mubr.bf16.mxu0 0
        %1431 = vmatmul.mubr.bf16.gmra.mrb[0].mxu0 %v1393
        %v1432 = vpop.f32.mrb[0].mxu0
        %v1433 = vadd.f32 %v1248, %v1432
        %v1434 = vpop.f32.mrb[0].mxu0
        %v1435 = vpop.f32.mrb[0].mxu0
        %v1436 = vadd.f32 %v1249, %v1435
        %v1437 = vpop.f32.mrb[0].mxu0
        %1438 = vdwg.mxu0
        %v1440 = vsel %vm1250, %v1210, 0
        %v1443 = vsel %vm1250, %v1184, 0
        %1445 = vmatprep.subr.bf16.mxu0 0
        %1446 = vmatpush1.bf16.xpose.msra.mxu0 %v1443
        %1447 = vmatprep.subr.bf16.mxu0 0
        %1448 = vmatpush1.bf16.xpose.msra.mxu0 0
        %1449 = vmatprep.subr.bf16.mxu0 0
        %1450 = vmatpush1.bf16.xpose.msra.mxu0 0
        %1451 = vmatprep.subr.bf16.mxu0 0
        %1452 = vmatpush1.bf16.xpose.msra.mxu0 0
        %1453 = vmatprep.subr.bf16.mxu0 0
        %1454 = vmatpush1.bf16.xpose.msra.mxu0 0
        %1455 = vmatprep.subr.bf16.mxu0 0
        %1456 = vmatpush1.bf16.xpose.msra.mxu0 0
        %1457 = vmatprep.subr.bf16.mxu0 0
        %1458 = vmatpush1.bf16.xpose.msra.mxu0 0
        %1459 = vmatprep.subr.bf16.mxu0 0
        %1460 = vmatpush1.bf16.xpose.msra.mxu0 0
        %1461 = vmatprep.subr.bf16.mxu0 0
        %1462 = vmatpush1.bf16.xpose.msra.mxu0 0
        %1463 = vmatprep.subr.bf16.mxu0 0
        %1464 = vmatpush1.bf16.xpose.msra.mxu0 0
        %1465 = vmatprep.subr.bf16.mxu0 0
        %1466 = vmatpush1.bf16.xpose.msra.mxu0 0
        %1467 = vmatprep.subr.bf16.mxu0 0
        %1468 = vmatpush1.bf16.xpose.msra.mxu0 0
        %1469 = vmatprep.subr.bf16.mxu0 0
        %1470 = vmatpush1.bf16.xpose.msra.mxu0 0
        %1471 = vmatprep.subr.bf16.mxu0 0
        %1472 = vmatpush1.bf16.xpose.msra.mxu0 0
        %1473 = vmatprep.subr.bf16.mxu0 0
        %1474 = vmatpush1.bf16.xpose.msra.mxu0 0
        %1475 = vmatprep.subr.bf16.mxu0 0
        %1476 = vmatpush1.bf16.xpose.msra.mxu0 0
        %1477 = vmatprep.mubr.bf16.mxu0 0
        %1478 = vmatmul.mubr.bf16.gmra.mrb[0].mxu0 %v1440
        %v1479 = vpop.f32.mrb[0].mxu0
        %v1480 = vadd.f32 %v1248, %v1479
        %v1481 = vpop.f32.mrb[0].mxu0
        %v1482 = vpop.f32.mrb[0].mxu0
        %v1483 = vadd.f32 %v1249, %v1482
        %v1484 = vpop.f32.mrb[0].mxu0
        %1485 = vdwg.mxu0
        %v1487 = vsel %vm1250, %v1211, 0
        %v1490 = vsel %vm1250, %v1223, 0
        %1492 = vmatprep.subr.bf16.mxu0 0
        %1493 = vmatpush1.bf16.xpose.msra.mxu0 %v1490
        %1494 = vmatprep.subr.bf16.mxu0 0
        %1495 = vmatpush1.bf16.xpose.msra.mxu0 0
        %1496 = vmatprep.subr.bf16.mxu0 0
        %1497 = vmatpush1.bf16.xpose.msra.mxu0 0
        %1498 = vmatprep.subr.bf16.mxu0 0
        %1499 = vmatpush1.bf16.xpose.msra.mxu0 0
        %1500 = vmatprep.subr.bf16.mxu0 0
        %1501 = vmatpush1.bf16.xpose.msra.mxu0 0
        %1502 = vmatprep.subr.bf16.mxu0 0
        %1503 = vmatpush1.bf16.xpose.msra.mxu0 0
        %1504 = vmatprep.subr.bf16.mxu0 0
        %1505 = vmatpush1.bf16.xpose.msra.mxu0 0
        %1506 = vmatprep.subr.bf16.mxu0 0
        %1507 = vmatpush1.bf16.xpose.msra.mxu0 0
        %1508 = vmatprep.subr.bf16.mxu0 0
        %1509 = vmatpush1.bf16.xpose.msra.mxu0 0
        %1510 = vmatprep.subr.bf16.mxu0 0
        %1511 = vmatpush1.bf16.xpose.msra.mxu0 0
        %1512 = vmatprep.subr.bf16.mxu0 0
        %1513 = vmatpush1.bf16.xpose.msra.mxu0 0
        %1514 = vmatprep.subr.bf16.mxu0 0
        %1515 = vmatpush1.bf16.xpose.msra.mxu0 0
        %1516 = vmatprep.subr.bf16.mxu0 0
        %1517 = vmatpush1.bf16.xpose.msra.mxu0 0
        %1518 = vmatprep.subr.bf16.mxu0 0
        %1519 = vmatpush1.bf16.xpose.msra.mxu0 0
        %1520 = vmatprep.subr.bf16.mxu0 0
        %1521 = vmatpush1.bf16.xpose.msra.mxu0 0
        %1522 = vmatprep.subr.bf16.mxu0 0
        %1523 = vmatpush1.bf16.xpose.msra.mxu0 0
        %1524 = vmatprep.mubr.bf16.mxu0 0
        %1525 = vmatmul.mubr.bf16.gmra.mrb[0].mxu0 %v1487
        %v1526 = vpop.f32.mrb[0].mxu0
        %v1527 = vadd.f32 %v1248, %v1526
        %v1528 = vpop.f32.mrb[0].mxu0
        %v1529 = vpop.f32.mrb[0].mxu0
        %v1530 = vadd.f32 %v1249, %v1529
        %v1531 = vpop.f32.mrb[0].mxu0
        %1532 = vdwg.mxu0
        %v1534 = vsel %vm1250, %v1212, 0
        %v1537 = vsel %vm1250, %v1225, 0
        %1539 = vmatprep.subr.bf16.mxu0 0
        %1540 = vmatpush1.bf16.xpose.msra.mxu0 %v1537
        %1541 = vmatprep.subr.bf16.mxu0 0
        %1542 = vmatpush1.bf16.xpose.msra.mxu0 0
        %1543 = vmatprep.subr.bf16.mxu0 0
        %1544 = vmatpush1.bf16.xpose.msra.mxu0 0
        %1545 = vmatprep.subr.bf16.mxu0 0
        %1546 = vmatpush1.bf16.xpose.msra.mxu0 0
        %1547 = vmatprep.subr.bf16.mxu0 0
        %1548 = vmatpush1.bf16.xpose.msra.mxu0 0
        %1549 = vmatprep.subr.bf16.mxu0 0
        %1550 = vmatpush1.bf16.xpose.msra.mxu0 0
        %1551 = vmatprep.subr.bf16.mxu0 0
        %1552 = vmatpush1.bf16.xpose.msra.mxu0 0
        %1553 = vmatprep.subr.bf16.mxu0 0
        %1554 = vmatpush1.bf16.xpose.msra.mxu0 0
        %1555 = vmatprep.subr.bf16.mxu0 0
        %1556 = vmatpush1.bf16.xpose.msra.mxu0 0
        %1557 = vmatprep.subr.bf16.mxu0 0
        %1558 = vmatpush1.bf16.xpose.msra.mxu0 0
        %1559 = vmatprep.subr.bf16.mxu0 0
        %1560 = vmatpush1.bf16.xpose.msra.mxu0 0
        %1561 = vmatprep.subr.bf16.mxu0 0
        %1562 = vmatpush1.bf16.xpose.msra.mxu0 0
        %1563 = vmatprep.subr.bf16.mxu0 0
        %1564 = vmatpush1.bf16.xpose.msra.mxu0 0
        %1565 = vmatprep.subr.bf16.mxu0 0
        %1566 = vmatpush1.bf16.xpose.msra.mxu0 0
        %1567 = vmatprep.subr.bf16.mxu0 0
        %1568 = vmatpush1.bf16.xpose.msra.mxu0 0
        %1569 = vmatprep.subr.bf16.mxu0 0
        %1570 = vmatpush1.bf16.xpose.msra.mxu0 0
        %1571 = vmatprep.mubr.bf16.mxu0 0
        %1572 = vmatmul.mubr.bf16.gmra.mrb[0].mxu0 %v1534
        %v1573 = vpop.f32.mrb[0].mxu0
        %v1574 = vadd.f32 %v1248, %v1573
        %v1575 = vpop.f32.mrb[0].mxu0
        %v1576 = vpop.f32.mrb[0].mxu0
        %v1577 = vadd.f32 %v1249, %v1576
        %v1578 = vpop.f32.mrb[0].mxu0
        %1579 = vdwg.mxu0
        %v1581 = vsel %vm1250, %v1213, 0
        %v1584 = vsel %vm1250, %v1227, 0
        %1586 = vmatprep.subr.bf16.mxu0 0
        %1587 = vmatpush1.bf16.xpose.msra.mxu0 %v1584
        %1588 = vmatprep.subr.bf16.mxu0 0
        %1589 = vmatpush1.bf16.xpose.msra.mxu0 0
        %1590 = vmatprep.subr.bf16.mxu0 0
        %1591 = vmatpush1.bf16.xpose.msra.mxu0 0
        %1592 = vmatprep.subr.bf16.mxu0 0
        %1593 = vmatpush1.bf16.xpose.msra.mxu0 0
        %1594 = vmatprep.subr.bf16.mxu0 0
        %1595 = vmatpush1.bf16.xpose.msra.mxu0 0
        %1596 = vmatprep.subr.bf16.mxu0 0
        %1597 = vmatpush1.bf16.xpose.msra.mxu0 0
        %1598 = vmatprep.subr.bf16.mxu0 0
        %1599 = vmatpush1.bf16.xpose.msra.mxu0 0
        %1600 = vmatprep.subr.bf16.mxu0 0
        %1601 = vmatpush1.bf16.xpose.msra.mxu0 0
        %1602 = vmatprep.subr.bf16.mxu0 0
        %1603 = vmatpush1.bf16.xpose.msra.mxu0 0
        %1604 = vmatprep.subr.bf16.mxu0 0
        %1605 = vmatpush1.bf16.xpose.msra.mxu0 0
        %1606 = vmatprep.subr.bf16.mxu0 0
        %1607 = vmatpush1.bf16.xpose.msra.mxu0 0
        %1608 = vmatprep.subr.bf16.mxu0 0
        %1609 = vmatpush1.bf16.xpose.msra.mxu0 0
        %1610 = vmatprep.subr.bf16.mxu0 0
        %1611 = vmatpush1.bf16.xpose.msra.mxu0 0
        %1612 = vmatprep.subr.bf16.mxu0 0
        %1613 = vmatpush1.bf16.xpose.msra.mxu0 0
        %1614 = vmatprep.subr.bf16.mxu0 0
        %1615 = vmatpush1.bf16.xpose.msra.mxu0 0
        %1616 = vmatprep.subr.bf16.mxu0 0
        %1617 = vmatpush1.bf16.xpose.msra.mxu0 0
        %1618 = vmatprep.mubr.bf16.mxu0 0
        %1619 = vmatmul.mubr.bf16.gmra.mrb[0].mxu0 %v1581
        %v1620 = vpop.f32.mrb[0].mxu0
        %v1621 = vadd.f32 %v1248, %v1620
        %v1622 = vpop.f32.mrb[0].mxu0
        %v1623 = vpop.f32.mrb[0].mxu0
        %v1624 = vadd.f32 %v1249, %v1623
        %v1625 = vpop.f32.mrb[0].mxu0
        %1626 = vdwg.mxu0
        %vm1627 = vcmask 130048
        %v1628 = vsel %vm1627, %v1292, -inf
        %1629 = vmax.xlane.f32.xlu0 %v1628
        %v1630 = vpop.xlane.xlu0 %1629
        %v1631 = vsel %vm1627, %v1295, -inf
        %1632 = vmax.xlane.f32.xlu0 %v1631
        %v1633 = vpop.xlane.xlu0 %1632
        %v1634 = vsel %vm1627, %v1339, -inf
        %1635 = vmax.xlane.f32.xlu0 %v1634
        %v1636 = vpop.xlane.xlu0 %1635
        %v1637 = vsel %vm1627, %v1342, -inf
        %1638 = vmax.xlane.f32.xlu0 %v1637
        %v1639 = vpop.xlane.xlu0 %1638
        %v1640 = vsel %vm1627, %v1386, -inf
        %1641 = vmax.xlane.f32.xlu0 %v1640
        %v1642 = vpop.xlane.xlu0 %1641
        %v1643 = vsel %vm1627, %v1389, -inf
        %1644 = vmax.xlane.f32.xlu0 %v1643
        %v1645 = vpop.xlane.xlu0 %1644
        %v1646 = vsel %vm1627, %v1433, -inf
        %1647 = vmax.xlane.f32.xlu0 %v1646
        %v1648 = vpop.xlane.xlu0 %1647
        %v1649 = vsel %vm1627, %v1436, -inf
        %1650 = vmax.xlane.f32.xlu0 %v1649
        %v1651 = vpop.xlane.xlu0 %1650
        %v1652 = vsel %vm1627, %v1480, -inf
        %1653 = vmax.xlane.f32.xlu0 %v1652
        %v1654 = vpop.xlane.xlu0 %1653
        %v1655 = vsel %vm1627, %v1483, -inf
        %1656 = vmax.xlane.f32.xlu0 %v1655
        %v1657 = vpop.xlane.xlu0 %1656
        %v1658 = vsel %vm1627, %v1527, -inf
        %1659 = vmax.xlane.f32.xlu0 %v1658
        %v1660 = vpop.xlane.xlu0 %1659
        %v1661 = vsel %vm1627, %v1530, -inf
        %1662 = vmax.xlane.f32.xlu0 %v1661
        %v1663 = vpop.xlane.xlu0 %1662
        %v1664 = vsel %vm1627, %v1574, -inf
        %1665 = vmax.xlane.f32.xlu0 %v1664
        %v1666 = vpop.xlane.xlu0 %1665
        %v1667 = vsel %vm1627, %v1577, -inf
        %1668 = vmax.xlane.f32.xlu0 %v1667
        %v1669 = vpop.xlane.xlu0 %1668
        %v1670 = vsel %vm1627, %v1621, -inf
        %1671 = vmax.xlane.f32.xlu0 %v1670
        %v1672 = vpop.xlane.xlu0 %1671
        %v1673 = vsel %vm1627, %v1624, -inf
        %1674 = vmax.xlane.f32.xlu0 %v1673
        %v1675 = vpop.xlane.xlu0 %1674
        %v1676 = vsub.f32 %v1292, %v1630
        %v1677 = vsub.f32 %v1295, %v1633
        %v1678 = vsub.f32 %v1339, %v1636
        %v1679 = vsub.f32 %v1342, %v1639
        %v1680 = vsub.f32 %v1386, %v1642
        %v1681 = vsub.f32 %v1389, %v1645
        %v1682 = vsub.f32 %v1433, %v1648
        %v1683 = vsub.f32 %v1436, %v1651
        %v1684 = vsub.f32 %v1480, %v1654
        %v1685 = vsub.f32 %v1483, %v1657
        %v1686 = vsub.f32 %v1527, %v1660
        %v1687 = vsub.f32 %v1530, %v1663
        %v1688 = vsub.f32 %v1574, %v1666
        %v1689 = vsub.f32 %v1577, %v1669
        %v1690 = vsub.f32 %v1621, %v1672
        %v1691 = vsub.f32 %v1624, %v1675
        %v1692 = vmul.f32 %v1676, 1.442695
        %v1693 = vpow.pop %v1692
        %v1694 = vmul.f32 %v1677, 1.442695
        %v1695 = vpow.pop %v1694
        %v1696 = vmul.f32 %v1678, 1.442695
        %v1697 = vpow.pop %v1696
        %v1698 = vmul.f32 %v1679, 1.442695
        %v1699 = vpow.pop %v1698
        %v1700 = vmul.f32 %v1680, 1.442695
        %v1701 = vpow.pop %v1700
        %v1702 = vmul.f32 %v1681, 1.442695
        %v1703 = vpow.pop %v1702
        %v1704 = vmul.f32 %v1682, 1.442695
        %v1705 = vpow.pop %v1704
        %v1706 = vmul.f32 %v1683, 1.442695
        %v1707 = vpow.pop %v1706
        %v1708 = vmul.f32 %v1684, 1.442695
        %v1709 = vpow.pop %v1708
        %v1710 = vmul.f32 %v1685, 1.442695
        %v1711 = vpow.pop %v1710
        %v1712 = vmul.f32 %v1686, 1.442695
        %v1713 = vpow.pop %v1712
        %v1714 = vmul.f32 %v1687, 1.442695
        %v1715 = vpow.pop %v1714
        %v1716 = vmul.f32 %v1688, 1.442695
        %v1717 = vpow.pop %v1716
        %v1718 = vmul.f32 %v1689, 1.442695
        %v1719 = vpow.pop %v1718
        %v1720 = vmul.f32 %v1690, 1.442695
        %v1721 = vpow.pop %v1720
        %v1722 = vmul.f32 %v1691, 1.442695
        %v1723 = vpow.pop %v1722
        %v1724 = vsel %vm1627, %v1693, 0.0
        %1725 = vadd.xlane.f32.xlu0 %v1724
        %v1726 = vpop.xlane.xlu0 %1725
        %v1727 = vsel %vm1627, %v1695, 0.0
        %1728 = vadd.xlane.f32.xlu0 %v1727
        %v1729 = vpop.xlane.xlu0 %1728
        %v1730 = vsel %vm1627, %v1697, 0.0
        %1731 = vadd.xlane.f32.xlu0 %v1730
        %v1732 = vpop.xlane.xlu0 %1731
        %v1733 = vsel %vm1627, %v1699, 0.0
        %1734 = vadd.xlane.f32.xlu0 %v1733
        %v1735 = vpop.xlane.xlu0 %1734
        %v1736 = vsel %vm1627, %v1701, 0.0
        %1737 = vadd.xlane.f32.xlu0 %v1736
        %v1738 = vpop.xlane.xlu0 %1737
        %v1739 = vsel %vm1627, %v1703, 0.0
        %1740 = vadd.xlane.f32.xlu0 %v1739
        %v1741 = vpop.xlane.xlu0 %1740
        %v1742 = vsel %vm1627, %v1705, 0.0
        %1743 = vadd.xlane.f32.xlu0 %v1742
        %v1744 = vpop.xlane.xlu0 %1743
        %v1745 = vsel %vm1627, %v1707, 0.0
        %1746 = vadd.xlane.f32.xlu0 %v1745
        %v1747 = vpop.xlane.xlu0 %1746
        %v1748 = vsel %vm1627, %v1709, 0.0
        %1749 = vadd.xlane.f32.xlu0 %v1748
        %v1750 = vpop.xlane.xlu0 %1749
        %v1751 = vsel %vm1627, %v1711, 0.0
        %1752 = vadd.xlane.f32.xlu0 %v1751
        %v1753 = vpop.xlane.xlu0 %1752
        %v1754 = vsel %vm1627, %v1713, 0.0
        %1755 = vadd.xlane.f32.xlu0 %v1754
        %v1756 = vpop.xlane.xlu0 %1755
        %v1757 = vsel %vm1627, %v1715, 0.0
        %1758 = vadd.xlane.f32.xlu0 %v1757
        %v1759 = vpop.xlane.xlu0 %1758
        %v1760 = vsel %vm1627, %v1717, 0.0
        %1761 = vadd.xlane.f32.xlu0 %v1760
        %v1762 = vpop.xlane.xlu0 %1761
        %v1763 = vsel %vm1627, %v1719, 0.0
        %1764 = vadd.xlane.f32.xlu0 %v1763
        %v1765 = vpop.xlane.xlu0 %1764
        %v1766 = vsel %vm1627, %v1721, 0.0
        %1767 = vadd.xlane.f32.xlu0 %v1766
        %v1768 = vpop.xlane.xlu0 %1767
        %v1769 = vsel %vm1627, %v1723, 0.0
        %1770 = vadd.xlane.f32.xlu0 %v1769
        %v1771 = vpop.xlane.xlu0 %1770
        %v1772 = vrcp.pop %v1726
        %v1773 = vrcp.pop %v1729
        %v1774 = vrcp.pop %v1732
        %v1775 = vrcp.pop %v1735
        %v1776 = vrcp.pop %v1738
        %v1777 = vrcp.pop %v1741
        %v1778 = vrcp.pop %v1744
        %v1779 = vrcp.pop %v1747
        %v1780 = vrcp.pop %v1750
        %v1781 = vrcp.pop %v1753
        %v1782 = vrcp.pop %v1756
        %v1783 = vrcp.pop %v1759
        %v1784 = vrcp.pop %v1762
        %v1785 = vrcp.pop %v1765
        %v1786 = vrcp.pop %v1768
        %v1787 = vrcp.pop %v1771
        %v1788 = vpack.c.bf16 %v1695, %v1693
        %v1789 = vpack.c.bf16 %v1699, %v1697
        %v1790 = vpack.c.bf16 %v1703, %v1701
        %v1791 = vpack.c.bf16 %v1707, %v1705
        %v1792 = vpack.c.bf16 %v1711, %v1709
        %v1793 = vpack.c.bf16 %v1715, %v1713
        %v1794 = vpack.c.bf16 %v1719, %v1717
        %v1795 = vpack.c.bf16 %v1723, %v1721
        %v1797 = vsel %vm1627, %v1788, 0
        %1799 = vmatprep.subr.bf16.mxu0 0
        %1800 = vmatpush1.bf16.msra.mxu0 %v1182
        %1801 = vmatprep.subr.bf16.mxu0 0
        %1802 = vmatpush1.bf16.msra.mxu0 0
        %1803 = vmatprep.subr.bf16.mxu0 0
        %1804 = vmatpush1.bf16.msra.mxu0 0
        %1805 = vmatprep.subr.bf16.mxu0 0
        %1806 = vmatpush1.bf16.msra.mxu0 0
        %1807 = vmatprep.subr.bf16.mxu0 0
        %1808 = vmatpush1.bf16.msra.mxu0 0
        %1809 = vmatprep.subr.bf16.mxu0 0
        %1810 = vmatpush1.bf16.msra.mxu0 0
        %1811 = vmatprep.subr.bf16.mxu0 0
        %1812 = vmatpush1.bf16.msra.mxu0 0
        %1813 = vmatprep.subr.bf16.mxu0 0
        %1814 = vmatpush1.bf16.msra.mxu0 0
        %1815 = vmatprep.subr.bf16.mxu0 0
        %1816 = vmatpush1.bf16.msra.mxu0 0
        %1817 = vmatprep.subr.bf16.mxu0 0
        %1818 = vmatpush1.bf16.msra.mxu0 0
        %1819 = vmatprep.subr.bf16.mxu0 0
        %1820 = vmatpush1.bf16.msra.mxu0 0
        %1821 = vmatprep.subr.bf16.mxu0 0
        %1822 = vmatpush1.bf16.msra.mxu0 0
        %1823 = vmatprep.subr.bf16.mxu0 0
        %1824 = vmatpush1.bf16.msra.mxu0 0
        %1825 = vmatprep.subr.bf16.mxu0 0
        %1826 = vmatpush1.bf16.msra.mxu0 0
        %1827 = vmatprep.subr.bf16.mxu0 0
        %1828 = vmatpush1.bf16.msra.mxu0 0
        %1829 = vmatprep.subr.bf16.mxu0 0
        %1830 = vmatpush1.bf16.msra.mxu0 0
        %1831 = vmatprep.mubr.bf16.mxu0 0
        %1832 = vmatmul.mubr.bf16.gmra.mrb[0].mxu0 %v1797
        %v1833 = vpop.f32.mrb[0].mxu0
        %v1834 = vadd.f32 0.0, %v1833
        %v1835 = vpop.f32.mrb[0].mxu0
        %v1836 = vpop.f32.mrb[0].mxu0
        %v1837 = vadd.f32 0.0, %v1836
        %v1838 = vpop.f32.mrb[0].mxu0
        %1839 = vdwg.mxu0
        %v1841 = vsel %vm1627, %v1789, 0
        %1843 = vmatprep.subr.bf16.mxu0 0
        %1844 = vmatpush1.bf16.msra.mxu0 %v1230
        %1845 = vmatprep.subr.bf16.mxu0 0
        %1846 = vmatpush1.bf16.msra.mxu0 0
        %1847 = vmatprep.subr.bf16.mxu0 0
        %1848 = vmatpush1.bf16.msra.mxu0 0
        %1849 = vmatprep.subr.bf16.mxu0 0
        %1850 = vmatpush1.bf16.msra.mxu0 0
        %1851 = vmatprep.subr.bf16.mxu0 0
        %1852 = vmatpush1.bf16.msra.mxu0 0
        %1853 = vmatprep.subr.bf16.mxu0 0
        %1854 = vmatpush1.bf16.msra.mxu0 0
        %1855 = vmatprep.subr.bf16.mxu0 0
        %1856 = vmatpush1.bf16.msra.mxu0 0
        %1857 = vmatprep.subr.bf16.mxu0 0
        %1858 = vmatpush1.bf16.msra.mxu0 0
        %1859 = vmatprep.subr.bf16.mxu0 0
        %1860 = vmatpush1.bf16.msra.mxu0 0
        %1861 = vmatprep.subr.bf16.mxu0 0
        %1862 = vmatpush1.bf16.msra.mxu0 0
        %1863 = vmatprep.subr.bf16.mxu0 0
        %1864 = vmatpush1.bf16.msra.mxu0 0
        %1865 = vmatprep.subr.bf16.mxu0 0
        %1866 = vmatpush1.bf16.msra.mxu0 0
        %1867 = vmatprep.subr.bf16.mxu0 0
        %1868 = vmatpush1.bf16.msra.mxu0 0
        %1869 = vmatprep.subr.bf16.mxu0 0
        %1870 = vmatpush1.bf16.msra.mxu0 0
        %1871 = vmatprep.subr.bf16.mxu0 0
        %1872 = vmatpush1.bf16.msra.mxu0 0
        %1873 = vmatprep.subr.bf16.mxu0 0
        %1874 = vmatpush1.bf16.msra.mxu0 0
        %1875 = vmatprep.mubr.bf16.mxu0 0
        %1876 = vmatmul.mubr.bf16.gmra.mrb[0].mxu0 %v1841
        %v1877 = vpop.f32.mrb[0].mxu0
        %v1878 = vadd.f32 0.0, %v1877
        %v1879 = vpop.f32.mrb[0].mxu0
        %v1880 = vpop.f32.mrb[0].mxu0
        %v1881 = vadd.f32 0.0, %v1880
        %v1882 = vpop.f32.mrb[0].mxu0
        %1883 = vdwg.mxu0
        %v1885 = vsel %vm1627, %v1790, 0
        %1887 = vmatprep.subr.bf16.mxu0 0
        %1888 = vmatpush1.bf16.msra.mxu0 %v1233
        %1889 = vmatprep.subr.bf16.mxu0 0
        %1890 = vmatpush1.bf16.msra.mxu0 0
        %1891 = vmatprep.subr.bf16.mxu0 0
        %1892 = vmatpush1.bf16.msra.mxu0 0
        %1893 = vmatprep.subr.bf16.mxu0 0
        %1894 = vmatpush1.bf16.msra.mxu0 0
        %1895 = vmatprep.subr.bf16.mxu0 0
        %1896 = vmatpush1.bf16.msra.mxu0 0
        %1897 = vmatprep.subr.bf16.mxu0 0
        %1898 = vmatpush1.bf16.msra.mxu0 0
        %1899 = vmatprep.subr.bf16.mxu0 0
        %1900 = vmatpush1.bf16.msra.mxu0 0
        %1901 = vmatprep.subr.bf16.mxu0 0
        %1902 = vmatpush1.bf16.msra.mxu0 0
        %1903 = vmatprep.subr.bf16.mxu0 0
        %1904 = vmatpush1.bf16.msra.mxu0 0
        %1905 = vmatprep.subr.bf16.mxu0 0
        %1906 = vmatpush1.bf16.msra.mxu0 0
        %1907 = vmatprep.subr.bf16.mxu0 0
        %1908 = vmatpush1.bf16.msra.mxu0 0
        %1909 = vmatprep.subr.bf16.mxu0 0
        %1910 = vmatpush1.bf16.msra.mxu0 0
        %1911 = vmatprep.subr.bf16.mxu0 0
        %1912 = vmatpush1.bf16.msra.mxu0 0
        %1913 = vmatprep.subr.bf16.mxu0 0
        %1914 = vmatpush1.bf16.msra.mxu0 0
        %1915 = vmatprep.subr.bf16.mxu0 0
        %1916 = vmatpush1.bf16.msra.mxu0 0
        %1917 = vmatprep.subr.bf16.mxu0 0
        %1918 = vmatpush1.bf16.msra.mxu0 0
        %1919 = vmatprep.mubr.bf16.mxu0 0
        %1920 = vmatmul.mubr.bf16.gmra.mrb[0].mxu0 %v1885
        %v1921 = vpop.f32.mrb[0].mxu0
        %v1922 = vadd.f32 0.0, %v1921
        %v1923 = vpop.f32.mrb[0].mxu0
        %v1924 = vpop.f32.mrb[0].mxu0
        %v1925 = vadd.f32 0.0, %v1924
        %v1926 = vpop.f32.mrb[0].mxu0
        %1927 = vdwg.mxu0
        %v1929 = vsel %vm1627, %v1791, 0
        %1931 = vmatprep.subr.bf16.mxu0 0
        %1932 = vmatpush1.bf16.msra.mxu0 %v1236
        %1933 = vmatprep.subr.bf16.mxu0 0
        %1934 = vmatpush1.bf16.msra.mxu0 0
        %1935 = vmatprep.subr.bf16.mxu0 0
        %1936 = vmatpush1.bf16.msra.mxu0 0
        %1937 = vmatprep.subr.bf16.mxu0 0
        %1938 = vmatpush1.bf16.msra.mxu0 0
        %1939 = vmatprep.subr.bf16.mxu0 0
        %1940 = vmatpush1.bf16.msra.mxu0 0
        %1941 = vmatprep.subr.bf16.mxu0 0
        %1942 = vmatpush1.bf16.msra.mxu0 0
        %1943 = vmatprep.subr.bf16.mxu0 0
        %1944 = vmatpush1.bf16.msra.mxu0 0
        %1945 = vmatprep.subr.bf16.mxu0 0
        %1946 = vmatpush1.bf16.msra.mxu0 0
        %1947 = vmatprep.subr.bf16.mxu0 0
        %1948 = vmatpush1.bf16.msra.mxu0 0
        %1949 = vmatprep.subr.bf16.mxu0 0
        %1950 = vmatpush1.bf16.msra.mxu0 0
        %1951 = vmatprep.subr.bf16.mxu0 0
        %1952 = vmatpush1.bf16.msra.mxu0 0
        %1953 = vmatprep.subr.bf16.mxu0 0
        %1954 = vmatpush1.bf16.msra.mxu0 0
        %1955 = vmatprep.subr.bf16.mxu0 0
        %1956 = vmatpush1.bf16.msra.mxu0 0
        %1957 = vmatprep.subr.bf16.mxu0 0
        %1958 = vmatpush1.bf16.msra.mxu0 0
        %1959 = vmatprep.subr.bf16.mxu0 0
        %1960 = vmatpush1.bf16.msra.mxu0 0
        %1961 = vmatprep.subr.bf16.mxu0 0
        %1962 = vmatpush1.bf16.msra.mxu0 0
        %1963 = vmatprep.mubr.bf16.mxu0 0
        %1964 = vmatmul.mubr.bf16.gmra.mrb[0].mxu0 %v1929
        %v1965 = vpop.f32.mrb[0].mxu0
        %v1966 = vadd.f32 0.0, %v1965
        %v1967 = vpop.f32.mrb[0].mxu0
        %v1968 = vpop.f32.mrb[0].mxu0
        %v1969 = vadd.f32 0.0, %v1968
        %v1970 = vpop.f32.mrb[0].mxu0
        %1971 = vdwg.mxu0
        %v1973 = vsel %vm1627, %v1792, 0
        %1975 = vmatprep.subr.bf16.mxu0 0
        %1976 = vmatpush1.bf16.msra.mxu0 %v1185
        %1977 = vmatprep.subr.bf16.mxu0 0
        %1978 = vmatpush1.bf16.msra.mxu0 0
        %1979 = vmatprep.subr.bf16.mxu0 0
        %1980 = vmatpush1.bf16.msra.mxu0 0
        %1981 = vmatprep.subr.bf16.mxu0 0
        %1982 = vmatpush1.bf16.msra.mxu0 0
        %1983 = vmatprep.subr.bf16.mxu0 0
        %1984 = vmatpush1.bf16.msra.mxu0 0
        %1985 = vmatprep.subr.bf16.mxu0 0
        %1986 = vmatpush1.bf16.msra.mxu0 0
        %1987 = vmatprep.subr.bf16.mxu0 0
        %1988 = vmatpush1.bf16.msra.mxu0 0
        %1989 = vmatprep.subr.bf16.mxu0 0
        %1990 = vmatpush1.bf16.msra.mxu0 0
        %1991 = vmatprep.subr.bf16.mxu0 0
        %1992 = vmatpush1.bf16.msra.mxu0 0
        %1993 = vmatprep.subr.bf16.mxu0 0
        %1994 = vmatpush1.bf16.msra.mxu0 0
        %1995 = vmatprep.subr.bf16.mxu0 0
        %1996 = vmatpush1.bf16.msra.mxu0 0
        %1997 = vmatprep.subr.bf16.mxu0 0
        %1998 = vmatpush1.bf16.msra.mxu0 0
        %1999 = vmatprep.subr.bf16.mxu0 0
        %2000 = vmatpush1.bf16.msra.mxu0 0
        %2001 = vmatprep.subr.bf16.mxu0 0
        %2002 = vmatpush1.bf16.msra.mxu0 0
        %2003 = vmatprep.subr.bf16.mxu0 0
        %2004 = vmatpush1.bf16.msra.mxu0 0
        %2005 = vmatprep.subr.bf16.mxu0 0
        %2006 = vmatpush1.bf16.msra.mxu0 0
        %2007 = vmatprep.mubr.bf16.mxu0 0
        %2008 = vmatmul.mubr.bf16.gmra.mrb[0].mxu0 %v1973
        %v2009 = vpop.f32.mrb[0].mxu0
        %v2010 = vadd.f32 0.0, %v2009
        %v2011 = vpop.f32.mrb[0].mxu0
        %v2012 = vpop.f32.mrb[0].mxu0
        %v2013 = vadd.f32 0.0, %v2012
        %v2014 = vpop.f32.mrb[0].mxu0
        %2015 = vdwg.mxu0
        %v2017 = vsel %vm1627, %v1793, 0
        %2019 = vmatprep.subr.bf16.mxu0 0
        %2020 = vmatpush1.bf16.msra.mxu0 %v1240
        %2021 = vmatprep.subr.bf16.mxu0 0
        %2022 = vmatpush1.bf16.msra.mxu0 0
        %2023 = vmatprep.subr.bf16.mxu0 0
        %2024 = vmatpush1.bf16.msra.mxu0 0
        %2025 = vmatprep.subr.bf16.mxu0 0
        %2026 = vmatpush1.bf16.msra.mxu0 0
        %2027 = vmatprep.subr.bf16.mxu0 0
        %2028 = vmatpush1.bf16.msra.mxu0 0
        %2029 = vmatprep.subr.bf16.mxu0 0
        %2030 = vmatpush1.bf16.msra.mxu0 0
        %2031 = vmatprep.subr.bf16.mxu0 0
        %2032 = vmatpush1.bf16.msra.mxu0 0
        %2033 = vmatprep.subr.bf16.mxu0 0
        %2034 = vmatpush1.bf16.msra.mxu0 0
        %2035 = vmatprep.subr.bf16.mxu0 0
        %2036 = vmatpush1.bf16.msra.mxu0 0
        %2037 = vmatprep.subr.bf16.mxu0 0
        %2038 = vmatpush1.bf16.msra.mxu0 0
        %2039 = vmatprep.subr.bf16.mxu0 0
        %2040 = vmatpush1.bf16.msra.mxu0 0
        %2041 = vmatprep.subr.bf16.mxu0 0
        %2042 = vmatpush1.bf16.msra.mxu0 0
        %2043 = vmatprep.subr.bf16.mxu0 0
        %2044 = vmatpush1.bf16.msra.mxu0 0
        %2045 = vmatprep.subr.bf16.mxu0 0
        %2046 = vmatpush1.bf16.msra.mxu0 0
        %2047 = vmatprep.subr.bf16.mxu0 0
        %2048 = vmatpush1.bf16.msra.mxu0 0
        %2049 = vmatprep.subr.bf16.mxu0 0
        %2050 = vmatpush1.bf16.msra.mxu0 0
        %2051 = vmatprep.mubr.bf16.mxu0 0
        %2052 = vmatmul.mubr.bf16.gmra.mrb[0].mxu0 %v2017
        %v2053 = vpop.f32.mrb[0].mxu0
        %v2054 = vadd.f32 0.0, %v2053
        %v2055 = vpop.f32.mrb[0].mxu0
        %v2056 = vpop.f32.mrb[0].mxu0
        %v2057 = vadd.f32 0.0, %v2056
        %v2058 = vpop.f32.mrb[0].mxu0
        %2059 = vdwg.mxu0
        %v2061 = vsel %vm1627, %v1794, 0
        %2063 = vmatprep.subr.bf16.mxu0 0
        %2064 = vmatpush1.bf16.msra.mxu0 %v1243
        %2065 = vmatprep.subr.bf16.mxu0 0
        %2066 = vmatpush1.bf16.msra.mxu0 0
        %2067 = vmatprep.subr.bf16.mxu0 0
        %2068 = vmatpush1.bf16.msra.mxu0 0
        %2069 = vmatprep.subr.bf16.mxu0 0
        %2070 = vmatpush1.bf16.msra.mxu0 0
        %2071 = vmatprep.subr.bf16.mxu0 0
        %2072 = vmatpush1.bf16.msra.mxu0 0
        %2073 = vmatprep.subr.bf16.mxu0 0
        %2074 = vmatpush1.bf16.msra.mxu0 0
        %2075 = vmatprep.subr.bf16.mxu0 0
        %2076 = vmatpush1.bf16.msra.mxu0 0
        %2077 = vmatprep.subr.bf16.mxu0 0
        %2078 = vmatpush1.bf16.msra.mxu0 0
        %2079 = vmatprep.subr.bf16.mxu0 0
        %2080 = vmatpush1.bf16.msra.mxu0 0
        %2081 = vmatprep.subr.bf16.mxu0 0
        %2082 = vmatpush1.bf16.msra.mxu0 0
        %2083 = vmatprep.subr.bf16.mxu0 0
        %2084 = vmatpush1.bf16.msra.mxu0 0
        %2085 = vmatprep.subr.bf16.mxu0 0
        %2086 = vmatpush1.bf16.msra.mxu0 0
        %2087 = vmatprep.subr.bf16.mxu0 0
        %2088 = vmatpush1.bf16.msra.mxu0 0
        %2089 = vmatprep.subr.bf16.mxu0 0
        %2090 = vmatpush1.bf16.msra.mxu0 0
        %2091 = vmatprep.subr.bf16.mxu0 0
        %2092 = vmatpush1.bf16.msra.mxu0 0
        %2093 = vmatprep.subr.bf16.mxu0 0
        %2094 = vmatpush1.bf16.msra.mxu0 0
        %2095 = vmatprep.mubr.bf16.mxu0 0
        %2096 = vmatmul.mubr.bf16.gmra.mrb[0].mxu0 %v2061
        %v2097 = vpop.f32.mrb[0].mxu0
        %v2098 = vadd.f32 0.0, %v2097
        %v2099 = vpop.f32.mrb[0].mxu0
        %v2100 = vpop.f32.mrb[0].mxu0
        %v2101 = vadd.f32 0.0, %v2100
        %v2102 = vpop.f32.mrb[0].mxu0
        %2103 = vdwg.mxu0
        %v2105 = vsel %vm1627, %v1795, 0
        %2107 = vmatprep.subr.bf16.mxu0 0
        %2108 = vmatpush1.bf16.msra.mxu0 %v1246
        %2109 = vmatprep.subr.bf16.mxu0 0
        %2110 = vmatpush1.bf16.msra.mxu0 0
        %2111 = vmatprep.subr.bf16.mxu0 0
        %2112 = vmatpush1.bf16.msra.mxu0 0
        %2113 = vmatprep.subr.bf16.mxu0 0
        %2114 = vmatpush1.bf16.msra.mxu0 0
        %2115 = vmatprep.subr.bf16.mxu0 0
        %2116 = vmatpush1.bf16.msra.mxu0 0
        %2117 = vmatprep.subr.bf16.mxu0 0
        %2118 = vmatpush1.bf16.msra.mxu0 0
        %2119 = vmatprep.subr.bf16.mxu0 0
        %2120 = vmatpush1.bf16.msra.mxu0 0
        %2121 = vmatprep.subr.bf16.mxu0 0
        %2122 = vmatpush1.bf16.msra.mxu0 0
        %2123 = vmatprep.subr.bf16.mxu0 0
        %2124 = vmatpush1.bf16.msra.mxu0 0
        %2125 = vmatprep.subr.bf16.mxu0 0
        %2126 = vmatpush1.bf16.msra.mxu0 0
        %2127 = vmatprep.subr.bf16.mxu0 0
        %2128 = vmatpush1.bf16.msra.mxu0 0
        %2129 = vmatprep.subr.bf16.mxu0 0
        %2130 = vmatpush1.bf16.msra.mxu0 0
        %2131 = vmatprep.subr.bf16.mxu0 0
        %2132 = vmatpush1.bf16.msra.mxu0 0
        %2133 = vmatprep.subr.bf16.mxu0 0
        %2134 = vmatpush1.bf16.msra.mxu0 0
        %2135 = vmatprep.subr.bf16.mxu0 0
        %2136 = vmatpush1.bf16.msra.mxu0 0
        %2137 = vmatprep.subr.bf16.mxu0 0
        %2138 = vmatpush1.bf16.msra.mxu0 0
        %2139 = vmatprep.mubr.bf16.mxu0 0
        %2140 = vmatmul.mubr.bf16.gmra.mrb[0].mxu0 %v2105
        %v2141 = vpop.f32.mrb[0].mxu0
        %v2142 = vadd.f32 0.0, %v2141
        %v2143 = vpop.f32.mrb[0].mxu0
        %v2144 = vpop.f32.mrb[0].mxu0
        %v2145 = vadd.f32 0.0, %v2144
        %v2146 = vpop.f32.mrb[0].mxu0
        %2147 = vdwg.mxu0
        %v2148 = vmul.f32 %v1834, %v1772
        %v2149 = vmul.f32 %v1837, %v1773
        %v2150 = vmul.f32 %v1878, %v1774
        %v2151 = vmul.f32 %v1881, %v1775
        %v2152 = vmul.f32 %v1922, %v1776
        %v2153 = vmul.f32 %v1925, %v1777
        %v2154 = vmul.f32 %v1966, %v1778
        %v2155 = vmul.f32 %v1969, %v1779
        %v2156 = vmul.f32 %v2010, %v1780
        %v2157 = vmul.f32 %v2013, %v1781
        %v2158 = vmul.f32 %v2054, %v1782
        %v2159 = vmul.f32 %v2057, %v1783
        %v2160 = vmul.f32 %v2098, %v1784
        %v2161 = vmul.f32 %v2101, %v1785
        %v2162 = vmul.f32 %v2142, %v1786
        %v2163 = vmul.f32 %v2145, %v1787
        %2166 = vrot.lane.b32.xlu0 %v2150, 32
        %v2167 = vpop.permute.xlu0 %2166
        %2168 = vrot.lane.b32.xlu0 %v2151, 32
        %v2169 = vpop.permute.xlu0 %2168
        %2174 = vrot.lane.b32.xlu0 %v2152, 64
        %v2175 = vpop.permute.xlu0 %2174
        %2176 = vrot.lane.b32.xlu0 %v2153, 64
        %v2177 = vpop.permute.xlu0 %2176
        %2182 = vrot.lane.b32.xlu0 %v2154, 96
        %v2183 = vpop.permute.xlu0 %2182
        %2184 = vrot.lane.b32.xlu0 %v2155, 96
        %v2185 = vpop.permute.xlu0 %2184
        %v2188 = vsel %vm1250, %v2148, %v2167
        %v2189 = vsel %vm1250, %v2149, %v2169
        %vm2190 = vcmask 523264
        %v2191 = vsel %vm2190, %v2188, %v2175
        %v2192 = vsel %vm2190, %v2189, %v2177
        %vm2193 = vcmask 785408
        %v2194 = vsel %vm2193, %v2191, %v2183
        %v2195 = vsel %vm2193, %v2192, %v2185
        %2198 = vrot.lane.b32.xlu0 %v2158, 32
        %v2199 = vpop.permute.xlu0 %2198
        %2200 = vrot.lane.b32.xlu0 %v2159, 32
        %v2201 = vpop.permute.xlu0 %2200
        %2206 = vrot.lane.b32.xlu0 %v2160, 64
        %v2207 = vpop.permute.xlu0 %2206
        %2208 = vrot.lane.b32.xlu0 %v2161, 64
        %v2209 = vpop.permute.xlu0 %2208
        %2214 = vrot.lane.b32.xlu0 %v2162, 96
        %v2215 = vpop.permute.xlu0 %2214
        %2216 = vrot.lane.b32.xlu0 %v2163, 96
        %v2217 = vpop.permute.xlu0 %2216
        %v2220 = vsel %vm1250, %v2156, %v2199
        %v2221 = vsel %vm1250, %v2157, %v2201
        %v2222 = vsel %vm2190, %v2220, %v2207
        %v2223 = vsel %vm2190, %v2221, %v2209
        %v2224 = vsel %vm2193, %v2222, %v2215
        %v2225 = vsel %vm2193, %v2223, %v2217
        %v2226 = vpack.c.bf16 %v2195, %v2194
        %v2227 = vpack.c.bf16 %v2225, %v2224
        %v2228 = vld [vmem:[%s637] sm:$0xf]
        %v2229 = vld [vmem:[%s637 + $0x4] sm:$0xf]
        %v2230 = vld [vmem:[%s637 + $0x8] sm:$0xf]
        %v2231 = vld [vmem:[%s637 + $0xc] sm:$0xf]
        %v2232 = vld [vmem:[%s637 + $0x10] sm:$0xf]
        %v2233 = vld [vmem:[%s637 + $0x14] sm:$0xf]
        %v2234 = vld [vmem:[%s637 + $0x18] sm:$0xf]
        %v2235 = vld [vmem:[%s637 + $0x1c] sm:$0xf]
        %v2236 = vld [vmem:[%s637 + $0x20] sm:$0xf]
        %v2237 = vld [vmem:[%s637 + $0x24] sm:$0xf]
        %v2238 = vld [vmem:[%s637 + $0x28] sm:$0xf]
        %v2239 = vld [vmem:[%s637 + $0x2c] sm:$0xf]
        %v2240 = vld [vmem:[%s637 + $0x30] sm:$0xf]
        %v2241 = vld [vmem:[%s637 + $0x34] sm:$0xf]
        %v2242 = vld [vmem:[%s637 + $0x38] sm:$0xf]
        %v2243 = vld [vmem:[%s637 + $0x3c] sm:$0xf]
        %v2244 = vld [vmem:[%s776] sm:$0x1]
        %v2245 = vunpack.c.l.bf16 %v2244
        %v2246 = vlaneseq
        %v2247 = vshrl.u32 %v2246, 7
        %v2248 = vsub.s32 0, %v2247
        %v2249 = vrot.slane %v2245, %v2248
        %v2266 = vunpack.c.l.b16 %v2228
        %v2267 = vunpack.c.l.b16 %v2229
        %v2268 = vunpack.c.l.b16 %v2230
        %v2269 = vunpack.c.l.b16 %v2231
        %v2270 = vunpack.c.l.b16 %v2232
        %v2271 = vunpack.c.l.b16 %v2233
        %v2272 = vunpack.c.l.b16 %v2234
        %v2273 = vunpack.c.l.b16 %v2235
        %v2274 = vunpack.c.l.b16 %v2236
        %v2275 = vunpack.c.l.b16 %v2237
        %v2276 = vunpack.c.l.b16 %v2238
        %v2277 = vunpack.c.l.b16 %v2239
        %v2278 = vunpack.c.l.b16 %v2240
        %v2279 = vunpack.c.l.b16 %v2241
        %v2280 = vunpack.c.l.b16 %v2242
        %v2281 = vunpack.c.l.b16 %v2243
        %v2282 = vpack.c.b16 %v2267, %v2266
        %v2283 = vpack.c.b16 %v2269, %v2268
        %v2284 = vpack.c.b16 %v2271, %v2270
        %v2285 = vpack.c.b16 %v2273, %v2272
        %v2286 = vpack.c.b16 %v2275, %v2274
        %v2287 = vpack.c.b16 %v2277, %v2276
        %v2288 = vpack.c.b16 %v2279, %v2278
        %v2289 = vpack.c.b16 %v2281, %v2280
        %2298 = vmatprep.subr.bf16.mxu0 0
        %2299 = vmatpush1.bf16.msra.mxu0 %v2282
        %2300 = vmatprep.subr.bf16.mxu0 0
        %2301 = vmatpush1.bf16.msra.mxu0 %v2283
        %2302 = vmatprep.subr.bf16.mxu0 0
        %2303 = vmatpush1.bf16.msra.mxu0 %v2284
        %2304 = vmatprep.subr.bf16.mxu0 0
        %2305 = vmatpush1.bf16.msra.mxu0 %v2285
        %2306 = vmatprep.subr.bf16.mxu0 0
        %2307 = vmatpush1.bf16.msra.mxu0 %v2286
        %2308 = vmatprep.subr.bf16.mxu0 0
        %2309 = vmatpush1.bf16.msra.mxu0 %v2287
        %2310 = vmatprep.subr.bf16.mxu0 0
        %2311 = vmatpush1.bf16.msra.mxu0 %v2288
        %2312 = vmatprep.subr.bf16.mxu0 0
        %2313 = vmatpush1.bf16.msra.mxu0 %v2289
        %2314 = vmatprep.subr.bf16.mxu0 0
        %2315 = vmatpush1.bf16.msra.mxu0 0
        %2316 = vmatprep.subr.bf16.mxu0 0
        %2317 = vmatpush1.bf16.msra.mxu0 0
        %2318 = vmatprep.subr.bf16.mxu0 0
        %2319 = vmatpush1.bf16.msra.mxu0 0
        %2320 = vmatprep.subr.bf16.mxu0 0
        %2321 = vmatpush1.bf16.msra.mxu0 0
        %2322 = vmatprep.subr.bf16.mxu0 0
        %2323 = vmatpush1.bf16.msra.mxu0 0
        %2324 = vmatprep.subr.bf16.mxu0 0
        %2325 = vmatpush1.bf16.msra.mxu0 0
        %2326 = vmatprep.subr.bf16.mxu0 0
        %2327 = vmatpush1.bf16.msra.mxu0 0
        %2328 = vmatprep.subr.bf16.mxu0 0
        %2329 = vmatpush1.bf16.msra.mxu0 0
        %2330 = vmatprep.mubr.bf16.mxu0 0
        %2331 = vmatmul.mubr.bf16.gmra.mrb[0].mxu0 %v2226
        %v2332 = vpop.f32.mrb[0].mxu0
        %v2333 = vadd.f32 %v2249, %v2332
        %v2334 = vpop.f32.mrb[0].mxu0
        %v2335 = vpop.f32.mrb[0].mxu0
        %v2336 = vadd.f32 %v2249, %v2335
        %v2337 = vpop.f32.mrb[0].mxu0
        %2338 = vmatprep.mubr.bf16.mxu0 0
        %2339 = vmatmul.mubr.bf16.gmra.mrb[0].mxu0 %v2227
        %v2340 = vpop.f32.mrb[0].mxu0
        %v2341 = vadd.f32 %v2249, %v2340
        %v2342 = vpop.f32.mrb[0].mxu0
        %v2343 = vpop.f32.mrb[0].mxu0
        %v2344 = vadd.f32 %v2249, %v2343
        %v2345 = vpop.f32.mrb[0].mxu0
        %2346 = vdwg.mxu0
        %v2347 = vadd.f32 %v815, %v2333
        %v2348 = vadd.f32 %v816, %v2336
        %v2349 = vadd.f32 %v817, %v2341
        %v2350 = vadd.f32 %v818, %v2344
        %v2351 = vld [vmem:[%s779] sm:$0x1]
        %v2352 = vld [vmem:[%s782] sm:$0x1]
        %2353 = vadd.xlane.f32.xlu0 %v2347
        %v2354 = vpop.xlane.xlu0 %2353
        %2355 = vadd.xlane.f32.xlu0 %v2348
        %v2356 = vpop.xlane.xlu0 %2355
        %2357 = vadd.xlane.f32.xlu0 %v2349
        %v2358 = vpop.xlane.xlu0 %2357
        %2359 = vadd.xlane.f32.xlu0 %v2350
        %v2360 = vpop.xlane.xlu0 %2359
        %v2361 = vmul.f32 %v2354, %v829
        %v2362 = vmul.f32 %v2356, %v829
        %v2363 = vmul.f32 %v2358, %v829
        %v2364 = vmul.f32 %v2360, %v829
        %v2365 = vsub.f32 %v2347, %v2361
        %v2366 = vsub.f32 %v2348, %v2362
        %v2367 = vsub.f32 %v2349, %v2363
        %v2368 = vsub.f32 %v2350, %v2364
        %v2369 = vmul.f32 %v2365, %v2365
        %v2370 = vmul.f32 %v2366, %v2366
        %v2371 = vmul.f32 %v2367, %v2367
        %v2372 = vmul.f32 %v2368, %v2368
        %2373 = vadd.xlane.f32.xlu0 %v2369
        %v2374 = vpop.xlane.xlu0 %2373
        %2375 = vadd.xlane.f32.xlu0 %v2370
        %v2376 = vpop.xlane.xlu0 %2375
        %2377 = vadd.xlane.f32.xlu0 %v2371
        %v2378 = vpop.xlane.xlu0 %2377
        %2379 = vadd.xlane.f32.xlu0 %v2372
        %v2380 = vpop.xlane.xlu0 %2379
        %v2381 = vmul.f32 %v2374, %v829
        %v2382 = vmul.f32 %v2376, %v829
        %v2383 = vmul.f32 %v2378, %v829
        %v2384 = vmul.f32 %v2380, %v829
        %v2385 = vadd.f32 %v2381, 1e-05
        %v2386 = vadd.f32 %v2382, 1e-05
        %v2387 = vadd.f32 %v2383, 1e-05
        %v2388 = vadd.f32 %v2384, 1e-05
        %v2389 = vrsqrt.pop %v2385
        %v2390 = vrsqrt.pop %v2386
        %v2391 = vrsqrt.pop %v2387
        %v2392 = vrsqrt.pop %v2388
        %v2393 = vmul.f32 %v2365, %v2389
        %v2394 = vmul.f32 %v2366, %v2390
        %v2395 = vmul.f32 %v2367, %v2391
        %v2396 = vmul.f32 %v2368, %v2392
        %v2398 = vlaneseq
        %v2399 = vshrl.u32 %v2398, 7
        %v2400 = vsub.s32 0, %v2399
        %v2401 = vrot.slane %v2351, %v2400
        %v2403 = vmul.f32 %v2393, %v2401
        %v2404 = vmul.f32 %v2394, %v2401
        %v2405 = vmul.f32 %v2395, %v2401
        %v2406 = vmul.f32 %v2396, %v2401
        %v2408 = vlaneseq
        %v2409 = vshrl.u32 %v2408, 7
        %v2410 = vsub.s32 0, %v2409
        %v2411 = vrot.slane %v2352, %v2410
        %v2413 = vadd.f32 %v2403, %v2411
        %v2414 = vadd.f32 %v2404, %v2411
        %v2415 = vadd.f32 %v2405, %v2411
        %v2416 = vadd.f32 %v2406, %v2411
        %v2417 = vpack.c.bf16 %v2414, %v2413
        %v2418 = vpack.c.bf16 %v2416, %v2415
        %v2419 = vld [vmem:[%s646] sm:$0xff]
        %v2420 = vld [vmem:[%s646 + $0x8] sm:$0xff]
        %v2421 = vld [vmem:[%s646 + $0x10] sm:$0xff]
        %v2422 = vld [vmem:[%s646 + $0x18] sm:$0xff]
        %v2423 = vld [vmem:[%s646 + $0x20] sm:$0xff]
        %v2424 = vld [vmem:[%s646 + $0x28] sm:$0xff]
        %v2425 = vld [vmem:[%s646 + $0x30] sm:$0xff]
        %v2426 = vld [vmem:[%s646 + $0x38] sm:$0xff]
        %v2427 = vld [vmem:[%s646 + $0x40] sm:$0xff]
        %v2428 = vld [vmem:[%s646 + $0x48] sm:$0xff]
        %v2429 = vld [vmem:[%s646 + $0x50] sm:$0xff]
        %v2430 = vld [vmem:[%s646 + $0x58] sm:$0xff]
        %v2431 = vld [vmem:[%s646 + $0x60] sm:$0xff]
        %v2432 = vld [vmem:[%s646 + $0x68] sm:$0xff]
        %v2433 = vld [vmem:[%s646 + $0x70] sm:$0xff]
        %v2434 = vld [vmem:[%s646 + $0x78] sm:$0xff]
        %v2435 = vld [vmem:[%s646 + $0x80] sm:$0xff]
        %v2436 = vld [vmem:[%s646 + $0x88] sm:$0xff]
        %v2437 = vld [vmem:[%s646 + $0x90] sm:$0xff]
        %v2438 = vld [vmem:[%s646 + $0x98] sm:$0xff]
        %v2439 = vld [vmem:[%s646 + $0xa0] sm:$0xff]
        %v2440 = vld [vmem:[%s646 + $0xa8] sm:$0xff]
        %v2441 = vld [vmem:[%s646 + $0xb0] sm:$0xff]
        %v2442 = vld [vmem:[%s646 + $0xb8] sm:$0xff]
        %v2443 = vld [vmem:[%s646 + $0xc0] sm:$0xff]
        %v2444 = vld [vmem:[%s646 + $0xc8] sm:$0xff]
        %v2445 = vld [vmem:[%s646 + $0xd0] sm:$0xff]
        %v2446 = vld [vmem:[%s646 + $0xd8] sm:$0xff]
        %v2447 = vld [vmem:[%s646 + $0xe0] sm:$0xff]
        %v2448 = vld [vmem:[%s646 + $0xe8] sm:$0xff]
        %v2449 = vld [vmem:[%s646 + $0xf0] sm:$0xff]
        %v2450 = vld [vmem:[%s646 + $0xf8] sm:$0xff]
        %v2451 = vld [vmem:[%s786] sm:$0xf]
        %v2452 = vunpack.c.l.bf16 %v2451
        %v2454 = vlaneseq
        %v2455 = vshrl.u32 %v2454, 7
        %v2456 = vsub.s32 0, %v2455
        %v2457 = vrot.slane %v2452, %v2456
        %v2458 = vlaneseq
        %v2459 = vshrl.u32 %v2458, 7
        %v2460 = vsub.s32 2, %v2459
        %v2461 = vrot.slane %v2452, %v2460
        %v2462 = vlaneseq
        %v2463 = vshrl.u32 %v2462, 7
        %v2464 = vsub.s32 4, %v2463
        %v2465 = vrot.slane %v2452, %v2464
        %v2466 = vlaneseq
        %v2467 = vshrl.u32 %v2466, 7
        %v2468 = vsub.s32 6, %v2467
        %v2469 = vrot.slane %v2452, %v2468
        %v2474 = vlaneseq
        %v2475 = vshrl.u32 %v2474, 7
        %v2476 = vsub.s32 0, %v2475
        %v2477 = vrot.slane %v2457, %v2476
        %v2478 = vlaneseq
        %v2479 = vshrl.u32 %v2478, 7
        %v2480 = vsub.s32 0, %v2479
        %v2481 = vrot.slane %v2461, %v2480
        %v2482 = vlaneseq
        %v2483 = vshrl.u32 %v2482, 7
        %v2484 = vsub.s32 0, %v2483
        %v2485 = vrot.slane %v2465, %v2484
        %v2486 = vlaneseq
        %v2487 = vshrl.u32 %v2486, 7
        %v2488 = vsub.s32 0, %v2487
        %v2489 = vrot.slane %v2469, %v2488
        %v2522 = vunpack.c.l.b16 %v2419
        %v2523 = vunpack.c.h.b16 %v2419
        %v2524 = vunpack.c.l.b16 %v2420
        %v2525 = vunpack.c.h.b16 %v2420
        %v2526 = vunpack.c.l.b16 %v2421
        %v2527 = vunpack.c.h.b16 %v2421
        %v2528 = vunpack.c.l.b16 %v2422
        %v2529 = vunpack.c.h.b16 %v2422
        %v2530 = vunpack.c.l.b16 %v2423
        %v2531 = vunpack.c.h.b16 %v2423
        %v2532 = vunpack.c.l.b16 %v2424
        %v2533 = vunpack.c.h.b16 %v2424
        %v2534 = vunpack.c.l.b16 %v2425
        %v2535 = vunpack.c.h.b16 %v2425
        %v2536 = vunpack.c.l.b16 %v2426
        %v2537 = vunpack.c.h.b16 %v2426
        %v2538 = vunpack.c.l.b16 %v2427
        %v2539 = vunpack.c.h.b16 %v2427
        %v2540 = vunpack.c.l.b16 %v2428
        %v2541 = vunpack.c.h.b16 %v2428
        %v2542 = vunpack.c.l.b16 %v2429
        %v2543 = vunpack.c.h.b16 %v2429
        %v2544 = vunpack.c.l.b16 %v2430
        %v2545 = vunpack.c.h.b16 %v2430
        %v2546 = vunpack.c.l.b16 %v2431
        %v2547 = vunpack.c.h.b16 %v2431
        %v2548 = vunpack.c.l.b16 %v2432
        %v2549 = vunpack.c.h.b16 %v2432
        %v2550 = vunpack.c.l.b16 %v2433
        %v2551 = vunpack.c.h.b16 %v2433
        %v2552 = vunpack.c.l.b16 %v2434
        %v2553 = vunpack.c.h.b16 %v2434
        %v2554 = vunpack.c.l.b16 %v2435
        %v2555 = vunpack.c.h.b16 %v2435
        %v2556 = vunpack.c.l.b16 %v2436
        %v2557 = vunpack.c.h.b16 %v2436
        %v2558 = vunpack.c.l.b16 %v2437
        %v2559 = vunpack.c.h.b16 %v2437
        %v2560 = vunpack.c.l.b16 %v2438
        %v2561 = vunpack.c.h.b16 %v2438
        %v2562 = vunpack.c.l.b16 %v2439
        %v2563 = vunpack.c.h.b16 %v2439
        %v2564 = vunpack.c.l.b16 %v2440
        %v2565 = vunpack.c.h.b16 %v2440
        %v2566 = vunpack.c.l.b16 %v2441
        %v2567 = vunpack.c.h.b16 %v2441
        %v2568 = vunpack.c.l.b16 %v2442
        %v2569 = vunpack.c.h.b16 %v2442
        %v2570 = vunpack.c.l.b16 %v2443
        %v2571 = vunpack.c.h.b16 %v2443
        %v2572 = vunpack.c.l.b16 %v2444
        %v2573 = vunpack.c.h.b16 %v2444
        %v2574 = vunpack.c.l.b16 %v2445
        %v2575 = vunpack.c.h.b16 %v2445
        %v2576 = vunpack.c.l.b16 %v2446
        %v2577 = vunpack.c.h.b16 %v2446
        %v2578 = vunpack.c.l.b16 %v2447
        %v2579 = vunpack.c.h.b16 %v2447
        %v2580 = vunpack.c.l.b16 %v2448
        %v2581 = vunpack.c.h.b16 %v2448
        %v2582 = vunpack.c.l.b16 %v2449
        %v2583 = vunpack.c.h.b16 %v2449
        %v2584 = vunpack.c.l.b16 %v2450
        %v2585 = vunpack.c.h.b16 %v2450
        %v2586 = vpack.c.b16 %v2526, %v2522
        %v2587 = vpack.c.b16 %v2527, %v2523
        %v2588 = vpack.c.b16 %v2528, %v2524
        %v2589 = vpack.c.b16 %v2529, %v2525
        %v2590 = vpack.c.b16 %v2534, %v2530
        %v2591 = vpack.c.b16 %v2535, %v2531
        %v2592 = vpack.c.b16 %v2536, %v2532
        %v2593 = vpack.c.b16 %v2537, %v2533
        %v2594 = vpack.c.b16 %v2542, %v2538
        %v2595 = vpack.c.b16 %v2543, %v2539
        %v2596 = vpack.c.b16 %v2544, %v2540
        %v2597 = vpack.c.b16 %v2545, %v2541
        %v2598 = vpack.c.b16 %v2550, %v2546
        %v2599 = vpack.c.b16 %v2551, %v2547
        %v2600 = vpack.c.b16 %v2552, %v2548
        %v2601 = vpack.c.b16 %v2553, %v2549
        %v2602 = vpack.c.b16 %v2558, %v2554
        %v2603 = vpack.c.b16 %v2559, %v2555
        %v2604 = vpack.c.b16 %v2560, %v2556
        %v2605 = vpack.c.b16 %v2561, %v2557
        %v2606 = vpack.c.b16 %v2566, %v2562
        %v2607 = vpack.c.b16 %v2567, %v2563
        %v2608 = vpack.c.b16 %v2568, %v2564
        %v2609 = vpack.c.b16 %v2569, %v2565
        %v2610 = vpack.c.b16 %v2574, %v2570
        %v2611 = vpack.c.b16 %v2575, %v2571
        %v2612 = vpack.c.b16 %v2576, %v2572
        %v2613 = vpack.c.b16 %v2577, %v2573
        %v2614 = vpack.c.b16 %v2582, %v2578
        %v2615 = vpack.c.b16 %v2583, %v2579
        %v2616 = vpack.c.b16 %v2584, %v2580
        %v2617 = vpack.c.b16 %v2585, %v2581
        %2650 = vmatprep.subr.bf16.mxu0 %v2587
        %2651 = vmatpush1.bf16.msra.mxu0 %v2586
        %2652 = vmatprep.subr.bf16.mxu0 %v2591
        %2653 = vmatpush1.bf16.msra.mxu0 %v2590
        %2654 = vmatprep.subr.bf16.mxu0 %v2595
        %2655 = vmatpush1.bf16.msra.mxu0 %v2594
        %2656 = vmatprep.subr.bf16.mxu0 %v2599
        %2657 = vmatpush1.bf16.msra.mxu0 %v2598
        %2658 = vmatprep.subr.bf16.mxu0 %v2603
        %2659 = vmatpush1.bf16.msra.mxu0 %v2602
        %2660 = vmatprep.subr.bf16.mxu0 %v2607
        %2661 = vmatpush1.bf16.msra.mxu0 %v2606
        %2662 = vmatprep.subr.bf16.mxu0 %v2611
        %2663 = vmatpush1.bf16.msra.mxu0 %v2610
        %2664 = vmatprep.subr.bf16.mxu0 %v2615
        %2665 = vmatpush1.bf16.msra.mxu0 %v2614
        %2666 = vmatprep.subr.bf16.mxu0 0
        %2667 = vmatpush1.bf16.msra.mxu0 0
        %2668 = vmatprep.subr.bf16.mxu0 0
        %2669 = vmatpush1.bf16.msra.mxu0 0
        %2670 = vmatprep.subr.bf16.mxu0 0
        %2671 = vmatpush1.bf16.msra.mxu0 0
        %2672 = vmatprep.subr.bf16.mxu0 0
        %2673 = vmatpush1.bf16.msra.mxu0 0
        %2674 = vmatprep.subr.bf16.mxu0 0
        %2675 = vmatpush1.bf16.msra.mxu0 0
        %2676 = vmatprep.subr.bf16.mxu0 0
        %2677 = vmatpush1.bf16.msra.mxu0 0
        %2678 = vmatprep.subr.bf16.mxu0 0
        %2679 = vmatpush1.bf16.msra.mxu0 0
        %2680 = vmatprep.subr.bf16.mxu0 0
        %2681 = vmatpush1.bf16.msra.mxu0 0
        %2682 = vmatprep.mubr.bf16.mxu0 0
        %2683 = vmatmul.mubr.bf16.gmra.mrb[0].mxu0 %v2417
        %v2684 = vpop.f32.mrb[0].mxu0
        %v2685 = vadd.f32 %v2477, %v2684
        %v2686 = vpop.f32.mrb[0].mxu0
        %v2687 = vadd.f32 %v2481, %v2686
        %v2688 = vpop.f32.mrb[0].mxu0
        %v2689 = vadd.f32 %v2477, %v2688
        %v2690 = vpop.f32.mrb[0].mxu0
        %v2691 = vadd.f32 %v2481, %v2690
        %2692 = vmatprep.mubr.bf16.mxu0 0
        %2693 = vmatmul.mubr.bf16.gmra.mrb[0].mxu0 %v2418
        %v2694 = vpop.f32.mrb[0].mxu0
        %v2695 = vadd.f32 %v2477, %v2694
        %v2696 = vpop.f32.mrb[0].mxu0
        %v2697 = vadd.f32 %v2481, %v2696
        %v2698 = vpop.f32.mrb[0].mxu0
        %v2699 = vadd.f32 %v2477, %v2698
        %v2700 = vpop.f32.mrb[0].mxu0
        %v2701 = vadd.f32 %v2481, %v2700
        %2702 = vdwg.mxu0
        %2703 = vmatprep.subr.bf16.mxu0 %v2589
        %2704 = vmatpush1.bf16.msra.mxu0 %v2588
        %2705 = vmatprep.subr.bf16.mxu0 %v2593
        %2706 = vmatpush1.bf16.msra.mxu0 %v2592
        %2707 = vmatprep.subr.bf16.mxu0 %v2597
        %2708 = vmatpush1.bf16.msra.mxu0 %v2596
        %2709 = vmatprep.subr.bf16.mxu0 %v2601
        %2710 = vmatpush1.bf16.msra.mxu0 %v2600
        %2711 = vmatprep.subr.bf16.mxu0 %v2605
        %2712 = vmatpush1.bf16.msra.mxu0 %v2604
        %2713 = vmatprep.subr.bf16.mxu0 %v2609
        %2714 = vmatpush1.bf16.msra.mxu0 %v2608
        %2715 = vmatprep.subr.bf16.mxu0 %v2613
        %2716 = vmatpush1.bf16.msra.mxu0 %v2612
        %2717 = vmatprep.subr.bf16.mxu0 %v2617
        %2718 = vmatpush1.bf16.msra.mxu0 %v2616
        %2719 = vmatprep.subr.bf16.mxu0 0
        %2720 = vmatpush1.bf16.msra.mxu0 0
        %2721 = vmatprep.subr.bf16.mxu0 0
        %2722 = vmatpush1.bf16.msra.mxu0 0
        %2723 = vmatprep.subr.bf16.mxu0 0
        %2724 = vmatpush1.bf16.msra.mxu0 0
        %2725 = vmatprep.subr.bf16.mxu0 0
        %2726 = vmatpush1.bf16.msra.mxu0 0
        %2727 = vmatprep.subr.bf16.mxu0 0
        %2728 = vmatpush1.bf16.msra.mxu0 0
        %2729 = vmatprep.subr.bf16.mxu0 0
        %2730 = vmatpush1.bf16.msra.mxu0 0
        %2731 = vmatprep.subr.bf16.mxu0 0
        %2732 = vmatpush1.bf16.msra.mxu0 0
        %2733 = vmatprep.subr.bf16.mxu0 0
        %2734 = vmatpush1.bf16.msra.mxu0 0
        %2735 = vmatprep.mubr.bf16.mxu0 0
        %2736 = vmatmul.mubr.bf16.gmra.mrb[0].mxu0 %v2417
        %v2737 = vpop.f32.mrb[0].mxu0
        %v2738 = vadd.f32 %v2485, %v2737
        %v2739 = vpop.f32.mrb[0].mxu0
        %v2740 = vadd.f32 %v2489, %v2739
        %v2741 = vpop.f32.mrb[0].mxu0
        %v2742 = vadd.f32 %v2485, %v2741
        %v2743 = vpop.f32.mrb[0].mxu0
        %v2744 = vadd.f32 %v2489, %v2743
        %2745 = vmatprep.mubr.bf16.mxu0 0
        %2746 = vmatmul.mubr.bf16.gmra.mrb[0].mxu0 %v2418
        %v2747 = vpop.f32.mrb[0].mxu0
        %v2748 = vadd.f32 %v2485, %v2747
        %v2749 = vpop.f32.mrb[0].mxu0
        %v2750 = vadd.f32 %v2489, %v2749
        %v2751 = vpop.f32.mrb[0].mxu0
        %v2752 = vadd.f32 %v2485, %v2751
        %v2753 = vpop.f32.mrb[0].mxu0
        %v2754 = vadd.f32 %v2489, %v2753
        %2755 = vdwg.mxu0
        %v2756 = vmul.f32 %v2685, %v2685
        %v2757 = vmul.f32 %v2687, %v2687
        %v2758 = vmul.f32 %v2738, %v2738
        %v2759 = vmul.f32 %v2740, %v2740
        %v2760 = vmul.f32 %v2689, %v2689
        %v2761 = vmul.f32 %v2691, %v2691
        %v2762 = vmul.f32 %v2742, %v2742
        %v2763 = vmul.f32 %v2744, %v2744
        %v2764 = vmul.f32 %v2695, %v2695
        %v2765 = vmul.f32 %v2697, %v2697
        %v2766 = vmul.f32 %v2748, %v2748
        %v2767 = vmul.f32 %v2750, %v2750
        %v2768 = vmul.f32 %v2699, %v2699
        %v2769 = vmul.f32 %v2701, %v2701
        %v2770 = vmul.f32 %v2752, %v2752
        %v2771 = vmul.f32 %v2754, %v2754
        %v2772 = vmul.f32 %v2685, %v2756
        %v2773 = vmul.f32 %v2687, %v2757
        %v2774 = vmul.f32 %v2738, %v2758
        %v2775 = vmul.f32 %v2740, %v2759
        %v2776 = vmul.f32 %v2689, %v2760
        %v2777 = vmul.f32 %v2691, %v2761
        %v2778 = vmul.f32 %v2742, %v2762
        %v2779 = vmul.f32 %v2744, %v2763
        %v2780 = vmul.f32 %v2695, %v2764
        %v2781 = vmul.f32 %v2697, %v2765
        %v2782 = vmul.f32 %v2748, %v2766
        %v2783 = vmul.f32 %v2750, %v2767
        %v2784 = vmul.f32 %v2699, %v2768
        %v2785 = vmul.f32 %v2701, %v2769
        %v2786 = vmul.f32 %v2752, %v2770
        %v2787 = vmul.f32 %v2754, %v2771
        %v2788 = vmul.f32 %v2772, 0.044715
        %v2789 = vmul.f32 %v2773, 0.044715
        %v2790 = vmul.f32 %v2774, 0.044715
        %v2791 = vmul.f32 %v2775, 0.044715
        %v2792 = vmul.f32 %v2776, 0.044715
        %v2793 = vmul.f32 %v2777, 0.044715
        %v2794 = vmul.f32 %v2778, 0.044715
        %v2795 = vmul.f32 %v2779, 0.044715
        %v2796 = vmul.f32 %v2780, 0.044715
        %v2797 = vmul.f32 %v2781, 0.044715
        %v2798 = vmul.f32 %v2782, 0.044715
        %v2799 = vmul.f32 %v2783, 0.044715
        %v2800 = vmul.f32 %v2784, 0.044715
        %v2801 = vmul.f32 %v2785, 0.044715
        %v2802 = vmul.f32 %v2786, 0.044715
        %v2803 = vmul.f32 %v2787, 0.044715
        %v2804 = vadd.f32 %v2685, %v2788
        %v2805 = vadd.f32 %v2687, %v2789
        %v2806 = vadd.f32 %v2738, %v2790
        %v2807 = vadd.f32 %v2740, %v2791
        %v2808 = vadd.f32 %v2689, %v2792
        %v2809 = vadd.f32 %v2691, %v2793
        %v2810 = vadd.f32 %v2742, %v2794
        %v2811 = vadd.f32 %v2744, %v2795
        %v2812 = vadd.f32 %v2695, %v2796
        %v2813 = vadd.f32 %v2697, %v2797
        %v2814 = vadd.f32 %v2748, %v2798
        %v2815 = vadd.f32 %v2750, %v2799
        %v2816 = vadd.f32 %v2699, %v2800
        %v2817 = vadd.f32 %v2701, %v2801
        %v2818 = vadd.f32 %v2752, %v2802
        %v2819 = vadd.f32 %v2754, %v2803
        %v2820 = vmul.f32 %v2804, 0.7978846
        %v2821 = vmul.f32 %v2805, 0.7978846
        %v2822 = vmul.f32 %v2806, 0.7978846
        %v2823 = vmul.f32 %v2807, 0.7978846
        %v2824 = vmul.f32 %v2808, 0.7978846
        %v2825 = vmul.f32 %v2809, 0.7978846
        %v2826 = vmul.f32 %v2810, 0.7978846
        %v2827 = vmul.f32 %v2811, 0.7978846
        %v2828 = vmul.f32 %v2812, 0.7978846
        %v2829 = vmul.f32 %v2813, 0.7978846
        %v2830 = vmul.f32 %v2814, 0.7978846
        %v2831 = vmul.f32 %v2815, 0.7978846
        %v2832 = vmul.f32 %v2816, 0.7978846
        %v2833 = vmul.f32 %v2817, 0.7978846
        %v2834 = vmul.f32 %v2818, 0.7978846
        %v2835 = vmul.f32 %v2819, 0.7978846
        %v2836 = vtanh.pop %v2820
        %v2837 = vtanh.pop %v2821
        %v2838 = vtanh.pop %v2822
        %v2839 = vtanh.pop %v2823
        %v2840 = vtanh.pop %v2824
        %v2841 = vtanh.pop %v2825
        %v2842 = vtanh.pop %v2826
        %v2843 = vtanh.pop %v2827
        %v2844 = vtanh.pop %v2828
        %v2845 = vtanh.pop %v2829
        %v2846 = vtanh.pop %v2830
        %v2847 = vtanh.pop %v2831
        %v2848 = vtanh.pop %v2832
        %v2849 = vtanh.pop %v2833
        %v2850 = vtanh.pop %v2834
        %v2851 = vtanh.pop %v2835
        %v2852 = vadd.f32 %v2836, 1.0
        %v2853 = vadd.f32 %v2837, 1.0
        %v2854 = vadd.f32 %v2838, 1.0
        %v2855 = vadd.f32 %v2839, 1.0
        %v2856 = vadd.f32 %v2840, 1.0
        %v2857 = vadd.f32 %v2841, 1.0
        %v2858 = vadd.f32 %v2842, 1.0
        %v2859 = vadd.f32 %v2843, 1.0
        %v2860 = vadd.f32 %v2844, 1.0
        %v2861 = vadd.f32 %v2845, 1.0
        %v2862 = vadd.f32 %v2846, 1.0
        %v2863 = vadd.f32 %v2847, 1.0
        %v2864 = vadd.f32 %v2848, 1.0
        %v2865 = vadd.f32 %v2849, 1.0
        %v2866 = vadd.f32 %v2850, 1.0
        %v2867 = vadd.f32 %v2851, 1.0
        %v2868 = vmul.f32 %v2852, 0.5
        %v2869 = vmul.f32 %v2853, 0.5
        %v2870 = vmul.f32 %v2854, 0.5
        %v2871 = vmul.f32 %v2855, 0.5
        %v2872 = vmul.f32 %v2856, 0.5
        %v2873 = vmul.f32 %v2857, 0.5
        %v2874 = vmul.f32 %v2858, 0.5
        %v2875 = vmul.f32 %v2859, 0.5
        %v2876 = vmul.f32 %v2860, 0.5
        %v2877 = vmul.f32 %v2861, 0.5
        %v2878 = vmul.f32 %v2862, 0.5
        %v2879 = vmul.f32 %v2863, 0.5
        %v2880 = vmul.f32 %v2864, 0.5
        %v2881 = vmul.f32 %v2865, 0.5
        %v2882 = vmul.f32 %v2866, 0.5
        %v2883 = vmul.f32 %v2867, 0.5
        %v2884 = vmul.f32 %v2685, %v2868
        %v2885 = vmul.f32 %v2687, %v2869
        %v2886 = vmul.f32 %v2738, %v2870
        %v2887 = vmul.f32 %v2740, %v2871
        %v2888 = vmul.f32 %v2689, %v2872
        %v2889 = vmul.f32 %v2691, %v2873
        %v2890 = vmul.f32 %v2742, %v2874
        %v2891 = vmul.f32 %v2744, %v2875
        %v2892 = vmul.f32 %v2695, %v2876
        %v2893 = vmul.f32 %v2697, %v2877
        %v2894 = vmul.f32 %v2748, %v2878
        %v2895 = vmul.f32 %v2750, %v2879
        %v2896 = vmul.f32 %v2699, %v2880
        %v2897 = vmul.f32 %v2701, %v2881
        %v2898 = vmul.f32 %v2752, %v2882
        %v2899 = vmul.f32 %v2754, %v2883
        %v2900 = vpack.c.bf16 %v2888, %v2884
        %v2901 = vpack.c.bf16 %v2889, %v2885
        %v2902 = vpack.c.bf16 %v2890, %v2886
        %v2903 = vpack.c.bf16 %v2891, %v2887
        %v2904 = vpack.c.bf16 %v2896, %v2892
        %v2905 = vpack.c.bf16 %v2897, %v2893
        %v2906 = vpack.c.bf16 %v2898, %v2894
        %v2907 = vpack.c.bf16 %v2899, %v2895
        %v2908 = vld [vmem:[%s655] sm:$0xf]
        %v2909 = vld [vmem:[%s655 + $0x4] sm:$0xf]
        %v2910 = vld [vmem:[%s655 + $0x8] sm:$0xf]
        %v2911 = vld [vmem:[%s655 + $0xc] sm:$0xf]
        %v2912 = vld [vmem:[%s655 + $0x10] sm:$0xf]
        %v2913 = vld [vmem:[%s655 + $0x14] sm:$0xf]
        %v2914 = vld [vmem:[%s655 + $0x18] sm:$0xf]
        %v2915 = vld [vmem:[%s655 + $0x1c] sm:$0xf]
        %v2916 = vld [vmem:[%s655 + $0x20] sm:$0xf]
        %v2917 = vld [vmem:[%s655 + $0x24] sm:$0xf]
        %v2918 = vld [vmem:[%s655 + $0x28] sm:$0xf]
        %v2919 = vld [vmem:[%s655 + $0x2c] sm:$0xf]
        %v2920 = vld [vmem:[%s655 + $0x30] sm:$0xf]
        %v2921 = vld [vmem:[%s655 + $0x34] sm:$0xf]
        %v2922 = vld [vmem:[%s655 + $0x38] sm:$0xf]
        %v2923 = vld [vmem:[%s655 + $0x3c] sm:$0xf]
        %v2924 = vld [vmem:[%s655 + $0x40] sm:$0xf]
        %v2925 = vld [vmem:[%s655 + $0x44] sm:$0xf]
        %v2926 = vld [vmem:[%s655 + $0x48] sm:$0xf]
        %v2927 = vld [vmem:[%s655 + $0x4c] sm:$0xf]
        %v2928 = vld [vmem:[%s655 + $0x50] sm:$0xf]
        %v2929 = vld [vmem:[%s655 + $0x54] sm:$0xf]
        %v2930 = vld [vmem:[%s655 + $0x58] sm:$0xf]
        %v2931 = vld [vmem:[%s655 + $0x5c] sm:$0xf]
        %v2932 = vld [vmem:[%s655 + $0x60] sm:$0xf]
        %v2933 = vld [vmem:[%s655 + $0x64] sm:$0xf]
        %v2934 = vld [vmem:[%s655 + $0x68] sm:$0xf]
        %v2935 = vld [vmem:[%s655 + $0x6c] sm:$0xf]
        %v2936 = vld [vmem:[%s655 + $0x70] sm:$0xf]
        %v2937 = vld [vmem:[%s655 + $0x74] sm:$0xf]
        %v2938 = vld [vmem:[%s655 + $0x78] sm:$0xf]
        %v2939 = vld [vmem:[%s655 + $0x7c] sm:$0xf]
        %v2940 = vld [vmem:[%s655 + $0x80] sm:$0xf]
        %v2941 = vld [vmem:[%s655 + $0x84] sm:$0xf]
        %v2942 = vld [vmem:[%s655 + $0x88] sm:$0xf]
        %v2943 = vld [vmem:[%s655 + $0x8c] sm:$0xf]
        %v2944 = vld [vmem:[%s655 + $0x90] sm:$0xf]
        %v2945 = vld [vmem:[%s655 + $0x94] sm:$0xf]
        %v2946 = vld [vmem:[%s655 + $0x98] sm:$0xf]
        %v2947 = vld [vmem:[%s655 + $0x9c] sm:$0xf]
        %v2948 = vld [vmem:[%s655 + $0xa0] sm:$0xf]
        %v2949 = vld [vmem:[%s655 + $0xa4] sm:$0xf]
        %v2950 = vld [vmem:[%s655 + $0xa8] sm:$0xf]
        %v2951 = vld [vmem:[%s655 + $0xac] sm:$0xf]
        %v2952 = vld [vmem:[%s655 + $0xb0] sm:$0xf]
        %v2953 = vld [vmem:[%s655 + $0xb4] sm:$0xf]
        %v2954 = vld [vmem:[%s655 + $0xb8] sm:$0xf]
        %v2955 = vld [vmem:[%s655 + $0xbc] sm:$0xf]
        %v2956 = vld [vmem:[%s655 + $0xc0] sm:$0xf]
        %v2957 = vld [vmem:[%s655 + $0xc4] sm:$0xf]
        %v2958 = vld [vmem:[%s655 + $0xc8] sm:$0xf]
        %v2959 = vld [vmem:[%s655 + $0xcc] sm:$0xf]
        %v2960 = vld [vmem:[%s655 + $0xd0] sm:$0xf]
        %v2961 = vld [vmem:[%s655 + $0xd4] sm:$0xf]
        %v2962 = vld [vmem:[%s655 + $0xd8] sm:$0xf]
        %v2963 = vld [vmem:[%s655 + $0xdc] sm:$0xf]
        %v2964 = vld [vmem:[%s655 + $0xe0] sm:$0xf]
        %v2965 = vld [vmem:[%s655 + $0xe4] sm:$0xf]
        %v2966 = vld [vmem:[%s655 + $0xe8] sm:$0xf]
        %v2967 = vld [vmem:[%s655 + $0xec] sm:$0xf]
        %v2968 = vld [vmem:[%s655 + $0xf0] sm:$0xf]
        %v2969 = vld [vmem:[%s655 + $0xf4] sm:$0xf]
        %v2970 = vld [vmem:[%s655 + $0xf8] sm:$0xf]
        %v2971 = vld [vmem:[%s655 + $0xfc] sm:$0xf]
        %v2972 = vld [vmem:[%s789] sm:$0x1]
        %v2973 = vunpack.c.l.bf16 %v2972
        %v2974 = vlaneseq
        %v2975 = vshrl.u32 %v2974, 7
        %v2976 = vsub.s32 0, %v2975
        %v2977 = vrot.slane %v2973, %v2976
        %v3042 = vunpack.c.l.b16 %v2908
        %v3043 = vunpack.c.l.b16 %v2909
        %v3044 = vunpack.c.l.b16 %v2910
        %v3045 = vunpack.c.l.b16 %v2911
        %v3046 = vunpack.c.l.b16 %v2912
        %v3047 = vunpack.c.l.b16 %v2913
        %v3048 = vunpack.c.l.b16 %v2914
        %v3049 = vunpack.c.l.b16 %v2915
        %v3050 = vunpack.c.l.b16 %v2916
        %v3051 = vunpack.c.l.b16 %v2917
        %v3052 = vunpack.c.l.b16 %v2918
        %v3053 = vunpack.c.l.b16 %v2919
        %v3054 = vunpack.c.l.b16 %v2920
        %v3055 = vunpack.c.l.b16 %v2921
        %v3056 = vunpack.c.l.b16 %v2922
        %v3057 = vunpack.c.l.b16 %v2923
        %v3058 = vunpack.c.l.b16 %v2924
        %v3059 = vunpack.c.l.b16 %v2925
        %v3060 = vunpack.c.l.b16 %v2926
        %v3061 = vunpack.c.l.b16 %v2927
        %v3062 = vunpack.c.l.b16 %v2928
        %v3063 = vunpack.c.l.b16 %v2929
        %v3064 = vunpack.c.l.b16 %v2930
        %v3065 = vunpack.c.l.b16 %v2931
        %v3066 = vunpack.c.l.b16 %v2932
        %v3067 = vunpack.c.l.b16 %v2933
        %v3068 = vunpack.c.l.b16 %v2934
        %v3069 = vunpack.c.l.b16 %v2935
        %v3070 = vunpack.c.l.b16 %v2936
        %v3071 = vunpack.c.l.b16 %v2937
        %v3072 = vunpack.c.l.b16 %v2938
        %v3073 = vunpack.c.l.b16 %v2939
        %v3074 = vunpack.c.l.b16 %v2940
        %v3075 = vunpack.c.l.b16 %v2941
        %v3076 = vunpack.c.l.b16 %v2942
        %v3077 = vunpack.c.l.b16 %v2943
        %v3078 = vunpack.c.l.b16 %v2944
        %v3079 = vunpack.c.l.b16 %v2945
        %v3080 = vunpack.c.l.b16 %v2946
        %v3081 = vunpack.c.l.b16 %v2947
        %v3082 = vunpack.c.l.b16 %v2948
        %v3083 = vunpack.c.l.b16 %v2949
        %v3084 = vunpack.c.l.b16 %v2950
        %v3085 = vunpack.c.l.b16 %v2951
        %v3086 = vunpack.c.l.b16 %v2952
        %v3087 = vunpack.c.l.b16 %v2953
        %v3088 = vunpack.c.l.b16 %v2954
        %v3089 = vunpack.c.l.b16 %v2955
        %v3090 = vunpack.c.l.b16 %v2956
        %v3091 = vunpack.c.l.b16 %v2957
        %v3092 = vunpack.c.l.b16 %v2958
        %v3093 = vunpack.c.l.b16 %v2959
        %v3094 = vunpack.c.l.b16 %v2960
        %v3095 = vunpack.c.l.b16 %v2961
        %v3096 = vunpack.c.l.b16 %v2962
        %v3097 = vunpack.c.l.b16 %v2963
        %v3098 = vunpack.c.l.b16 %v2964
        %v3099 = vunpack.c.l.b16 %v2965
        %v3100 = vunpack.c.l.b16 %v2966
        %v3101 = vunpack.c.l.b16 %v2967
        %v3102 = vunpack.c.l.b16 %v2968
        %v3103 = vunpack.c.l.b16 %v2969
        %v3104 = vunpack.c.l.b16 %v2970
        %v3105 = vunpack.c.l.b16 %v2971
        %v3106 = vpack.c.b16 %v3043, %v3042
        %v3107 = vpack.c.b16 %v3045, %v3044
        %v3108 = vpack.c.b16 %v3047, %v3046
        %v3109 = vpack.c.b16 %v3049, %v3048
        %v3110 = vpack.c.b16 %v3051, %v3050
        %v3111 = vpack.c.b16 %v3053, %v3052
        %v3112 = vpack.c.b16 %v3055, %v3054
        %v3113 = vpack.c.b16 %v3057, %v3056
        %v3114 = vpack.c.b16 %v3059, %v3058
        %v3115 = vpack.c.b16 %v3061, %v3060
        %v3116 = vpack.c.b16 %v3063, %v3062
        %v3117 = vpack.c.b16 %v3065, %v3064
        %v3118 = vpack.c.b16 %v3067, %v3066
        %v3119 = vpack.c.b16 %v3069, %v3068
        %v3120 = vpack.c.b16 %v3071, %v3070
        %v3121 = vpack.c.b16 %v3073, %v3072
        %v3122 = vpack.c.b16 %v3075, %v3074
        %v3123 = vpack.c.b16 %v3077, %v3076
        %v3124 = vpack.c.b16 %v3079, %v3078
        %v3125 = vpack.c.b16 %v3081, %v3080
        %v3126 = vpack.c.b16 %v3083, %v3082
        %v3127 = vpack.c.b16 %v3085, %v3084
        %v3128 = vpack.c.b16 %v3087, %v3086
        %v3129 = vpack.c.b16 %v3089, %v3088
        %v3130 = vpack.c.b16 %v3091, %v3090
        %v3131 = vpack.c.b16 %v3093, %v3092
        %v3132 = vpack.c.b16 %v3095, %v3094
        %v3133 = vpack.c.b16 %v3097, %v3096
        %v3134 = vpack.c.b16 %v3099, %v3098
        %v3135 = vpack.c.b16 %v3101, %v3100
        %v3136 = vpack.c.b16 %v3103, %v3102
        %v3137 = vpack.c.b16 %v3105, %v3104
        %3170 = vmatprep.subr.bf16.mxu0 0
        %3171 = vmatpush1.bf16.msra.mxu0 %v3106
        %3172 = vmatprep.subr.bf16.mxu0 0
        %3173 = vmatpush1.bf16.msra.mxu0 %v3107
        %3174 = vmatprep.subr.bf16.mxu0 0
        %3175 = vmatpush1.bf16.msra.mxu0 %v3108
        %3176 = vmatprep.subr.bf16.mxu0 0
        %3177 = vmatpush1.bf16.msra.mxu0 %v3109
        %3178 = vmatprep.subr.bf16.mxu0 0
        %3179 = vmatpush1.bf16.msra.mxu0 %v3110
        %3180 = vmatprep.subr.bf16.mxu0 0
        %3181 = vmatpush1.bf16.msra.mxu0 %v3111
        %3182 = vmatprep.subr.bf16.mxu0 0
        %3183 = vmatpush1.bf16.msra.mxu0 %v3112
        %3184 = vmatprep.subr.bf16.mxu0 0
        %3185 = vmatpush1.bf16.msra.mxu0 %v3113
        %3186 = vmatprep.subr.bf16.mxu0 0
        %3187 = vmatpush1.bf16.msra.mxu0 %v3114
        %3188 = vmatprep.subr.bf16.mxu0 0
        %3189 = vmatpush1.bf16.msra.mxu0 %v3115
        %3190 = vmatprep.subr.bf16.mxu0 0
        %3191 = vmatpush1.bf16.msra.mxu0 %v3116
        %3192 = vmatprep.subr.bf16.mxu0 0
        %3193 = vmatpush1.bf16.msra.mxu0 %v3117
        %3194 = vmatprep.subr.bf16.mxu0 0
        %3195 = vmatpush1.bf16.msra.mxu0 %v3118
        %3196 = vmatprep.subr.bf16.mxu0 0
        %3197 = vmatpush1.bf16.msra.mxu0 %v3119
        %3198 = vmatprep.subr.bf16.mxu0 0
        %3199 = vmatpush1.bf16.msra.mxu0 %v3120
        %3200 = vmatprep.subr.bf16.mxu0 0
        %3201 = vmatpush1.bf16.msra.mxu0 %v3121
        %3202 = vmatprep.mubr.bf16.mxu0 %v2901
        %3203 = vmatmul.mubr.bf16.gmra.mrb[0].mxu0 %v2900
        %v3204 = vpop.f32.mrb[0].mxu0
        %v3205 = vadd.f32 %v2977, %v3204
        %v3206 = vpop.f32.mrb[0].mxu0
        %v3207 = vpop.f32.mrb[0].mxu0
        %v3208 = vadd.f32 %v2977, %v3207
        %v3209 = vpop.f32.mrb[0].mxu0
        %3210 = vmatprep.mubr.bf16.mxu0 %v2905
        %3211 = vmatmul.mubr.bf16.gmra.mrb[0].mxu0 %v2904
        %v3212 = vpop.f32.mrb[0].mxu0
        %v3213 = vadd.f32 %v2977, %v3212
        %v3214 = vpop.f32.mrb[0].mxu0
        %v3215 = vpop.f32.mrb[0].mxu0
        %v3216 = vadd.f32 %v2977, %v3215
        %v3217 = vpop.f32.mrb[0].mxu0
        %3218 = vdwg.mxu0
        %3219 = vmatprep.subr.bf16.mxu0 0
        %3220 = vmatpush1.bf16.msra.mxu0 %v3122
        %3221 = vmatprep.subr.bf16.mxu0 0
        %3222 = vmatpush1.bf16.msra.mxu0 %v3123
        %3223 = vmatprep.subr.bf16.mxu0 0
        %3224 = vmatpush1.bf16.msra.mxu0 %v3124
        %3225 = vmatprep.subr.bf16.mxu0 0
        %3226 = vmatpush1.bf16.msra.mxu0 %v3125
        %3227 = vmatprep.subr.bf16.mxu0 0
        %3228 = vmatpush1.bf16.msra.mxu0 %v3126
        %3229 = vmatprep.subr.bf16.mxu0 0
        %3230 = vmatpush1.bf16.msra.mxu0 %v3127
        %3231 = vmatprep.subr.bf16.mxu0 0
        %3232 = vmatpush1.bf16.msra.mxu0 %v3128
        %3233 = vmatprep.subr.bf16.mxu0 0
        %3234 = vmatpush1.bf16.msra.mxu0 %v3129
        %3235 = vmatprep.subr.bf16.mxu0 0
        %3236 = vmatpush1.bf16.msra.mxu0 %v3130
        %3237 = vmatprep.subr.bf16.mxu0 0
        %3238 = vmatpush1.bf16.msra.mxu0 %v3131
        %3239 = vmatprep.subr.bf16.mxu0 0
        %3240 = vmatpush1.bf16.msra.mxu0 %v3132
        %3241 = vmatprep.subr.bf16.mxu0 0
        %3242 = vmatpush1.bf16.msra.mxu0 %v3133
        %3243 = vmatprep.subr.bf16.mxu0 0
        %3244 = vmatpush1.bf16.msra.mxu0 %v3134
        %3245 = vmatprep.subr.bf16.mxu0 0
        %3246 = vmatpush1.bf16.msra.mxu0 %v3135
        %3247 = vmatprep.subr.bf16.mxu0 0
        %3248 = vmatpush1.bf16.msra.mxu0 %v3136
        %3249 = vmatprep.subr.bf16.mxu0 0
        %3250 = vmatpush1.bf16.msra.mxu0 %v3137
        %3251 = vmatprep.mubr.bf16.mxu0 %v2903
        %3252 = vmatmul.mubr.bf16.gmra.mrb[0].mxu0 %v2902
        %v3253 = vpop.f32.mrb[0].mxu0
        %v3254 = vadd.f32 %v3205, %v3253
        %v3255 = vpop.f32.mrb[0].mxu0
        %v3256 = vpop.f32.mrb[0].mxu0
        %v3257 = vadd.f32 %v3208, %v3256
        %v3258 = vpop.f32.mrb[0].mxu0
        %3259 = vmatprep.mubr.bf16.mxu0 %v2907
        %3260 = vmatmul.mubr.bf16.gmra.mrb[0].mxu0 %v2906
        %v3261 = vpop.f32.mrb[0].mxu0
        %v3262 = vadd.f32 %v3213, %v3261
        %v3263 = vpop.f32.mrb[0].mxu0
        %v3264 = vpop.f32.mrb[0].mxu0
        %v3265 = vadd.f32 %v3216, %v3264
        %v3266 = vpop.f32.mrb[0].mxu0
        %3267 = vdwg.mxu0
        %v3268 = vadd.f32 %v2347, %v3254
        %v3269 = vadd.f32 %v2348, %v3257
        %v3270 = vadd.f32 %v2349, %v3262
        %v3271 = vadd.f32 %v2350, %v3265
        %3272 = vst [vmem:[#allocation2] sm:$0xff] %v3268
        %3273 = vst [vmem:[#allocation2 + $0x8] sm:$0xff] %v3269
        %3274 = vst [vmem:[#allocation2 + $0x10] sm:$0xff] %v3270
        %3275 = vst [vmem:[#allocation2 + $0x18] sm:$0xff] %v3271
        %p3276 = scmp.eq.s32.totalorder %s38, 1
        // Predicated region
        $region101: #{idea_decoder_forward.2} parent=83 // pred_check
          %p3277 = pneg %p3276
        $region102: #{idea_decoder_forward.2} parent=83 // pred_check_branch
          %3279 = sbr.rel (%p3277) target = $region104
        $region103: #{idea_decoder_forward.2} parent=83 // pred_region
          %v3280 = vld [vmem:[%s14] sm:$0x1]
          %v3281 = vld [vmem:[%s15] sm:$0x1]
          %3282 = vadd.xlane.f32.xlu0 %v3268
          %v3283 = vpop.xlane.xlu0 %3282
          %3284 = vadd.xlane.f32.xlu0 %v3269
          %v3285 = vpop.xlane.xlu0 %3284
          %3286 = vadd.xlane.f32.xlu0 %v3270
          %v3287 = vpop.xlane.xlu0 %3286
          %3288 = vadd.xlane.f32.xlu0 %v3271
          %v3289 = vpop.xlane.xlu0 %3288
          %v3290 = vmul.f32 %v3283, %v829
          %v3291 = vmul.f32 %v3285, %v829
          %v3292 = vmul.f32 %v3287, %v829
          %v3293 = vmul.f32 %v3289, %v829
          %v3294 = vsub.f32 %v3268, %v3290
          %v3295 = vsub.f32 %v3269, %v3291
          %v3296 = vsub.f32 %v3270, %v3292
          %v3297 = vsub.f32 %v3271, %v3293
          %v3298 = vmul.f32 %v3294, %v3294
          %v3299 = vmul.f32 %v3295, %v3295
          %v3300 = vmul.f32 %v3296, %v3296
          %v3301 = vmul.f32 %v3297, %v3297
          %3302 = vadd.xlane.f32.xlu0 %v3298
          %v3303 = vpop.xlane.xlu0 %3302
          %3304 = vadd.xlane.f32.xlu0 %v3299
          %v3305 = vpop.xlane.xlu0 %3304
          %3306 = vadd.xlane.f32.xlu0 %v3300
          %v3307 = vpop.xlane.xlu0 %3306
          %3308 = vadd.xlane.f32.xlu0 %v3301
          %v3309 = vpop.xlane.xlu0 %3308
          %v3310 = vmul.f32 %v3303, %v829
          %v3311 = vmul.f32 %v3305, %v829
          %v3312 = vmul.f32 %v3307, %v829
          %v3313 = vmul.f32 %v3309, %v829
          %v3314 = vadd.f32 %v3310, 1e-05
          %v3315 = vadd.f32 %v3311, 1e-05
          %v3316 = vadd.f32 %v3312, 1e-05
          %v3317 = vadd.f32 %v3313, 1e-05
          %v3318 = vrsqrt.pop %v3314
          %v3319 = vrsqrt.pop %v3315
          %v3320 = vrsqrt.pop %v3316
          %v3321 = vrsqrt.pop %v3317
          %v3322 = vmul.f32 %v3294, %v3318
          %v3323 = vmul.f32 %v3295, %v3319
          %v3324 = vmul.f32 %v3296, %v3320
          %v3325 = vmul.f32 %v3297, %v3321
          %v3327 = vlaneseq
          %v3328 = vshrl.u32 %v3327, 7
          %v3329 = vsub.s32 0, %v3328
          %v3330 = vrot.slane %v3280, %v3329
          %v3332 = vmul.f32 %v3322, %v3330
          %v3333 = vmul.f32 %v3323, %v3330
          %v3334 = vmul.f32 %v3324, %v3330
          %v3335 = vmul.f32 %v3325, %v3330
          %v3337 = vlaneseq
          %v3338 = vshrl.u32 %v3337, 7
          %v3339 = vsub.s32 0, %v3338
          %v3340 = vrot.slane %v3281, %v3339
          %v3342 = vadd.f32 %v3332, %v3340
          %v3343 = vadd.f32 %v3333, %v3340
          %v3344 = vadd.f32 %v3334, %v3340
          %v3345 = vadd.f32 %v3335, %v3340
          %v3346 = vpack.c.bf16 %v3343, %v3342
          %v3347 = vpack.c.bf16 %v3345, %v3344
          %v3350 = vunpack.c.l.b16 %v3346
          %v3351 = vunpack.c.h.b16 %v3346
          %v3352 = vunpack.c.l.b16 %v3347
          %v3353 = vunpack.c.h.b16 %v3347
          %v3354 = vpack.c.b16 %v3350, %v3350
          %v3355 = vpack.c.b16 %v3351, %v3351
          %v3356 = vpack.c.b16 %v3352, %v3352
          %v3357 = vpack.c.b16 %v3353, %v3353
          %3362 = vst [vmem:[%s795] sm:$0xf] %v3354
          %3363 = vst [vmem:[%s795 + $0x4] sm:$0xf] %v3355
          %3364 = vst [vmem:[%s795 + $0x8] sm:$0xf] %v3356
          %3365 = vst [vmem:[%s795 + $0xc] sm:$0xf] %v3357
        $region104: #{idea_decoder_forward.2} parent=83 // pred_fallthru
          _
        %s3366 = smul.u32 2, %s37
        %p3367 = scmp.lt.s32.totalorder %s3366, 1
        %s3368 = scalar_select %p3367, %s3366, 1
        %s3369 = smul.addr %s3368, 2
        %s3370 = smul.addr %s3369, 4
        %s3371 = scalar_lea.vmem %s16, %s3370
        // Predicated region
        $region105: #{idea_decoder_forward.2} parent=83 // pred_check
          %p3372 = pneg %p464
        $region106: #{idea_decoder_forward.2} parent=83 // pred_check_branch
          %3374 = sbr.rel (%p3372) target = $region108
        $region107: #{idea_decoder_forward.2} parent=83 // pred_region
          %s3375 = smul.u32 2, %s37
        $region108: #{idea_decoder_forward.2} parent=83 // pred_fallthru
          _
        // Predicated region
        $region109: #{idea_decoder_forward.2} parent=83 // pred_check
          %p3376 = pneg %p464
        $region110: #{idea_decoder_forward.2} parent=83 // pred_check_branch
          %3378 = sbr.rel (%p3376) target = $region112
        $region111: #{idea_decoder_forward.2} parent=83 // pred_region
          %s3379 = smul.u32 2, %s37
          %p3380 = scmp.lt.s32.totalorder %s3379, 1
          %s3381 = scalar_select %p3380, %s3379, 1
          %s3382 = smul.addr %s3381, 2
          %s3383 = smul.addr %s3382, 4
          %s3384 = scalar_lea.vmem %s16, %s3383
        $region112: #{idea_decoder_forward.2} parent=83 // pred_fallthru
          _
      $region84: #{idea_decoder_forward.2} parent=5 // pred_fallthru
        _
      %p3385 = scmp.le.s32.totalorder 2, %s28
      // Predicated region
      $region113: #{idea_decoder_forward.2} parent=5 // pred_check
        %p3386 = pneg %p3385
      $region114: #{idea_decoder_forward.2} parent=5 // pred_check_branch
        %3388 = sbr.rel (%p3386) target = $region116
      $region115: #{idea_decoder_forward.2} parent=5 // pred_region
        %s3389 = ssub.s32 %s28, 2
      $region116: #{idea_decoder_forward.2} parent=5 // pred_fallthru
        _
    $region6: #{idea_decoder_forward.2} parent=1 // loop_footer
      %s32 = sadd.s32 1, %s28
    $region7: #{idea_decoder_forward.2} parent=1 // loop_footer_branch
      %27 = sbr.rel target = $region3
    $region8: #{idea_decoder_forward.2} parent=1 // loop_exit
      _
    %3390 = vsyncpa [#allocation4], 1
    %s3391 = scalar_lea.sflag [#allocation4], 1
    %3392 = vsyncpa %s3391, 1
    %3393 = vsyncpa [#allocation6], 1
    %s3394 = scalar_lea.sflag [#allocation6], 1
    %3395 = vsyncpa %s3394, 1

</llo_original>
